<compile_context>
chip_gen: v7x
topology: tpu7x:2x2x1
jax: 0.10.0
libtpu: 0.0.40
codegen_flags: <defaults>
</compile_context>

<pallas_src>
import functools

import jax
import jax.numpy as jnp
from jax import lax
from jax.experimental import pallas as pl
from jax.experimental.pallas import tpu as pltpu


# --------------------------------------------------------------------------
# Fused per-stack Pallas kernel
# --------------------------------------------------------------------------

def _layernorm(x, g, b):
    # f32 VPU/EUP math (v5e has no bf16 VPU path).
    mean = jnp.mean(x, axis=-1, keepdims=True)
    var = jnp.mean((x - mean) ** 2, axis=-1, keepdims=True)
    return (x - mean) * lax.rsqrt(var + 1e-5) * g + b


def _layer_body(x, make_bias, wqkv, bqkv, wo, bo, w1, b1, w2, b2,
                ln1g, ln1b, ln2g, ln2b, *, num_heads):
    """One post-LN transformer layer on a single-batch (S, D) activation."""
    S, D = x.shape
    Dh = D // num_heads
    scale = 1.0 / float(Dh) ** 0.5

    # Fused QKV projection: one (S, D) x (D, 3D) matmul (wide lane output).
    qkv = jnp.dot(x.astype(jnp.bfloat16), wqkv,
                  preferred_element_type=jnp.float32) + bqkv        # (S, 3D) f32

    # Per-head attention; the output projection is folded in per head so the
    # concatenated (S, D) attention output is never materialized.
    proj = None
    for h in range(num_heads):
        qh = qkv[:, h * Dh:(h + 1) * Dh].astype(jnp.bfloat16)
        kh = qkv[:, D + h * Dh:D + (h + 1) * Dh].astype(jnp.bfloat16)
        vh = qkv[:, 2 * D + h * Dh:2 * D + (h + 1) * Dh].astype(jnp.bfloat16)

        # q @ k^T without an explicit transpose (contract Dh on both sides).
        s = lax.dot_general(qh, kh, (((1,), (1,)), ((), ())),
                            preferred_element_type=jnp.float32) * scale
        s = s + make_bias(h)                                        # (S, S)
        s = s - jnp.max(s, axis=-1, keepdims=True)
        p = jnp.exp(s)
        p = p * pl.reciprocal(jnp.sum(p, axis=-1, keepdims=True), approx=True)

        oh = jnp.dot(p.astype(jnp.bfloat16), vh,
                     preferred_element_type=jnp.float32)            # (S, Dh)
        ph = jnp.dot(oh.astype(jnp.bfloat16), wo[h * Dh:(h + 1) * Dh, :],
                     preferred_element_type=jnp.float32)            # (S, D)
        proj = ph if proj is None else proj + ph

    x = _layernorm(x + proj + bo, ln1g, ln1b)

    # FFN (relu) + post-LN.
    h1 = jnp.dot(x.astype(jnp.bfloat16), w1,
                 preferred_element_type=jnp.float32) + b1
    h1 = jnp.maximum(h1, 0.0)
    h2 = jnp.dot(h1.astype(jnp.bfloat16), w2,
                 preferred_element_type=jnp.float32) + b2
    x = _layernorm(x + h2, ln2g, ln2b)
    return x


def _stack_kernel(*refs, num_heads, with_bias):
    """grid = (batch, layer).  refs:
         [x_in, (attn_bias,)] + 12 stacked-weight refs + [out]."""
    o_ref = refs[-1]
    if with_bias:
        x_ref, bias_ref = refs[0], refs[1]
        w_refs = refs[2:-1]
    else:
        x_ref, bias_ref = refs[0], None
        w_refs = refs[1:-1]
    (wqkv, bqkv, wo, bo, w1, b1, w2, b2, l1g, l1b, l2g, l2b) = w_refs

    # At the first layer, seed the VMEM-resident output block with the stack
    # input; afterwards the output block carries the activation across layers.
    @pl.when(pl.program_id(1) == 0)
    def _():
        o_ref[...] = x_ref[...]

    x = o_ref[...]                                                  # (S, D) f32
    S = x.shape[0]

    if with_bias:
        def make_bias(h):
            return bias_ref[h]                                      # (S, S)
    else:
        rows = lax.broadcasted_iota(jnp.int32, (S, S), 0)
        cols = lax.broadcasted_iota(jnp.int32, (S, S), 1)
        causal = jnp.where(rows >= cols, 0.0, -1e9).astype(jnp.float32)

        def make_bias(h):
            return causal

    o_ref[...] = _layer_body(
        x, make_bias,
        wqkv[...], bqkv[...], wo[...], bo[...],
        w1[...], b1[...], w2[...], b2[...],
        l1g[...], l1b[...], l2g[...], l2b[...],
        num_heads=num_heads)


_WEIGHT_ORDER = ("wqkv", "bqkv", "wo", "bo", "w1", "b1", "w2", "b2",
                 "ln1_g", "ln1_b", "ln2_g", "ln2_b")


def run_stack(x, weights, *, num_heads, attn_bias=None):
    """Run a full transformer stack in a single pallas_call.

    x:        (B, S, D) f32 stack input.
    weights:  dict of [L, ...]-stacked per-layer parameters.
    attn_bias: optional (B, H, S, S) f32 additive attention bias (encoder).
               If None, a causal mask is generated in-kernel (decoder).
    """
    B, S, D = x.shape
    L = weights["wqkv"].shape[0]
    with_bias = attn_bias is not None

    in_specs = [pl.BlockSpec((None, S, D), lambda b, l: (b, 0, 0))]
    inputs = [x]
    if with_bias:
        H = attn_bias.shape[1]
        in_specs.append(pl.BlockSpec((None, H, S, S), lambda b, l: (b, 0, 0, 0)))
        inputs.append(attn_bias)
    for name in _WEIGHT_ORDER:
        w = weights[name]
        in_specs.append(
            pl.BlockSpec((None,) + w.shape[1:], lambda b, l: (l, 0, 0)))
        inputs.append(w)

    kernel = functools.partial(_stack_kernel, num_heads=num_heads,
                               with_bias=with_bias)
    return pl.pallas_call(
        kernel,
        out_shape=jax.ShapeDtypeStruct((B, S, D), jnp.float32),
        grid=(B, L),
        in_specs=in_specs,
        out_specs=pl.BlockSpec((None, S, D), lambda b, l: (b, 0, 0)),
        compiler_params=pltpu.CompilerParams(
            # batch axis can be split across cores (v7x megacore); the layer
            # axis carries the resident-activation dependency.
            dimension_semantics=("parallel", "arbitrary"),
            vmem_limit_bytes=32 * 1024 * 1024),
    )(*inputs)


# --------------------------------------------------------------------------
# Parameters (stacked [L, ...] layout, matmul weights in bf16)
# --------------------------------------------------------------------------

def init_stack_params(key, num_layers, hidden):
    ffn = 4 * hidden
    ks = jax.random.split(key, 6)
    std = 1.0 / float(hidden) ** 0.5

    def nrm(k, shape, s):
        return jax.random.normal(k, shape, jnp.float32) * s

    wq = nrm(ks[0], (num_layers, hidden, hidden), std)
    wk = nrm(ks[1], (num_layers, hidden, hidden), std)
    wv = nrm(ks[2], (num_layers, hidden, hidden), std)
    return {
        "wqkv": jnp.concatenate([wq, wk, wv], axis=-1).astype(jnp.bfloat16),
        "bqkv": jnp.zeros((num_layers, 1, 3 * hidden), jnp.float32),
        "wo": nrm(ks[3], (num_layers, hidden, hidden), std).astype(jnp.bfloat16),
        "bo": jnp.zeros((num_layers, 1, hidden), jnp.float32),
        "w1": nrm(ks[4], (num_layers, hidden, ffn), std).astype(jnp.bfloat16),
        "b1": jnp.zeros((num_layers, 1, ffn), jnp.float32),
        "w2": nrm(ks[5], (num_layers, ffn, hidden),
                  1.0 / float(ffn) ** 0.5).astype(jnp.bfloat16),
        "b2": jnp.zeros((num_layers, 1, hidden), jnp.float32),
        "ln1_g": jnp.ones((num_layers, 1, hidden), jnp.float32),
        "ln1_b": jnp.zeros((num_layers, 1, hidden), jnp.float32),
        "ln2_g": jnp.ones((num_layers, 1, hidden), jnp.float32),
        "ln2_b": jnp.zeros((num_layers, 1, hidden), jnp.float32),
    }


def init_params(key, cfg):
    k_e, k_d, k_el, k_dl = jax.random.split(key, 4)
    std = 1.0 / float(cfg["hidden_size"]) ** 0.5
    return {
        "encoder_embedding": jax.random.normal(
            k_e, (cfg["encoder_vocab_size"], cfg["hidden_size"]), jnp.float32) * std,
        "decoder_embedding": jax.random.normal(
            k_d, (cfg["decoder_vocab_size"], cfg["hidden_size"]), jnp.float32) * std,
        "encoder_layers": init_stack_params(
            k_el, cfg["num_encoder_layers"], cfg["hidden_size"]),
        "decoder_layers": init_stack_params(
            k_dl, cfg["num_decoder_layers"], cfg["hidden_size"]),
        # encoder_bias buffer: logspace(0, -3, num_encoder_heads, base=2)
        "encoder_bias": jnp.power(
            2.0, jnp.linspace(0.0, -3.0, cfg["num_encoder_heads"])).astype(jnp.float32),
    }


# --------------------------------------------------------------------------
# Forward pass (dropout is a no-op in this eval-mode forward)
# --------------------------------------------------------------------------

def smiles_transformer_forward(params, cfg, encoder_tokens, graph_distances,
                               decoder_target_tokens):
    B, Se = encoder_tokens.shape
    D = cfg["hidden_size"]
    He = cfg["num_encoder_heads"]
    Hd = cfg["num_decoder_heads"]

    # ------------------ encode ------------------
    # Embedding gather kept in plain JAX (no clean Pallas equivalent at this size).
    x = jnp.take(params["encoder_embedding"], encoder_tokens, axis=0)  # (B, Se, D)
    # Padding mask: masks *query* rows (token==0), exactly as the reference does
    # ((tokens==0).unsqueeze(-1).expand(...) * -1e9).
    pad = (encoder_tokens == 0).astype(jnp.float32)[:, :, None] * -1e9  # (B, Se, 1)
    enc_bias = (params["encoder_bias"][None, :, None, None]
                * graph_distances[:, None, :, :]
                + pad[:, None, :, :])                                   # (B, He, Se, Se)

    x = run_stack(x, params["encoder_layers"], num_heads=He, attn_bias=enc_bias)
    fingerprints = x[:, 0]                                              # (B, D)

    # ------------------ decode ------------------
    dec_emb = jnp.take(params["decoder_embedding"], decoder_target_tokens, axis=0)
    dec_in = jnp.concatenate([fingerprints[:, None, :], dec_emb], axis=1)  # (B, Sd+1, D)
    y = run_stack(dec_in, params["decoder_layers"], num_heads=Hd, attn_bias=None)

    # Loss exactly as the reference forward: last hidden state[:, :-1, :] used
    # directly as logits over hidden_size "classes", CE with ignore_index=0.
    # TODO(synk): valid only because decoder_vocab_size <= hidden_size, as in
    # the reference code path.
    logits = y[:, :-1, :].reshape(-1, D)                               # (B*Sd, D)
    targets = decoder_target_tokens.reshape(-1)                        # (B*Sd,)
    logz = jax.nn.logsumexp(logits, axis=-1)
    tok_logit = jnp.take_along_axis(logits, targets[:, None], axis=1)[:, 0]
    nll = logz - tok_logit
    valid = (targets != 0).astype(jnp.float32)
    loss = jnp.sum(nll * valid) / jnp.maximum(jnp.sum(valid), 1.0)

    return {"fingerprints": fingerprints, "loss": loss}


# --------------------------------------------------------------------------

if __name__ == "__main__":
    cfg = {
        "decoder_vocab_size": 16,
        "encoder_vocab_size": 20,
        "hidden_size": 32,
        "num_decoder_layers": 2,
        "num_encoder_layers": 2,
        "num_decoder_heads": 2,
        "num_encoder_heads": 2,
        "dropout": 0.0,  # dropout is a no-op in the (eval-mode) forward pass
    }
    B, Se, Sd = 2, 8, 8

    key = jax.random.PRNGKey(0)
    k_param, k_enc, k_dist, k_dec = jax.random.split(key, 4)

    params = init_params(k_param, cfg)
    encoder_tokens = jax.random.randint(k_enc, (B, Se), 0, cfg["encoder_vocab_size"])
    graph_distances = jax.random.uniform(k_dist, (B, Se, Se), jnp.float32) * 5.0
    decoder_target_tokens = jax.random.randint(k_dec, (B, Sd), 0, cfg["decoder_vocab_size"])

    fwd = jax.jit(functools.partial(smiles_transformer_forward, params, cfg))
    out = fwd(encoder_tokens, graph_distances, decoder_target_tokens)
    jax.block_until_ready(out)

    assert out["fingerprints"].shape == (B, cfg["hidden_size"])
    assert out["loss"].shape == ()
    assert bool(jnp.isfinite(out["loss"]))
    assert bool(jnp.all(jnp.isfinite(out["fingerprints"])))
    print("KERNEL_OK")
</pallas_src>

<mosaic_0001>
module attributes {stable_mosaic.version = 11 : i64} {
  func.func @_stack_kernel(%arg0: i32, %arg1: i32, %arg2: memref<1x8x32xf32, #tpu.memory_space<vmem>>, %arg3: memref<1x2x8x8xf32, #tpu.memory_space<vmem>>, %arg4: memref<1x32x96xbf16, #tpu.memory_space<vmem>>, %arg5: memref<1x1x96xf32, #tpu.memory_space<vmem>>, %arg6: memref<1x32x32xbf16, #tpu.memory_space<vmem>>, %arg7: memref<1x1x32xf32, #tpu.memory_space<vmem>>, %arg8: memref<1x32x128xbf16, #tpu.memory_space<vmem>>, %arg9: memref<1x1x128xf32, #tpu.memory_space<vmem>>, %arg10: memref<1x128x32xbf16, #tpu.memory_space<vmem>>, %arg11: memref<1x1x32xf32, #tpu.memory_space<vmem>>, %arg12: memref<1x1x32xf32, #tpu.memory_space<vmem>>, %arg13: memref<1x1x32xf32, #tpu.memory_space<vmem>>, %arg14: memref<1x1x32xf32, #tpu.memory_space<vmem>>, %arg15: memref<1x1x32xf32, #tpu.memory_space<vmem>>, %arg16: memref<1x8x32xf32, #tpu.memory_space<vmem>>) attributes {dimension_semantics = [#tpu.dimension_semantics<parallel>, #tpu.dimension_semantics<arbitrary>], iteration_bounds = array<i64: 2, 2>, scalar_prefetch = 0 : i64, scratch_operands = 0 : i64, tpu.core_type = #tpu.core_type<tc>, window_params = [{transform_indices = @transform_0, window_bounds = array<i64: 1, 8, 32>}, {transform_indices = @transform_1, window_bounds = array<i64: 1, 2, 8, 8>}, {transform_indices = @transform_2, window_bounds = array<i64: 1, 32, 96>}, {transform_indices = @transform_3, window_bounds = array<i64: 1, 1, 96>}, {transform_indices = @transform_4, window_bounds = array<i64: 1, 32, 32>}, {transform_indices = @transform_5, window_bounds = array<i64: 1, 1, 32>}, {transform_indices = @transform_6, window_bounds = array<i64: 1, 32, 128>}, {transform_indices = @transform_7, window_bounds = array<i64: 1, 1, 128>}, {transform_indices = @transform_8, window_bounds = array<i64: 1, 128, 32>}, {transform_indices = @transform_9, window_bounds = array<i64: 1, 1, 32>}, {transform_indices = @transform_10, window_bounds = array<i64: 1, 1, 32>}, {transform_indices = @transform_11, window_bounds = array<i64: 1, 1, 32>}, {transform_indices = @transform_12, window_bounds = array<i64: 1, 1, 32>}, {transform_indices = @transform_13, window_bounds = array<i64: 1, 1, 32>}, {transform_indices = @transform_14, window_bounds = array<i64: 1, 8, 32>}]} {
    %c0_i32 = arith.constant 0 : i32
    %0 = arith.cmpi eq, %arg1, %c0_i32 : i32
    %1 = arith.extui %0 : i1 to i32
    %c0_i32_0 = arith.constant 0 : i32
    %2 = arith.cmpi ne, %1, %c0_i32_0 : i32
    scf.if %2 {
      %c0_74 = arith.constant 0 : index
      %c0_75 = arith.constant 0 : index
      %c0_76 = arith.constant 0 : index
      %149 = vector.load %arg2[%c0_74, %c0_75, %c0_76] : memref<1x8x32xf32, #tpu.memory_space<vmem>>, vector<1x8x32xf32>
      %150 = vector.shape_cast %149 : vector<1x8x32xf32> to vector<8x32xf32>
      %c0_77 = arith.constant 0 : index
      %c0_78 = arith.constant 0 : index
      %c0_79 = arith.constant 0 : index
      %151 = vector.load %arg16[%c0_77, %c0_78, %c0_79] : memref<1x8x32xf32, #tpu.memory_space<vmem>>, vector<1x8x32xf32>
      %152 = vector.shape_cast %151 : vector<1x8x32xf32> to vector<8x32xf32>
      %153 = vector.shape_cast %150 : vector<8x32xf32> to vector<1x8x32xf32>
      tpu.vector_store %arg16[%c0_77, %c0_78, %c0_79], %153 {strides = array<i32>} : memref<1x8x32xf32, #tpu.memory_space<vmem>>, vector<1x8x32xf32>,
    } else {
    }
    %c0 = arith.constant 0 : index
    %c0_1 = arith.constant 0 : index
    %c0_2 = arith.constant 0 : index
    %3 = vector.load %arg16[%c0, %c0_1, %c0_2] : memref<1x8x32xf32, #tpu.memory_space<vmem>>, vector<1x8x32xf32>
    %4 = vector.shape_cast %3 : vector<1x8x32xf32> to vector<8x32xf32>
    %c0_3 = arith.constant 0 : index
    %c0_4 = arith.constant 0 : index
    %c0_5 = arith.constant 0 : index
    %5 = vector.load %arg4[%c0_3, %c0_4, %c0_5] : memref<1x32x96xbf16, #tpu.memory_space<vmem>>, vector<1x32x96xbf16>
    %6 = vector.shape_cast %5 : vector<1x32x96xbf16> to vector<32x96xbf16>
    %c0_6 = arith.constant 0 : index
    %c0_7 = arith.constant 0 : index
    %c0_8 = arith.constant 0 : index
    %7 = vector.load %arg5[%c0_6, %c0_7, %c0_8] : memref<1x1x96xf32, #tpu.memory_space<vmem>>, vector<1x1x96xf32>
    %8 = vector.shape_cast %7 : vector<1x1x96xf32> to vector<1x96xf32>
    %c0_9 = arith.constant 0 : index
    %c0_10 = arith.constant 0 : index
    %c0_11 = arith.constant 0 : index
    %9 = vector.load %arg6[%c0_9, %c0_10, %c0_11] : memref<1x32x32xbf16, #tpu.memory_space<vmem>>, vector<1x32x32xbf16>
    %10 = vector.shape_cast %9 : vector<1x32x32xbf16> to vector<32x32xbf16>
    %c0_12 = arith.constant 0 : index
    %c0_13 = arith.constant 0 : index
    %c0_14 = arith.constant 0 : index
    %11 = vector.load %arg7[%c0_12, %c0_13, %c0_14] : memref<1x1x32xf32, #tpu.memory_space<vmem>>, vector<1x1x32xf32>
    %12 = vector.shape_cast %11 : vector<1x1x32xf32> to vector<1x32xf32>
    %c0_15 = arith.constant 0 : index
    %c0_16 = arith.constant 0 : index
    %c0_17 = arith.constant 0 : index
    %13 = vector.load %arg8[%c0_15, %c0_16, %c0_17] : memref<1x32x128xbf16, #tpu.memory_space<vmem>>, vector<1x32x128xbf16>
    %14 = vector.shape_cast %13 : vector<1x32x128xbf16> to vector<32x128xbf16>
    %c0_18 = arith.constant 0 : index
    %c0_19 = arith.constant 0 : index
    %c0_20 = arith.constant 0 : index
    %15 = vector.load %arg9[%c0_18, %c0_19, %c0_20] : memref<1x1x128xf32, #tpu.memory_space<vmem>>, vector<1x1x128xf32>
    %16 = vector.shape_cast %15 : vector<1x1x128xf32> to vector<1x128xf32>
    %c0_21 = arith.constant 0 : index
    %c0_22 = arith.constant 0 : index
    %c0_23 = arith.constant 0 : index
    %17 = vector.load %arg10[%c0_21, %c0_22, %c0_23] : memref<1x128x32xbf16, #tpu.memory_space<vmem>>, vector<1x128x32xbf16>
    %18 = vector.shape_cast %17 : vector<1x128x32xbf16> to vector<128x32xbf16>
    %c0_24 = arith.constant 0 : index
    %c0_25 = arith.constant 0 : index
    %c0_26 = arith.constant 0 : index
    %19 = vector.load %arg11[%c0_24, %c0_25, %c0_26] : memref<1x1x32xf32, #tpu.memory_space<vmem>>, vector<1x1x32xf32>
    %20 = vector.shape_cast %19 : vector<1x1x32xf32> to vector<1x32xf32>
    %c0_27 = arith.constant 0 : index
    %c0_28 = arith.constant 0 : index
    %c0_29 = arith.constant 0 : index
    %21 = vector.load %arg12[%c0_27, %c0_28, %c0_29] : memref<1x1x32xf32, #tpu.memory_space<vmem>>, vector<1x1x32xf32>
    %22 = vector.shape_cast %21 : vector<1x1x32xf32> to vector<1x32xf32>
    %c0_30 = arith.constant 0 : index
    %c0_31 = arith.constant 0 : index
    %c0_32 = arith.constant 0 : index
    %23 = vector.load %arg13[%c0_30, %c0_31, %c0_32] : memref<1x1x32xf32, #tpu.memory_space<vmem>>, vector<1x1x32xf32>
    %24 = vector.shape_cast %23 : vector<1x1x32xf32> to vector<1x32xf32>
    %c0_33 = arith.constant 0 : index
    %c0_34 = arith.constant 0 : index
    %c0_35 = arith.constant 0 : index
    %25 = vector.load %arg14[%c0_33, %c0_34, %c0_35] : memref<1x1x32xf32, #tpu.memory_space<vmem>>, vector<1x1x32xf32>
    %26 = vector.shape_cast %25 : vector<1x1x32xf32> to vector<1x32xf32>
    %c0_36 = arith.constant 0 : index
    %c0_37 = arith.constant 0 : index
    %c0_38 = arith.constant 0 : index
    %27 = vector.load %arg15[%c0_36, %c0_37, %c0_38] : memref<1x1x32xf32, #tpu.memory_space<vmem>>, vector<1x1x32xf32>
    %28 = vector.shape_cast %27 : vector<1x1x32xf32> to vector<1x32xf32>
    %29 = arith.truncf %4 : vector<8x32xf32> to vector<8x32xbf16>
    %cst = arith.constant dense<0.000000e+00> : vector<8x96xf32>
    %30 = tpu.matmul %29, %6, %cst {dimension_numbers = #tpu.dot_dimension_numbers<[1], [0], [0], [1], [0, 0, 1, 1], [], []>} : vector<8x32xbf16>, vector<32x96xbf16>, vector<8x96xf32> -> vector<8x96xf32>
    %31 = vector.broadcast %8 : vector<1x96xf32> to vector<8x96xf32>
    %32 = arith.addf %30, %31 : vector<8x96xf32>
    %33 = vector.extract_strided_slice %32 {offsets = [0, 0], sizes = [8, 16], strides = [1, 1]} : vector<8x96xf32> to vector<8x16xf32>
    %34 = arith.truncf %33 : vector<8x16xf32> to vector<8x16xbf16>
    %35 = vector.extract_strided_slice %32 {offsets = [0, 32], sizes = [8, 16], strides = [1, 1]} : vector<8x96xf32> to vector<8x16xf32>
    %36 = arith.truncf %35 : vector<8x16xf32> to vector<8x16xbf16>
    %37 = vector.extract_strided_slice %32 {offsets = [0, 64], sizes = [8, 16], strides = [1, 1]} : vector<8x96xf32> to vector<8x16xf32>
    %38 = arith.truncf %37 : vector<8x16xf32> to vector<8x16xbf16>
    %cst_39 = arith.constant dense<0.000000e+00> : vector<8x8xf32>
    %39 = tpu.matmul %34, %36, %cst_39 {dimension_numbers = #tpu.dot_dimension_numbers<[1], [1], [0], [0], [0, 0, 1, 0], [], []>} : vector<8x16xbf16>, vector<8x16xbf16>, vector<8x8xf32> -> vector<8x8xf32>
    %cst_40 = arith.constant 2.500000e-01 : f32
    %40 = vector.broadcast %cst_40 : f32 to vector<8x8xf32>
    %41 = arith.mulf %39, %40 : vector<8x8xf32>
    %c0_41 = arith.constant 0 : index
    %c0_42 = arith.constant 0 : index
    %c0_43 = arith.constant 0 : index
    %c0_44 = arith.constant 0 : index
    %42 = vector.load %arg3[%c0_41, %c0_42, %c0_43, %c0_44] : memref<1x2x8x8xf32, #tpu.memory_space<vmem>>, vector<1x1x8x8xf32>
    %43 = vector.shape_cast %42 : vector<1x1x8x8xf32> to vector<8x8xf32>
    %44 = arith.addf %41, %43 : vector<8x8xf32>
    %cst_45 = arith.constant dense<0xFF800000> : vector<8xf32>
    %45 = vector.multi_reduction <maximumf>, %44, %cst_45 [1] : vector<8x8xf32> to vector<8xf32>
    %46 = vector.shape_cast %45 : vector<8xf32> to vector<8x1xf32>
    %47 = vector.broadcast %46 : vector<8x1xf32> to vector<8x8xf32>
    %48 = arith.subf %44, %47 : vector<8x8xf32>
    %49 = math.exp %48 : vector<8x8xf32>
    %cst_46 = arith.constant dense<0.000000e+00> : vector<8xf32>
    %50 = vector.multi_reduction <add>, %49, %cst_46 [1] : vector<8x8xf32> to vector<8xf32>
    %51 = vector.shape_cast %50 : vector<8xf32> to vector<8x1xf32>
    %52 = tpu.reciprocal %51 {approx = true} : vector<8x1xf32> -> vector<8x1xf32>
    %53 = vector.broadcast %52 : vector<8x1xf32> to vector<8x8xf32>
    %54 = arith.mulf %49, %53 : vector<8x8xf32>
    %55 = arith.truncf %54 : vector<8x8xf32> to vector<8x8xbf16>
    %cst_47 = arith.constant dense<0.000000e+00> : vector<8x16xf32>
    %56 = tpu.matmul %55, %38, %cst_47 {dimension_numbers = #tpu.dot_dimension_numbers<[1], [0], [0], [1], [0, 0, 1, 1], [], []>} : vector<8x8xbf16>, vector<8x16xbf16>, vector<8x16xf32> -> vector<8x16xf32>
    %57 = arith.truncf %56 : vector<8x16xf32> to vector<8x16xbf16>
    %58 = vector.extract_strided_slice %10 {offsets = [0, 0], sizes = [16, 32], strides = [1, 1]} : vector<32x32xbf16> to vector<16x32xbf16>
    %cst_48 = arith.constant dense<0.000000e+00> : vector<8x32xf32>
    %59 = tpu.matmul %57, %58, %cst_48 {dimension_numbers = #tpu.dot_dimension_numbers<[1], [0], [0], [1], [0, 0, 1, 1], [], []>} : vector<8x16xbf16>, vector<16x32xbf16>, vector<8x32xf32> -> vector<8x32xf32>
    %60 = vector.extract_strided_slice %32 {offsets = [0, 16], sizes = [8, 16], strides = [1, 1]} : vector<8x96xf32> to vector<8x16xf32>
    %61 = arith.truncf %60 : vector<8x16xf32> to vector<8x16xbf16>
    %62 = vector.extract_strided_slice %32 {offsets = [0, 48], sizes = [8, 16], strides = [1, 1]} : vector<8x96xf32> to vector<8x16xf32>
    %63 = arith.truncf %62 : vector<8x16xf32> to vector<8x16xbf16>
    %64 = vector.extract_strided_slice %32 {offsets = [0, 80], sizes = [8, 16], strides = [1, 1]} : vector<8x96xf32> to vector<8x16xf32>
    %65 = arith.truncf %64 : vector<8x16xf32> to vector<8x16xbf16>
    %cst_49 = arith.constant dense<0.000000e+00> : vector<8x8xf32>
    %66 = tpu.matmul %61, %63, %cst_49 {dimension_numbers = #tpu.dot_dimension_numbers<[1], [1], [0], [0], [0, 0, 1, 0], [], []>} : vector<8x16xbf16>, vector<8x16xbf16>, vector<8x8xf32> -> vector<8x8xf32>
    %cst_50 = arith.constant 2.500000e-01 : f32
    %67 = vector.broadcast %cst_50 : f32 to vector<8x8xf32>
    %68 = arith.mulf %66, %67 : vector<8x8xf32>
    %c0_51 = arith.constant 0 : index
    %c1 = arith.constant 1 : index
    %c0_52 = arith.constant 0 : index
    %c0_53 = arith.constant 0 : index
    %69 = vector.load %arg3[%c0_51, %c1, %c0_52, %c0_53] : memref<1x2x8x8xf32, #tpu.memory_space<vmem>>, vector<1x1x8x8xf32>
    %70 = vector.shape_cast %69 : vector<1x1x8x8xf32> to vector<8x8xf32>
    %71 = arith.addf %68, %70 : vector<8x8xf32>
    %cst_54 = arith.constant dense<0xFF800000> : vector<8xf32>
    %72 = vector.multi_reduction <maximumf>, %71, %cst_54 [1] : vector<8x8xf32> to vector<8xf32>
    %73 = vector.shape_cast %72 : vector<8xf32> to vector<8x1xf32>
    %74 = vector.broadcast %73 : vector<8x1xf32> to vector<8x8xf32>
    %75 = arith.subf %71, %74 : vector<8x8xf32>
    %76 = math.exp %75 : vector<8x8xf32>
    %cst_55 = arith.constant dense<0.000000e+00> : vector<8xf32>
    %77 = vector.multi_reduction <add>, %76, %cst_55 [1] : vector<8x8xf32> to vector<8xf32>
    %78 = vector.shape_cast %77 : vector<8xf32> to vector<8x1xf32>
    %79 = tpu.reciprocal %78 {approx = true} : vector<8x1xf32> -> vector<8x1xf32>
    %80 = vector.broadcast %79 : vector<8x1xf32> to vector<8x8xf32>
    %81 = arith.mulf %76, %80 : vector<8x8xf32>
    %82 = arith.truncf %81 : vector<8x8xf32> to vector<8x8xbf16>
    %cst_56 = arith.constant dense<0.000000e+00> : vector<8x16xf32>
    %83 = tpu.matmul %82, %65, %cst_56 {dimension_numbers = #tpu.dot_dimension_numbers<[1], [0], [0], [1], [0, 0, 1, 1], [], []>} : vector<8x8xbf16>, vector<8x16xbf16>, vector<8x16xf32> -> vector<8x16xf32>
    %84 = arith.truncf %83 : vector<8x16xf32> to vector<8x16xbf16>
    %85 = vector.extract_strided_slice %10 {offsets = [16, 0], sizes = [16, 32], strides = [1, 1]} : vector<32x32xbf16> to vector<16x32xbf16>
    %cst_57 = arith.constant dense<0.000000e+00> : vector<8x32xf32>
    %86 = tpu.matmul %84, %85, %cst_57 {dimension_numbers = #tpu.dot_dimension_numbers<[1], [0], [0], [1], [0, 0, 1, 1], [], []>} : vector<8x16xbf16>, vector<16x32xbf16>, vector<8x32xf32> -> vector<8x32xf32>
    %87 = arith.addf %59, %86 : vector<8x32xf32>
    %88 = arith.addf %4, %87 : vector<8x32xf32>
    %89 = vector.broadcast %12 : vector<1x32xf32> to vector<8x32xf32>
    %90 = arith.addf %88, %89 : vector<8x32xf32>
    %cst_58 = arith.constant dense<0.000000e+00> : vector<8xf32>
    %91 = vector.multi_reduction <add>, %90, %cst_58 [1] : vector<8x32xf32> to vector<8xf32>
    %92 = vector.shape_cast %91 : vector<8xf32> to vector<8x1xf32>
    %cst_59 = arith.constant 3.200000e+01 : f32
    %93 = vector.broadcast %cst_59 : f32 to vector<8x1xf32>
    %94 = arith.divf %92, %93 : vector<8x1xf32>
    %95 = vector.broadcast %94 : vector<8x1xf32> to vector<8x32xf32>
    %96 = arith.subf %90, %95 : vector<8x32xf32>
    %97 = arith.mulf %96, %96 : vector<8x32xf32>
    %cst_60 = arith.constant dense<0.000000e+00> : vector<8xf32>
    %98 = vector.multi_reduction <add>, %97, %cst_60 [1] : vector<8x32xf32> to vector<8xf32>
    %99 = vector.shape_cast %98 : vector<8xf32> to vector<8x1xf32>
    %cst_61 = arith.constant 3.200000e+01 : f32
    %100 = vector.broadcast %cst_61 : f32 to vector<8x1xf32>
    %101 = arith.divf %99, %100 : vector<8x1xf32>
    %102 = vector.broadcast %94 : vector<8x1xf32> to vector<8x32xf32>
    %103 = arith.subf %90, %102 : vector<8x32xf32>
    %cst_62 = arith.constant 9.99999974E-6 : f32
    %104 = vector.broadcast %cst_62 : f32 to vector<8x1xf32>
    %105 = arith.addf %101, %104 : vector<8x1xf32>
    %106 = math.rsqrt %105 : vector<8x1xf32>
    %107 = vector.broadcast %106 : vector<8x1xf32> to vector<8x32xf32>
    %108 = arith.mulf %103, %107 : vector<8x32xf32>
    %109 = vector.broadcast %22 : vector<1x32xf32> to vector<8x32xf32>
    %110 = arith.mulf %108, %109 : vector<8x32xf32>
    %111 = vector.broadcast %24 : vector<1x32xf32> to vector<8x32xf32>
    %112 = arith.addf %110, %111 : vector<8x32xf32>
    %113 = arith.truncf %112 : vector<8x32xf32> to vector<8x32xbf16>
    %cst_63 = arith.constant dense<0.000000e+00> : vector<8x128xf32>
    %114 = tpu.matmul %113, %14, %cst_63 {dimension_numbers = #tpu.dot_dimension_numbers<[1], [0], [0], [1], [0, 0, 1, 1], [], []>} : vector<8x32xbf16>, vector<32x128xbf16>, vector<8x128xf32> -> vector<8x128xf32>
    %115 = vector.broadcast %16 : vector<1x128xf32> to vector<8x128xf32>
    %116 = arith.addf %114, %115 : vector<8x128xf32>
    %cst_64 = arith.constant 0.000000e+00 : f32
    %117 = vector.broadcast %cst_64 : f32 to vector<8x128xf32>
    %118 = arith.maximumf %116, %117 : vector<8x128xf32>
    %119 = arith.truncf %118 : vector<8x128xf32> to vector<8x128xbf16>
    %cst_65 = arith.constant dense<0.000000e+00> : vector<8x32xf32>
    %120 = tpu.matmul %119, %18, %cst_65 {dimension_numbers = #tpu.dot_dimension_numbers<[1], [0], [0], [1], [0, 0, 1, 1], [], []>} : vector<8x128xbf16>, vector<128x32xbf16>, vector<8x32xf32> -> vector<8x32xf32>
    %121 = vector.broadcast %20 : vector<1x32xf32> to vector<8x32xf32>
    %122 = arith.addf %120, %121 : vector<8x32xf32>
    %123 = arith.addf %112, %122 : vector<8x32xf32>
    %cst_66 = arith.constant dense<0.000000e+00> : vector<8xf32>
    %124 = vector.multi_reduction <add>, %123, %cst_66 [1] : vector<8x32xf32> to vector<8xf32>
    %125 = vector.shape_cast %124 : vector<8xf32> to vector<8x1xf32>
    %cst_67 = arith.constant 3.200000e+01 : f32
    %126 = vector.broadcast %cst_67 : f32 to vector<8x1xf32>
    %127 = arith.divf %125, %126 : vector<8x1xf32>
    %128 = vector.broadcast %127 : vector<8x1xf32> to vector<8x32xf32>
    %129 = arith.subf %123, %128 : vector<8x32xf32>
    %130 = arith.mulf %129, %129 : vector<8x32xf32>
    %cst_68 = arith.constant dense<0.000000e+00> : vector<8xf32>
    %131 = vector.multi_reduction <add>, %130, %cst_68 [1] : vector<8x32xf32> to vector<8xf32>
    %132 = vector.shape_cast %131 : vector<8xf32> to vector<8x1xf32>
    %cst_69 = arith.constant 3.200000e+01 : f32
    %133 = vector.broadcast %cst_69 : f32 to vector<8x1xf32>
    %134 = arith.divf %132, %133 : vector<8x1xf32>
    %135 = vector.broadcast %127 : vector<8x1xf32> to vector<8x32xf32>
    %136 = arith.subf %123, %135 : vector<8x32xf32>
    %cst_70 = arith.constant 9.99999974E-6 : f32
    %137 = vector.broadcast %cst_70 : f32 to vector<8x1xf32>
    %138 = arith.addf %134, %137 : vector<8x1xf32>
    %139 = math.rsqrt %138 : vector<8x1xf32>
    %140 = vector.broadcast %139 : vector<8x1xf32> to vector<8x32xf32>
    %141 = arith.mulf %136, %140 : vector<8x32xf32>
    %142 = vector.broadcast %26 : vector<1x32xf32> to vector<8x32xf32>
    %143 = arith.mulf %141, %142 : vector<8x32xf32>
    %144 = vector.broadcast %28 : vector<1x32xf32> to vector<8x32xf32>
    %145 = arith.addf %143, %144 : vector<8x32xf32>
    %c0_71 = arith.constant 0 : index
    %c0_72 = arith.constant 0 : index
    %c0_73 = arith.constant 0 : index
    %146 = vector.load %arg16[%c0_71, %c0_72, %c0_73] : memref<1x8x32xf32, #tpu.memory_space<vmem>>, vector<1x8x32xf32>
    %147 = vector.shape_cast %146 : vector<1x8x32xf32> to vector<8x32xf32>
    %148 = vector.shape_cast %145 : vector<8x32xf32> to vector<1x8x32xf32>
    tpu.vector_store %arg16[%c0_71, %c0_72, %c0_73], %148 {strides = array<i32>} : memref<1x8x32xf32, #tpu.memory_space<vmem>>, vector<1x8x32xf32>,
    return
  }
  func.func @transform_0(%arg0: i32, %arg1: i32) -> (i32, i32, i32) {
    %c0_i32 = arith.constant 0 : i32
    %c0_i32_0 = arith.constant 0 : i32
    %c0_i32_1 = arith.constant 0 : i32
    return %arg0, %c0_i32, %c0_i32_0 : i32, i32, i32
  }
  func.func @transform_1(%arg0: i32, %arg1: i32) -> (i32, i32, i32, i32) {
    %c0_i32 = arith.constant 0 : i32
    %c0_i32_0 = arith.constant 0 : i32
    %c0_i32_1 = arith.constant 0 : i32
    %c0_i32_2 = arith.constant 0 : i32
    return %arg0, %c0_i32, %c0_i32_0, %c0_i32_1 : i32, i32, i32, i32
  }
  func.func @transform_2(%arg0: i32, %arg1: i32) -> (i32, i32, i32) {
    %c0_i32 = arith.constant 0 : i32
    %c0_i32_0 = arith.constant 0 : i32
    %c0_i32_1 = arith.constant 0 : i32
    return %arg1, %c0_i32, %c0_i32_0 : i32, i32, i32
  }
  func.func @transform_3(%arg0: i32, %arg1: i32) -> (i32, i32, i32) {
    %c0_i32 = arith.constant 0 : i32
    %c0_i32_0 = arith.constant 0 : i32
    %c0_i32_1 = arith.constant 0 : i32
    return %arg1, %c0_i32, %c0_i32_0 : i32, i32, i32
  }
  func.func @transform_4(%arg0: i32, %arg1: i32) -> (i32, i32, i32) {
    %c0_i32 = arith.constant 0 : i32
    %c0_i32_0 = arith.constant 0 : i32
    %c0_i32_1 = arith.constant 0 : i32
    return %arg1, %c0_i32, %c0_i32_0 : i32, i32, i32
  }
  func.func @transform_5(%arg0: i32, %arg1: i32) -> (i32, i32, i32) {
    %c0_i32 = arith.constant 0 : i32
    %c0_i32_0 = arith.constant 0 : i32
    %c0_i32_1 = arith.constant 0 : i32
    return %arg1, %c0_i32, %c0_i32_0 : i32, i32, i32
  }
  func.func @transform_6(%arg0: i32, %arg1: i32) -> (i32, i32, i32) {
    %c0_i32 = arith.constant 0 : i32
    %c0_i32_0 = arith.constant 0 : i32
    %c0_i32_1 = arith.constant 0 : i32
    return %arg1, %c0_i32, %c0_i32_0 : i32, i32, i32
  }
  func.func @transform_7(%arg0: i32, %arg1: i32) -> (i32, i32, i32) {
    %c0_i32 = arith.constant 0 : i32
    %c0_i32_0 = arith.constant 0 : i32
    %c0_i32_1 = arith.constant 0 : i32
    return %arg1, %c0_i32, %c0_i32_0 : i32, i32, i32
  }
  func.func @transform_8(%arg0: i32, %arg1: i32) -> (i32, i32, i32) {
    %c0_i32 = arith.constant 0 : i32
    %c0_i32_0 = arith.constant 0 : i32
    %c0_i32_1 = arith.constant 0 : i32
    return %arg1, %c0_i32, %c0_i32_0 : i32, i32, i32
  }
  func.func @transform_9(%arg0: i32, %arg1: i32) -> (i32, i32, i32) {
    %c0_i32 = arith.constant 0 : i32
    %c0_i32_0 = arith.constant 0 : i32
    %c0_i32_1 = arith.constant 0 : i32
    return %arg1, %c0_i32, %c0_i32_0 : i32, i32, i32
  }
  func.func @transform_10(%arg0: i32, %arg1: i32) -> (i32, i32, i32) {
    %c0_i32 = arith.constant 0 : i32
    %c0_i32_0 = arith.constant 0 : i32
    %c0_i32_1 = arith.constant 0 : i32
    return %arg1, %c0_i32, %c0_i32_0 : i32, i32, i32
  }
  func.func @transform_11(%arg0: i32, %arg1: i32) -> (i32, i32, i32) {
    %c0_i32 = arith.constant 0 : i32
    %c0_i32_0 = arith.constant 0 : i32
    %c0_i32_1 = arith.constant 0 : i32
    return %arg1, %c0_i32, %c0_i32_0 : i32, i32, i32
  }
  func.func @transform_12(%arg0: i32, %arg1: i32) -> (i32, i32, i32) {
    %c0_i32 = arith.constant 0 : i32
    %c0_i32_0 = arith.constant 0 : i32
    %c0_i32_1 = arith.constant 0 : i32
    return %arg1, %c0_i32, %c0_i32_0 : i32, i32, i32
  }
  func.func @transform_13(%arg0: i32, %arg1: i32) -> (i32, i32, i32) {
    %c0_i32 = arith.constant 0 : i32
    %c0_i32_0 = arith.constant 0 : i32
    %c0_i32_1 = arith.constant 0 : i32
    return %arg1, %c0_i32, %c0_i32_0 : i32, i32, i32
  }
  func.func @transform_14(%arg0: i32, %arg1: i32) -> (i32, i32, i32) {
    %c0_i32 = arith.constant 0 : i32
    %c0_i32_0 = arith.constant 0 : i32
    %c0_i32_1 = arith.constant 0 : i32
    return %arg0, %c0_i32, %c0_i32_0 : i32, i32, i32
  }
}

module attributes {stable_mosaic.version = 11 : i64} {
  func.func @_stack_kernel(%arg0: i32, %arg1: i32, %arg2: memref<1x9x32xf32, #tpu.memory_space<vmem>>, %arg3: memref<1x32x96xbf16, #tpu.memory_space<vmem>>, %arg4: memref<1x1x96xf32, #tpu.memory_space<vmem>>, %arg5: memref<1x32x32xbf16, #tpu.memory_space<vmem>>, %arg6: memref<1x1x32xf32, #tpu.memory_space<vmem>>, %arg7: memref<1x32x128xbf16, #tpu.memory_space<vmem>>, %arg8: memref<1x1x128xf32, #tpu.memory_space<vmem>>, %arg9: memref<1x128x32xbf16, #tpu.memory_space<vmem>>, %arg10: memref<1x1x32xf32, #tpu.memory_space<vmem>>, %arg11: memref<1x1x32xf32, #tpu.memory_space<vmem>>, %arg12: memref<1x1x32xf32, #tpu.memory_space<vmem>>, %arg13: memref<1x1x32xf32, #tpu.memory_space<vmem>>, %arg14: memref<1x1x32xf32, #tpu.memory_space<vmem>>, %arg15: memref<1x9x32xf32, #tpu.memory_space<vmem>>) attributes {dimension_semantics = [#tpu.dimension_semantics<parallel>, #tpu.dimension_semantics<arbitrary>], iteration_bounds = array<i64: 2, 2>, scalar_prefetch = 0 : i64, scratch_operands = 0 : i64, tpu.core_type = #tpu.core_type<tc>, window_params = [{transform_indices = @transform_0, window_bounds = array<i64: 1, 9, 32>}, {transform_indices = @transform_1, window_bounds = array<i64: 1, 32, 96>}, {transform_indices = @transform_2, window_bounds = array<i64: 1, 1, 96>}, {transform_indices = @transform_3, window_bounds = array<i64: 1, 32, 32>}, {transform_indices = @transform_4, window_bounds = array<i64: 1, 1, 32>}, {transform_indices = @transform_5, window_bounds = array<i64: 1, 32, 128>}, {transform_indices = @transform_6, window_bounds = array<i64: 1, 1, 128>}, {transform_indices = @transform_7, window_bounds = array<i64: 1, 128, 32>}, {transform_indices = @transform_8, window_bounds = array<i64: 1, 1, 32>}, {transform_indices = @transform_9, window_bounds = array<i64: 1, 1, 32>}, {transform_indices = @transform_10, window_bounds = array<i64: 1, 1, 32>}, {transform_indices = @transform_11, window_bounds = array<i64: 1, 1, 32>}, {transform_indices = @transform_12, window_bounds = array<i64: 1, 1, 32>}, {transform_indices = @transform_13, window_bounds = array<i64: 1, 9, 32>}]} {
    %c0_i32 = arith.constant 0 : i32
    %0 = arith.cmpi eq, %arg1, %c0_i32 : i32
    %1 = arith.extui %0 : i1 to i32
    %c0_i32_0 = arith.constant 0 : i32
    %2 = arith.cmpi ne, %1, %c0_i32_0 : i32
    scf.if %2 {
      %c0_69 = arith.constant 0 : index
      %c0_70 = arith.constant 0 : index
      %c0_71 = arith.constant 0 : index
      %151 = vector.load %arg2[%c0_69, %c0_70, %c0_71] : memref<1x9x32xf32, #tpu.memory_space<vmem>>, vector<1x9x32xf32>
      %152 = vector.shape_cast %151 : vector<1x9x32xf32> to vector<9x32xf32>
      %c0_72 = arith.constant 0 : index
      %c0_73 = arith.constant 0 : index
      %c0_74 = arith.constant 0 : index
      %153 = vector.load %arg15[%c0_72, %c0_73, %c0_74] : memref<1x9x32xf32, #tpu.memory_space<vmem>>, vector<1x9x32xf32>
      %154 = vector.shape_cast %153 : vector<1x9x32xf32> to vector<9x32xf32>
      %155 = vector.shape_cast %152 : vector<9x32xf32> to vector<1x9x32xf32>
      tpu.vector_store %arg15[%c0_72, %c0_73, %c0_74], %155 {strides = array<i32>} : memref<1x9x32xf32, #tpu.memory_space<vmem>>, vector<1x9x32xf32>,
    } else {
    }
    %c0 = arith.constant 0 : index
    %c0_1 = arith.constant 0 : index
    %c0_2 = arith.constant 0 : index
    %3 = vector.load %arg15[%c0, %c0_1, %c0_2] : memref<1x9x32xf32, #tpu.memory_space<vmem>>, vector<1x9x32xf32>
    %4 = vector.shape_cast %3 : vector<1x9x32xf32> to vector<9x32xf32>
    %5 = tpu.iota {dimensions = array<i32: 0>} : vector<9x9xi32>
    %6 = tpu.iota {dimensions = array<i32: 1>} : vector<9x9xi32>
    %7 = arith.cmpi sge, %5, %6 : vector<9x9xi32>
    %cst = arith.constant 0.000000e+00 : f32
    %cst_3 = arith.constant -1.000000e+09 : f32
    %8 = vector.broadcast %cst : f32 to vector<9x9xf32>
    %9 = vector.broadcast %cst_3 : f32 to vector<9x9xf32>
    %10 = arith.select %7, %8, %9 : vector<9x9xi1>, vector<9x9xf32>
    %c0_4 = arith.constant 0 : index
    %c0_5 = arith.constant 0 : index
    %c0_6 = arith.constant 0 : index
    %11 = vector.load %arg3[%c0_4, %c0_5, %c0_6] : memref<1x32x96xbf16, #tpu.memory_space<vmem>>, vector<1x32x96xbf16>
    %12 = vector.shape_cast %11 : vector<1x32x96xbf16> to vector<32x96xbf16>
    %c0_7 = arith.constant 0 : index
    %c0_8 = arith.constant 0 : index
    %c0_9 = arith.constant 0 : index
    %13 = vector.load %arg4[%c0_7, %c0_8, %c0_9] : memref<1x1x96xf32, #tpu.memory_space<vmem>>, vector<1x1x96xf32>
    %14 = vector.shape_cast %13 : vector<1x1x96xf32> to vector<1x96xf32>
    %c0_10 = arith.constant 0 : index
    %c0_11 = arith.constant 0 : index
    %c0_12 = arith.constant 0 : index
    %15 = vector.load %arg5[%c0_10, %c0_11, %c0_12] : memref<1x32x32xbf16, #tpu.memory_space<vmem>>, vector<1x32x32xbf16>
    %16 = vector.shape_cast %15 : vector<1x32x32xbf16> to vector<32x32xbf16>
    %c0_13 = arith.constant 0 : index
    %c0_14 = arith.constant 0 : index
    %c0_15 = arith.constant 0 : index
    %17 = vector.load %arg6[%c0_13, %c0_14, %c0_15] : memref<1x1x32xf32, #tpu.memory_space<vmem>>, vector<1x1x32xf32>
    %18 = vector.shape_cast %17 : vector<1x1x32xf32> to vector<1x32xf32>
    %c0_16 = arith.constant 0 : index
    %c0_17 = arith.constant 0 : index
    %c0_18 = arith.constant 0 : index
    %19 = vector.load %arg7[%c0_16, %c0_17, %c0_18] : memref<1x32x128xbf16, #tpu.memory_space<vmem>>, vector<1x32x128xbf16>
    %20 = vector.shape_cast %19 : vector<1x32x128xbf16> to vector<32x128xbf16>
    %c0_19 = arith.constant 0 : index
    %c0_20 = arith.constant 0 : index
    %c0_21 = arith.constant 0 : index
    %21 = vector.load %arg8[%c0_19, %c0_20, %c0_21] : memref<1x1x128xf32, #tpu.memory_space<vmem>>, vector<1x1x128xf32>
    %22 = vector.shape_cast %21 : vector<1x1x128xf32> to vector<1x128xf32>
    %c0_22 = arith.constant 0 : index
    %c0_23 = arith.constant 0 : index
    %c0_24 = arith.constant 0 : index
    %23 = vector.load %arg9[%c0_22, %c0_23, %c0_24] : memref<1x128x32xbf16, #tpu.memory_space<vmem>>, vector<1x128x32xbf16>
    %24 = vector.shape_cast %23 : vector<1x128x32xbf16> to vector<128x32xbf16>
    %c0_25 = arith.constant 0 : index
    %c0_26 = arith.constant 0 : index
    %c0_27 = arith.constant 0 : index
    %25 = vector.load %arg10[%c0_25, %c0_26, %c0_27] : memref<1x1x32xf32, #tpu.memory_space<vmem>>, vector<1x1x32xf32>
    %26 = vector.shape_cast %25 : vector<1x1x32xf32> to vector<1x32xf32>
    %c0_28 = arith.constant 0 : index
    %c0_29 = arith.constant 0 : index
    %c0_30 = arith.constant 0 : index
    %27 = vector.load %arg11[%c0_28, %c0_29, %c0_30] : memref<1x1x32xf32, #tpu.memory_space<vmem>>, vector<1x1x32xf32>
    %28 = vector.shape_cast %27 : vector<1x1x32xf32> to vector<1x32xf32>
    %c0_31 = arith.constant 0 : index
    %c0_32 = arith.constant 0 : index
    %c0_33 = arith.constant 0 : index
    %29 = vector.load %arg12[%c0_31, %c0_32, %c0_33] : memref<1x1x32xf32, #tpu.memory_space<vmem>>, vector<1x1x32xf32>
    %30 = vector.shape_cast %29 : vector<1x1x32xf32> to vector<1x32xf32>
    %c0_34 = arith.constant 0 : index
    %c0_35 = arith.constant 0 : index
    %c0_36 = arith.constant 0 : index
    %31 = vector.load %arg13[%c0_34, %c0_35, %c0_36] : memref<1x1x32xf32, #tpu.memory_space<vmem>>, vector<1x1x32xf32>
    %32 = vector.shape_cast %31 : vector<1x1x32xf32> to vector<1x32xf32>
    %c0_37 = arith.constant 0 : index
    %c0_38 = arith.constant 0 : index
    %c0_39 = arith.constant 0 : index
    %33 = vector.load %arg14[%c0_37, %c0_38, %c0_39] : memref<1x1x32xf32, #tpu.memory_space<vmem>>, vector<1x1x32xf32>
    %34 = vector.shape_cast %33 : vector<1x1x32xf32> to vector<1x32xf32>
    %35 = arith.truncf %4 : vector<9x32xf32> to vector<9x32xbf16>
    %cst_40 = arith.constant dense<0.000000e+00> : vector<9x96xf32>
    %36 = tpu.matmul %35, %12, %cst_40 {dimension_numbers = #tpu.dot_dimension_numbers<[1], [0], [0], [1], [0, 0, 1, 1], [], []>} : vector<9x32xbf16>, vector<32x96xbf16>, vector<9x96xf32> -> vector<9x96xf32>
    %37 = vector.broadcast %14 : vector<1x96xf32> to vector<9x96xf32>
    %38 = arith.addf %36, %37 : vector<9x96xf32>
    %39 = vector.extract_strided_slice %38 {offsets = [0, 0], sizes = [9, 16], strides = [1, 1]} : vector<9x96xf32> to vector<9x16xf32>
    %40 = arith.truncf %39 : vector<9x16xf32> to vector<9x16xbf16>
    %41 = vector.extract_strided_slice %38 {offsets = [0, 32], sizes = [9, 16], strides = [1, 1]} : vector<9x96xf32> to vector<9x16xf32>
    %42 = arith.truncf %41 : vector<9x16xf32> to vector<9x16xbf16>
    %43 = vector.extract_strided_slice %38 {offsets = [0, 64], sizes = [9, 16], strides = [1, 1]} : vector<9x96xf32> to vector<9x16xf32>
    %44 = arith.truncf %43 : vector<9x16xf32> to vector<9x16xbf16>
    %cst_41 = arith.constant dense<0.000000e+00> : vector<9x9xf32>
    %45 = tpu.matmul %40, %42, %cst_41 {dimension_numbers = #tpu.dot_dimension_numbers<[1], [1], [0], [0], [0, 0, 1, 0], [], []>} : vector<9x16xbf16>, vector<9x16xbf16>, vector<9x9xf32> -> vector<9x9xf32>
    %cst_42 = arith.constant 2.500000e-01 : f32
    %46 = vector.broadcast %cst_42 : f32 to vector<9x9xf32>
    %47 = arith.mulf %45, %46 : vector<9x9xf32>
    %48 = arith.addf %47, %10 : vector<9x9xf32>
    %cst_43 = arith.constant dense<0xFF800000> : vector<9xf32>
    %49 = vector.multi_reduction <maximumf>, %48, %cst_43 [1] : vector<9x9xf32> to vector<9xf32>
    %50 = vector.shape_cast %49 : vector<9xf32> to vector<9x1xf32>
    %51 = vector.broadcast %50 : vector<9x1xf32> to vector<9x9xf32>
    %52 = arith.subf %48, %51 : vector<9x9xf32>
    %53 = math.exp %52 : vector<9x9xf32>
    %cst_44 = arith.constant dense<0.000000e+00> : vector<9xf32>
    %54 = vector.multi_reduction <add>, %53, %cst_44 [1] : vector<9x9xf32> to vector<9xf32>
    %55 = vector.shape_cast %54 : vector<9xf32> to vector<9x1xf32>
    %56 = tpu.reciprocal %55 {approx = true} : vector<9x1xf32> -> vector<9x1xf32>
    %57 = vector.broadcast %56 : vector<9x1xf32> to vector<9x9xf32>
    %58 = arith.mulf %53, %57 : vector<9x9xf32>
    %59 = arith.truncf %58 : vector<9x9xf32> to vector<9x9xbf16>
    %cst_45 = arith.constant dense<0.000000e+00> : vector<9x16xf32>
    %60 = tpu.matmul %59, %44, %cst_45 {dimension_numbers = #tpu.dot_dimension_numbers<[1], [0], [0], [1], [0, 0, 1, 1], [], []>} : vector<9x9xbf16>, vector<9x16xbf16>, vector<9x16xf32> -> vector<9x16xf32>
    %61 = arith.truncf %60 : vector<9x16xf32> to vector<9x16xbf16>
    %62 = vector.extract_strided_slice %16 {offsets = [0, 0], sizes = [16, 32], strides = [1, 1]} : vector<32x32xbf16> to vector<16x32xbf16>
    %cst_46 = arith.constant dense<0.000000e+00> : vector<9x32xf32>
    %63 = tpu.matmul %61, %62, %cst_46 {dimension_numbers = #tpu.dot_dimension_numbers<[1], [0], [0], [1], [0, 0, 1, 1], [], []>} : vector<9x16xbf16>, vector<16x32xbf16>, vector<9x32xf32> -> vector<9x32xf32>
    %64 = vector.extract_strided_slice %38 {offsets = [0, 16], sizes = [9, 16], strides = [1, 1]} : vector<9x96xf32> to vector<9x16xf32>
    %65 = arith.truncf %64 : vector<9x16xf32> to vector<9x16xbf16>
    %66 = vector.extract_strided_slice %38 {offsets = [0, 48], sizes = [9, 16], strides = [1, 1]} : vector<9x96xf32> to vector<9x16xf32>
    %67 = arith.truncf %66 : vector<9x16xf32> to vector<9x16xbf16>
    %68 = vector.extract_strided_slice %38 {offsets = [0, 80], sizes = [9, 16], strides = [1, 1]} : vector<9x96xf32> to vector<9x16xf32>
    %69 = arith.truncf %68 : vector<9x16xf32> to vector<9x16xbf16>
    %cst_47 = arith.constant dense<0.000000e+00> : vector<9x9xf32>
    %70 = tpu.matmul %65, %67, %cst_47 {dimension_numbers = #tpu.dot_dimension_numbers<[1], [1], [0], [0], [0, 0, 1, 0], [], []>} : vector<9x16xbf16>, vector<9x16xbf16>, vector<9x9xf32> -> vector<9x9xf32>
    %cst_48 = arith.constant 2.500000e-01 : f32
    %71 = vector.broadcast %cst_48 : f32 to vector<9x9xf32>
    %72 = arith.mulf %70, %71 : vector<9x9xf32>
    %73 = arith.addf %72, %10 : vector<9x9xf32>
    %cst_49 = arith.constant dense<0xFF800000> : vector<9xf32>
    %74 = vector.multi_reduction <maximumf>, %73, %cst_49 [1] : vector<9x9xf32> to vector<9xf32>
    %75 = vector.shape_cast %74 : vector<9xf32> to vector<9x1xf32>
    %76 = vector.broadcast %75 : vector<9x1xf32> to vector<9x9xf32>
    %77 = arith.subf %73, %76 : vector<9x9xf32>
    %78 = math.exp %77 : vector<9x9xf32>
    %cst_50 = arith.constant dense<0.000000e+00> : vector<9xf32>
    %79 = vector.multi_reduction <add>, %78, %cst_50 [1] : vector<9x9xf32> to vector<9xf32>
    %80 = vector.shape_cast %79 : vector<9xf32> to vector<9x1xf32>
    %81 = tpu.reciprocal %80 {approx = true} : vector<9x1xf32> -> vector<9x1xf32>
    %82 = vector.broadcast %81 : vector<9x1xf32> to vector<9x9xf32>
    %83 = arith.mulf %78, %82 : vector<9x9xf32>
    %84 = arith.truncf %83 : vector<9x9xf32> to vector<9x9xbf16>
    %cst_51 = arith.constant dense<0.000000e+00> : vector<9x16xf32>
    %85 = tpu.matmul %84, %69, %cst_51 {dimension_numbers = #tpu.dot_dimension_numbers<[1], [0], [0], [1], [0, 0, 1, 1], [], []>} : vector<9x9xbf16>, vector<9x16xbf16>, vector<9x16xf32> -> vector<9x16xf32>
    %86 = arith.truncf %85 : vector<9x16xf32> to vector<9x16xbf16>
    %87 = vector.extract_strided_slice %16 {offsets = [16, 0], sizes = [16, 32], strides = [1, 1]} : vector<32x32xbf16> to vector<16x32xbf16>
    %cst_52 = arith.constant dense<0.000000e+00> : vector<9x32xf32>
    %88 = tpu.matmul %86, %87, %cst_52 {dimension_numbers = #tpu.dot_dimension_numbers<[1], [0], [0], [1], [0, 0, 1, 1], [], []>} : vector<9x16xbf16>, vector<16x32xbf16>, vector<9x32xf32> -> vector<9x32xf32>
    %89 = arith.addf %63, %88 : vector<9x32xf32>
    %90 = arith.addf %4, %89 : vector<9x32xf32>
    %91 = vector.broadcast %18 : vector<1x32xf32> to vector<9x32xf32>
    %92 = arith.addf %90, %91 : vector<9x32xf32>
    %cst_53 = arith.constant dense<0.000000e+00> : vector<9xf32>
    %93 = vector.multi_reduction <add>, %92, %cst_53 [1] : vector<9x32xf32> to vector<9xf32>
    %94 = vector.shape_cast %93 : vector<9xf32> to vector<9x1xf32>
    %cst_54 = arith.constant 3.200000e+01 : f32
    %95 = vector.broadcast %cst_54 : f32 to vector<9x1xf32>
    %96 = arith.divf %94, %95 : vector<9x1xf32>
    %97 = vector.broadcast %96 : vector<9x1xf32> to vector<9x32xf32>
    %98 = arith.subf %92, %97 : vector<9x32xf32>
    %99 = arith.mulf %98, %98 : vector<9x32xf32>
    %cst_55 = arith.constant dense<0.000000e+00> : vector<9xf32>
    %100 = vector.multi_reduction <add>, %99, %cst_55 [1] : vector<9x32xf32> to vector<9xf32>
    %101 = vector.shape_cast %100 : vector<9xf32> to vector<9x1xf32>
    %cst_56 = arith.constant 3.200000e+01 : f32
    %102 = vector.broadcast %cst_56 : f32 to vector<9x1xf32>
    %103 = arith.divf %101, %102 : vector<9x1xf32>
    %104 = vector.broadcast %96 : vector<9x1xf32> to vector<9x32xf32>
    %105 = arith.subf %92, %104 : vector<9x32xf32>
    %cst_57 = arith.constant 9.99999974E-6 : f32
    %106 = vector.broadcast %cst_57 : f32 to vector<9x1xf32>
    %107 = arith.addf %103, %106 : vector<9x1xf32>
    %108 = math.rsqrt %107 : vector<9x1xf32>
    %109 = vector.broadcast %108 : vector<9x1xf32> to vector<9x32xf32>
    %110 = arith.mulf %105, %109 : vector<9x32xf32>
    %111 = vector.broadcast %28 : vector<1x32xf32> to vector<9x32xf32>
    %112 = arith.mulf %110, %111 : vector<9x32xf32>
    %113 = vector.broadcast %30 : vector<1x32xf32> to vector<9x32xf32>
    %114 = arith.addf %112, %113 : vector<9x32xf32>
    %115 = arith.truncf %114 : vector<9x32xf32> to vector<9x32xbf16>
    %cst_58 = arith.constant dense<0.000000e+00> : vector<9x128xf32>
    %116 = tpu.matmul %115, %20, %cst_58 {dimension_numbers = #tpu.dot_dimension_numbers<[1], [0], [0], [1], [0, 0, 1, 1], [], []>} : vector<9x32xbf16>, vector<32x128xbf16>, vector<9x128xf32> -> vector<9x128xf32>
    %117 = vector.broadcast %22 : vector<1x128xf32> to vector<9x128xf32>
    %118 = arith.addf %116, %117 : vector<9x128xf32>
    %cst_59 = arith.constant 0.000000e+00 : f32
    %119 = vector.broadcast %cst_59 : f32 to vector<9x128xf32>
    %120 = arith.maximumf %118, %119 : vector<9x128xf32>
    %121 = arith.truncf %120 : vector<9x128xf32> to vector<9x128xbf16>
    %cst_60 = arith.constant dense<0.000000e+00> : vector<9x32xf32>
    %122 = tpu.matmul %121, %24, %cst_60 {dimension_numbers = #tpu.dot_dimension_numbers<[1], [0], [0], [1], [0, 0, 1, 1], [], []>} : vector<9x128xbf16>, vector<128x32xbf16>, vector<9x32xf32> -> vector<9x32xf32>
    %123 = vector.broadcast %26 : vector<1x32xf32> to vector<9x32xf32>
    %124 = arith.addf %122, %123 : vector<9x32xf32>
    %125 = arith.addf %114, %124 : vector<9x32xf32>
    %cst_61 = arith.constant dense<0.000000e+00> : vector<9xf32>
    %126 = vector.multi_reduction <add>, %125, %cst_61 [1] : vector<9x32xf32> to vector<9xf32>
    %127 = vector.shape_cast %126 : vector<9xf32> to vector<9x1xf32>
    %cst_62 = arith.constant 3.200000e+01 : f32
    %128 = vector.broadcast %cst_62 : f32 to vector<9x1xf32>
    %129 = arith.divf %127, %128 : vector<9x1xf32>
    %130 = vector.broadcast %129 : vector<9x1xf32> to vector<9x32xf32>
    %131 = arith.subf %125, %130 : vector<9x32xf32>
    %132 = arith.mulf %131, %131 : vector<9x32xf32>
    %cst_63 = arith.constant dense<0.000000e+00> : vector<9xf32>
    %133 = vector.multi_reduction <add>, %132, %cst_63 [1] : vector<9x32xf32> to vector<9xf32>
    %134 = vector.shape_cast %133 : vector<9xf32> to vector<9x1xf32>
    %cst_64 = arith.constant 3.200000e+01 : f32
    %135 = vector.broadcast %cst_64 : f32 to vector<9x1xf32>
    %136 = arith.divf %134, %135 : vector<9x1xf32>
    %137 = vector.broadcast %129 : vector<9x1xf32> to vector<9x32xf32>
    %138 = arith.subf %125, %137 : vector<9x32xf32>
    %cst_65 = arith.constant 9.99999974E-6 : f32
    %139 = vector.broadcast %cst_65 : f32 to vector<9x1xf32>
    %140 = arith.addf %136, %139 : vector<9x1xf32>
    %141 = math.rsqrt %140 : vector<9x1xf32>
    %142 = vector.broadcast %141 : vector<9x1xf32> to vector<9x32xf32>
    %143 = arith.mulf %138, %142 : vector<9x32xf32>
    %144 = vector.broadcast %32 : vector<1x32xf32> to vector<9x32xf32>
    %145 = arith.mulf %143, %144 : vector<9x32xf32>
    %146 = vector.broadcast %34 : vector<1x32xf32> to vector<9x32xf32>
    %147 = arith.addf %145, %146 : vector<9x32xf32>
    %c0_66 = arith.constant 0 : index
    %c0_67 = arith.constant 0 : index
    %c0_68 = arith.constant 0 : index
    %148 = vector.load %arg15[%c0_66, %c0_67, %c0_68] : memref<1x9x32xf32, #tpu.memory_space<vmem>>, vector<1x9x32xf32>
    %149 = vector.shape_cast %148 : vector<1x9x32xf32> to vector<9x32xf32>
    %150 = vector.shape_cast %147 : vector<9x32xf32> to vector<1x9x32xf32>
    tpu.vector_store %arg15[%c0_66, %c0_67, %c0_68], %150 {strides = array<i32>} : memref<1x9x32xf32, #tpu.memory_space<vmem>>, vector<1x9x32xf32>,
    return
  }
  func.func @transform_0(%arg0: i32, %arg1: i32) -> (i32, i32, i32) {
    %c0_i32 = arith.constant 0 : i32
    %c0_i32_0 = arith.constant 0 : i32
    %c0_i32_1 = arith.constant 0 : i32
    return %arg0, %c0_i32, %c0_i32_0 : i32, i32, i32
  }
  func.func @transform_1(%arg0: i32, %arg1: i32) -> (i32, i32, i32) {
    %c0_i32 = arith.constant 0 : i32
    %c0_i32_0 = arith.constant 0 : i32
    %c0_i32_1 = arith.constant 0 : i32
    return %arg1, %c0_i32, %c0_i32_0 : i32, i32, i32
  }
  func.func @transform_2(%arg0: i32, %arg1: i32) -> (i32, i32, i32) {
    %c0_i32 = arith.constant 0 : i32
    %c0_i32_0 = arith.constant 0 : i32
    %c0_i32_1 = arith.constant 0 : i32
    return %arg1, %c0_i32, %c0_i32_0 : i32, i32, i32
  }
  func.func @transform_3(%arg0: i32, %arg1: i32) -> (i32, i32, i32) {
    %c0_i32 = arith.constant 0 : i32
    %c0_i32_0 = arith.constant 0 : i32
    %c0_i32_1 = arith.constant 0 : i32
    return %arg1, %c0_i32, %c0_i32_0 : i32, i32, i32
  }
  func.func @transform_4(%arg0: i32, %arg1: i32) -> (i32, i32, i32) {
    %c0_i32 = arith.constant 0 : i32
    %c0_i32_0 = arith.constant 0 : i32
    %c0_i32_1 = arith.constant 0 : i32
    return %arg1, %c0_i32, %c0_i32_0 : i32, i32, i32
  }
  func.func @transform_5(%arg0: i32, %arg1: i32) -> (i32, i32, i32) {
    %c0_i32 = arith.constant 0 : i32
    %c0_i32_0 = arith.constant 0 : i32
    %c0_i32_1 = arith.constant 0 : i32
    return %arg1, %c0_i32, %c0_i32_0 : i32, i32, i32
  }
  func.func @transform_6(%arg0: i32, %arg1: i32) -> (i32, i32, i32) {
    %c0_i32 = arith.constant 0 : i32
    %c0_i32_0 = arith.constant 0 : i32
    %c0_i32_1 = arith.constant 0 : i32
    return %arg1, %c0_i32, %c0_i32_0 : i32, i32, i32
  }
  func.func @transform_7(%arg0: i32, %arg1: i32) -> (i32, i32, i32) {
    %c0_i32 = arith.constant 0 : i32
    %c0_i32_0 = arith.constant 0 : i32
    %c0_i32_1 = arith.constant 0 : i32
    return %arg1, %c0_i32, %c0_i32_0 : i32, i32, i32
  }
  func.func @transform_8(%arg0: i32, %arg1: i32) -> (i32, i32, i32) {
    %c0_i32 = arith.constant 0 : i32
    %c0_i32_0 = arith.constant 0 : i32
    %c0_i32_1 = arith.constant 0 : i32
    return %arg1, %c0_i32, %c0_i32_0 : i32, i32, i32
  }
  func.func @transform_9(%arg0: i32, %arg1: i32) -> (i32, i32, i32) {
    %c0_i32 = arith.constant 0 : i32
    %c0_i32_0 = arith.constant 0 : i32
    %c0_i32_1 = arith.constant 0 : i32
    return %arg1, %c0_i32, %c0_i32_0 : i32, i32, i32
  }
  func.func @transform_10(%arg0: i32, %arg1: i32) -> (i32, i32, i32) {
    %c0_i32 = arith.constant 0 : i32
    %c0_i32_0 = arith.constant 0 : i32
    %c0_i32_1 = arith.constant 0 : i32
    return %arg1, %c0_i32, %c0_i32_0 : i32, i32, i32
  }
  func.func @transform_11(%arg0: i32, %arg1: i32) -> (i32, i32, i32) {
    %c0_i32 = arith.constant 0 : i32
    %c0_i32_0 = arith.constant 0 : i32
    %c0_i32_1 = arith.constant 0 : i32
    return %arg1, %c0_i32, %c0_i32_0 : i32, i32, i32
  }
  func.func @transform_12(%arg0: i32, %arg1: i32) -> (i32, i32, i32) {
    %c0_i32 = arith.constant 0 : i32
    %c0_i32_0 = arith.constant 0 : i32
    %c0_i32_1 = arith.constant 0 : i32
    return %arg1, %c0_i32, %c0_i32_0 : i32, i32, i32
  }
  func.func @transform_13(%arg0: i32, %arg1: i32) -> (i32, i32, i32) {
    %c0_i32 = arith.constant 0 : i32
    %c0_i32_0 = arith.constant 0 : i32
    %c0_i32_1 = arith.constant 0 : i32
    return %arg0, %c0_i32, %c0_i32_0 : i32, i32, i32
  }
}

</mosaic_0001>

<llo_original>
// kernel: smiles_transformer_forward.2
$region0: #{smiles_transformer_forward.2}
  #allocation0 [shape = 'u32[]', space=smem, size = 0x4, offset = 0x4, fixed_abs, tag = 'smem constant byte address 0x4 - core index']
  #allocation1 [shape = 'u32[144,128]{1,0:T(1,128)}', space=vmem, size = 0x12000, scoped, tag = 'internal scratch']
  %s0 = inlined_call_operand.vmem [shape: f32[2,8,32], index: 0, kind: input, shape index: {}]
  %s1 = inlined_call_operand.vmem [shape: f32[2,2,8,8], index: 1, kind: input, shape index: {}]
  %s2 = inlined_call_operand.vmem [shape: bf16[2,32,96], index: 2, kind: input, shape index: {}]
  %s3 = inlined_call_operand.vmem [shape: f32[2,1,96], index: 3, kind: input, shape index: {}]
  %s4 = inlined_call_operand.vmem [shape: bf16[2,32,32], index: 4, kind: input, shape index: {}]
  %s5 = inlined_call_operand.vmem [shape: f32[2,1,32], index: 5, kind: input, shape index: {}, may-alias: {5,9,11,13}]
  %s6 = inlined_call_operand.vmem [shape: bf16[2,32,128], index: 6, kind: input, shape index: {}]
  %s7 = inlined_call_operand.vmem [shape: f32[2,1,128], index: 7, kind: input, shape index: {}]
  %s8 = inlined_call_operand.vmem [shape: bf16[2,128,32], index: 8, kind: input, shape index: {}]
  %s9 = inlined_call_operand.vmem [shape: f32[2,1,32], index: 9, kind: input, shape index: {}, may-alias: {5,9,11,13}]
  %s10 = inlined_call_operand.vmem [shape: f32[2,1,32], index: 10, kind: input, shape index: {}, may-alias: {10,12}]
  %s11 = inlined_call_operand.vmem [shape: f32[2,1,32], index: 11, kind: input, shape index: {}, may-alias: {5,9,11,13}]
  %s12 = inlined_call_operand.vmem [shape: f32[2,1,32], index: 12, kind: input, shape index: {}, may-alias: {10,12}]
  %s13 = inlined_call_operand.vmem [shape: f32[2,1,32], index: 13, kind: input, shape index: {}, may-alias: {5,9,11,13}]
  %s14 = inlined_call_operand.vmem [shape: f32[2,8,32], index: 14, kind: output, shape index: {}]
  %s15 = sld [smem:[#allocation0]]
  $region93: #{smiles_transformer_forward.2} parent=0
    _
  %s17 = ssub.s32 1, %s15
  %s18 = scalar_select 0, %s17, %s15
  loop: start=0, step=1, limit=6
  $region2: #{smiles_transformer_forward.2} parent=0 // loop_pre_header
    _
  $region3: #{smiles_transformer_forward.2} parent=0 // loop_header
    %s20 = sphi 0, %s24
    %p21 = scmp.ge.s32.totalorder %s20, 6
    %s27 = sphi 0, %s39
    %s28 = sphi 0, %s35
    %s29 = sphi 0, %s27
    %s30 = sphi 0, %s28
    %s31 = sphi 0, %s29
    %s32 = sphi 0, %s30
    %s42 = sphi 0, %s44
    %s45 = sphi 0, %s42
    %s46 = sphi 0, %s45
    %s62 = sphi 0, %s46
    %s68 = sphi 0, %s70
    %s71 = sphi 0, %s68
    %s72 = sphi 0, %s71
    %s88 = sphi 0, %s72
    %s94 = sphi 0, %s96
    %s97 = sphi 0, %s94
    %s98 = sphi 0, %s97
    %s114 = sphi 0, %s98
    %s120 = sphi 0, %s122
    %s123 = sphi 0, %s120
    %s124 = sphi 0, %s123
    %s140 = sphi 0, %s124
    %s146 = sphi 0, %s148
    %s149 = sphi 0, %s146
    %s150 = sphi 0, %s149
    %s166 = sphi 0, %s150
    %s172 = sphi 0, %s174
    %s175 = sphi 0, %s172
    %s176 = sphi 0, %s175
    %s192 = sphi 0, %s176
    %s198 = sphi 0, %s200
    %s201 = sphi 0, %s198
    %s202 = sphi 0, %s201
    %s218 = sphi 0, %s202
    %s224 = sphi 0, %s226
    %s227 = sphi 0, %s224
    %s228 = sphi 0, %s227
    %s244 = sphi 0, %s228
    %s250 = sphi 0, %s252
    %s253 = sphi 0, %s250
    %s254 = sphi 0, %s253
    %s270 = sphi 0, %s254
    %s276 = sphi 0, %s278
    %s279 = sphi 0, %s276
    %s280 = sphi 0, %s279
    %s296 = sphi 0, %s280
    %s302 = sphi 0, %s304
    %s305 = sphi 0, %s302
    %s306 = sphi 0, %s305
    %s322 = sphi 0, %s306
    %s328 = sphi 0, %s330
    %s331 = sphi 0, %s328
    %s332 = sphi 0, %s331
    %s348 = sphi 0, %s332
    %s354 = sphi 0, %s356
    %s357 = sphi 0, %s354
    %s358 = sphi 0, %s357
    %s374 = sphi 0, %s358
    %s380 = sphi 0, %s382
    %s383 = sphi 0, %s380
    %s384 = sphi 0, %s383
    %s400 = sphi 0, %s384
    %s406 = sphi 0, %s408
    %s409 = sphi 0, %s406
    %s410 = sphi 0, %s409
    %s426 = sphi 0, %s410
  $region4: #{smiles_transformer_forward.2} parent=0 // loop_header_branch
    %23 = sbr.rel (%p21) target = $region8
  $region5: #{smiles_transformer_forward.2} parent=0 // loop_body
    %s25 = ssub.s32 %s20, 1
    %s26 = ssub.s32 %s20, 2
    %s33 = sadd.s32 1, %s28
    %p34 = scmp.ge.s32.totalorder %s33, 2
    %s35 = scalar_select %p34, 0, %s33
    %s36 = sadd.s32 1, %s27
    %s37 = scalar_select %p34, %s36, %s27
    %p38 = scmp.ge.s32.totalorder %s37, 2
    %s39 = scalar_select %p38, 0, %s37
    %s40 = ssub.s32 %s27, %s39
    %p41 = scmp.eq.s32.totalorder %s40, 0
    %s43 = sadd.s32 %s42, 1
    %s44 = scalar_select %p41, %s42, %s43
    %p47 = pneg %p41
    %p48 = scmp.eq.s32.totalorder %s20, 3
    %p49 = por %p47, %p48
    %p50 = scmp.ne.s32.totalorder %s42, %s45
    %p51 = scmp.eq.s32.totalorder %s20, 0
    %p52 = por %p50, %p51
    %p53 = scmp.ne.s32.totalorder %s42, %s45
    %p54 = scmp.eq.s32.totalorder %s25, 3
    %p55 = por %p53, %p54
    %p56 = scmp.ne.s32.totalorder %s45, %s46
    %p57 = scmp.eq.s32.totalorder %s25, 0
    %p58 = por %p56, %p57
    %p59 = scmp.ne.s32.totalorder %s45, %s46
    %p60 = scmp.eq.s32.totalorder %s26, 3
    %p61 = por %p59, %p60
    %p63 = scmp.ne.s32.totalorder %s46, %s62
    %p64 = scmp.eq.s32.totalorder %s26, 0
    %p65 = por %p63, %p64
    %s66 = ssub.s32 %s27, %s39
    %p67 = scmp.eq.s32.totalorder %s66, 0
    %s69 = sadd.s32 %s68, 1
    %s70 = scalar_select %p67, %s68, %s69
    %p73 = pneg %p67
    %p74 = scmp.eq.s32.totalorder %s20, 3
    %p75 = por %p73, %p74
    %p76 = scmp.ne.s32.totalorder %s68, %s71
    %p77 = scmp.eq.s32.totalorder %s20, 0
    %p78 = por %p76, %p77
    %p79 = scmp.ne.s32.totalorder %s68, %s71
    %p80 = scmp.eq.s32.totalorder %s25, 3
    %p81 = por %p79, %p80
    %p82 = scmp.ne.s32.totalorder %s71, %s72
    %p83 = scmp.eq.s32.totalorder %s25, 0
    %p84 = por %p82, %p83
    %p85 = scmp.ne.s32.totalorder %s71, %s72
    %p86 = scmp.eq.s32.totalorder %s26, 3
    %p87 = por %p85, %p86
    %p89 = scmp.ne.s32.totalorder %s72, %s88
    %p90 = scmp.eq.s32.totalorder %s26, 0
    %p91 = por %p89, %p90
    %s92 = ssub.s32 %s28, %s35
    %p93 = scmp.eq.s32.totalorder %s92, 0
    %s95 = sadd.s32 %s94, 1
    %s96 = scalar_select %p93, %s94, %s95
    %p99 = pneg %p93
    %p100 = scmp.eq.s32.totalorder %s20, 3
    %p101 = por %p99, %p100
    %p102 = scmp.ne.s32.totalorder %s94, %s97
    %p103 = scmp.eq.s32.totalorder %s20, 0
    %p104 = por %p102, %p103
    %p105 = scmp.ne.s32.totalorder %s94, %s97
    %p106 = scmp.eq.s32.totalorder %s25, 3
    %p107 = por %p105, %p106
    %p108 = scmp.ne.s32.totalorder %s97, %s98
    %p109 = scmp.eq.s32.totalorder %s25, 0
    %p110 = por %p108, %p109
    %p111 = scmp.ne.s32.totalorder %s97, %s98
    %p112 = scmp.eq.s32.totalorder %s26, 3
    %p113 = por %p111, %p112
    %p115 = scmp.ne.s32.totalorder %s98, %s114
    %p116 = scmp.eq.s32.totalorder %s26, 0
    %p117 = por %p115, %p116
    %s118 = ssub.s32 %s28, %s35
    %p119 = scmp.eq.s32.totalorder %s118, 0
    %s121 = sadd.s32 %s120, 1
    %s122 = scalar_select %p119, %s120, %s121
    %p125 = pneg %p119
    %p126 = scmp.eq.s32.totalorder %s20, 3
    %p127 = por %p125, %p126
    %p128 = scmp.ne.s32.totalorder %s120, %s123
    %p129 = scmp.eq.s32.totalorder %s20, 0
    %p130 = por %p128, %p129
    %p131 = scmp.ne.s32.totalorder %s120, %s123
    %p132 = scmp.eq.s32.totalorder %s25, 3
    %p133 = por %p131, %p132
    %p134 = scmp.ne.s32.totalorder %s123, %s124
    %p135 = scmp.eq.s32.totalorder %s25, 0
    %p136 = por %p134, %p135
    %p137 = scmp.ne.s32.totalorder %s123, %s124
    %p138 = scmp.eq.s32.totalorder %s26, 3
    %p139 = por %p137, %p138
    %p141 = scmp.ne.s32.totalorder %s124, %s140
    %p142 = scmp.eq.s32.totalorder %s26, 0
    %p143 = por %p141, %p142
    %s144 = ssub.s32 %s28, %s35
    %p145 = scmp.eq.s32.totalorder %s144, 0
    %s147 = sadd.s32 %s146, 1
    %s148 = scalar_select %p145, %s146, %s147
    %p151 = pneg %p145
    %p152 = scmp.eq.s32.totalorder %s20, 3
    %p153 = por %p151, %p152
    %p154 = scmp.ne.s32.totalorder %s146, %s149
    %p155 = scmp.eq.s32.totalorder %s20, 0
    %p156 = por %p154, %p155
    %p157 = scmp.ne.s32.totalorder %s146, %s149
    %p158 = scmp.eq.s32.totalorder %s25, 3
    %p159 = por %p157, %p158
    %p160 = scmp.ne.s32.totalorder %s149, %s150
    %p161 = scmp.eq.s32.totalorder %s25, 0
    %p162 = por %p160, %p161
    %p163 = scmp.ne.s32.totalorder %s149, %s150
    %p164 = scmp.eq.s32.totalorder %s26, 3
    %p165 = por %p163, %p164
    %p167 = scmp.ne.s32.totalorder %s150, %s166
    %p168 = scmp.eq.s32.totalorder %s26, 0
    %p169 = por %p167, %p168
    %s170 = ssub.s32 %s28, %s35
    %p171 = scmp.eq.s32.totalorder %s170, 0
    %s173 = sadd.s32 %s172, 1
    %s174 = scalar_select %p171, %s172, %s173
    %p177 = pneg %p171
    %p178 = scmp.eq.s32.totalorder %s20, 3
    %p179 = por %p177, %p178
    %p180 = scmp.ne.s32.totalorder %s172, %s175
    %p181 = scmp.eq.s32.totalorder %s20, 0
    %p182 = por %p180, %p181
    %p183 = scmp.ne.s32.totalorder %s172, %s175
    %p184 = scmp.eq.s32.totalorder %s25, 3
    %p185 = por %p183, %p184
    %p186 = scmp.ne.s32.totalorder %s175, %s176
    %p187 = scmp.eq.s32.totalorder %s25, 0
    %p188 = por %p186, %p187
    %p189 = scmp.ne.s32.totalorder %s175, %s176
    %p190 = scmp.eq.s32.totalorder %s26, 3
    %p191 = por %p189, %p190
    %p193 = scmp.ne.s32.totalorder %s176, %s192
    %p194 = scmp.eq.s32.totalorder %s26, 0
    %p195 = por %p193, %p194
    %s196 = ssub.s32 %s28, %s35
    %p197 = scmp.eq.s32.totalorder %s196, 0
    %s199 = sadd.s32 %s198, 1
    %s200 = scalar_select %p197, %s198, %s199
    %p203 = pneg %p197
    %p204 = scmp.eq.s32.totalorder %s20, 3
    %p205 = por %p203, %p204
    %p206 = scmp.ne.s32.totalorder %s198, %s201
    %p207 = scmp.eq.s32.totalorder %s20, 0
    %p208 = por %p206, %p207
    %p209 = scmp.ne.s32.totalorder %s198, %s201
    %p210 = scmp.eq.s32.totalorder %s25, 3
    %p211 = por %p209, %p210
    %p212 = scmp.ne.s32.totalorder %s201, %s202
    %p213 = scmp.eq.s32.totalorder %s25, 0
    %p214 = por %p212, %p213
    %p215 = scmp.ne.s32.totalorder %s201, %s202
    %p216 = scmp.eq.s32.totalorder %s26, 3
    %p217 = por %p215, %p216
    %p219 = scmp.ne.s32.totalorder %s202, %s218
    %p220 = scmp.eq.s32.totalorder %s26, 0
    %p221 = por %p219, %p220
    %s222 = ssub.s32 %s28, %s35
    %p223 = scmp.eq.s32.totalorder %s222, 0
    %s225 = sadd.s32 %s224, 1
    %s226 = scalar_select %p223, %s224, %s225
    %p229 = pneg %p223
    %p230 = scmp.eq.s32.totalorder %s20, 3
    %p231 = por %p229, %p230
    %p232 = scmp.ne.s32.totalorder %s224, %s227
    %p233 = scmp.eq.s32.totalorder %s20, 0
    %p234 = por %p232, %p233
    %p235 = scmp.ne.s32.totalorder %s224, %s227
    %p236 = scmp.eq.s32.totalorder %s25, 3
    %p237 = por %p235, %p236
    %p238 = scmp.ne.s32.totalorder %s227, %s228
    %p239 = scmp.eq.s32.totalorder %s25, 0
    %p240 = por %p238, %p239
    %p241 = scmp.ne.s32.totalorder %s227, %s228
    %p242 = scmp.eq.s32.totalorder %s26, 3
    %p243 = por %p241, %p242
    %p245 = scmp.ne.s32.totalorder %s228, %s244
    %p246 = scmp.eq.s32.totalorder %s26, 0
    %p247 = por %p245, %p246
    %s248 = ssub.s32 %s28, %s35
    %p249 = scmp.eq.s32.totalorder %s248, 0
    %s251 = sadd.s32 %s250, 1
    %s252 = scalar_select %p249, %s250, %s251
    %p255 = pneg %p249
    %p256 = scmp.eq.s32.totalorder %s20, 3
    %p257 = por %p255, %p256
    %p258 = scmp.ne.s32.totalorder %s250, %s253
    %p259 = scmp.eq.s32.totalorder %s20, 0
    %p260 = por %p258, %p259
    %p261 = scmp.ne.s32.totalorder %s250, %s253
    %p262 = scmp.eq.s32.totalorder %s25, 3
    %p263 = por %p261, %p262
    %p264 = scmp.ne.s32.totalorder %s253, %s254
    %p265 = scmp.eq.s32.totalorder %s25, 0
    %p266 = por %p264, %p265
    %p267 = scmp.ne.s32.totalorder %s253, %s254
    %p268 = scmp.eq.s32.totalorder %s26, 3
    %p269 = por %p267, %p268
    %p271 = scmp.ne.s32.totalorder %s254, %s270
    %p272 = scmp.eq.s32.totalorder %s26, 0
    %p273 = por %p271, %p272
    %s274 = ssub.s32 %s28, %s35
    %p275 = scmp.eq.s32.totalorder %s274, 0
    %s277 = sadd.s32 %s276, 1
    %s278 = scalar_select %p275, %s276, %s277
    %p281 = pneg %p275
    %p282 = scmp.eq.s32.totalorder %s20, 3
    %p283 = por %p281, %p282
    %p284 = scmp.ne.s32.totalorder %s276, %s279
    %p285 = scmp.eq.s32.totalorder %s20, 0
    %p286 = por %p284, %p285
    %p287 = scmp.ne.s32.totalorder %s276, %s279
    %p288 = scmp.eq.s32.totalorder %s25, 3
    %p289 = por %p287, %p288
    %p290 = scmp.ne.s32.totalorder %s279, %s280
    %p291 = scmp.eq.s32.totalorder %s25, 0
    %p292 = por %p290, %p291
    %p293 = scmp.ne.s32.totalorder %s279, %s280
    %p294 = scmp.eq.s32.totalorder %s26, 3
    %p295 = por %p293, %p294
    %p297 = scmp.ne.s32.totalorder %s280, %s296
    %p298 = scmp.eq.s32.totalorder %s26, 0
    %p299 = por %p297, %p298
    %s300 = ssub.s32 %s28, %s35
    %p301 = scmp.eq.s32.totalorder %s300, 0
    %s303 = sadd.s32 %s302, 1
    %s304 = scalar_select %p301, %s302, %s303
    %p307 = pneg %p301
    %p308 = scmp.eq.s32.totalorder %s20, 3
    %p309 = por %p307, %p308
    %p310 = scmp.ne.s32.totalorder %s302, %s305
    %p311 = scmp.eq.s32.totalorder %s20, 0
    %p312 = por %p310, %p311
    %p313 = scmp.ne.s32.totalorder %s302, %s305
    %p314 = scmp.eq.s32.totalorder %s25, 3
    %p315 = por %p313, %p314
    %p316 = scmp.ne.s32.totalorder %s305, %s306
    %p317 = scmp.eq.s32.totalorder %s25, 0
    %p318 = por %p316, %p317
    %p319 = scmp.ne.s32.totalorder %s305, %s306
    %p320 = scmp.eq.s32.totalorder %s26, 3
    %p321 = por %p319, %p320
    %p323 = scmp.ne.s32.totalorder %s306, %s322
    %p324 = scmp.eq.s32.totalorder %s26, 0
    %p325 = por %p323, %p324
    %s326 = ssub.s32 %s28, %s35
    %p327 = scmp.eq.s32.totalorder %s326, 0
    %s329 = sadd.s32 %s328, 1
    %s330 = scalar_select %p327, %s328, %s329
    %p333 = pneg %p327
    %p334 = scmp.eq.s32.totalorder %s20, 3
    %p335 = por %p333, %p334
    %p336 = scmp.ne.s32.totalorder %s328, %s331
    %p337 = scmp.eq.s32.totalorder %s20, 0
    %p338 = por %p336, %p337
    %p339 = scmp.ne.s32.totalorder %s328, %s331
    %p340 = scmp.eq.s32.totalorder %s25, 3
    %p341 = por %p339, %p340
    %p342 = scmp.ne.s32.totalorder %s331, %s332
    %p343 = scmp.eq.s32.totalorder %s25, 0
    %p344 = por %p342, %p343
    %p345 = scmp.ne.s32.totalorder %s331, %s332
    %p346 = scmp.eq.s32.totalorder %s26, 3
    %p347 = por %p345, %p346
    %p349 = scmp.ne.s32.totalorder %s332, %s348
    %p350 = scmp.eq.s32.totalorder %s26, 0
    %p351 = por %p349, %p350
    %s352 = ssub.s32 %s28, %s35
    %p353 = scmp.eq.s32.totalorder %s352, 0
    %s355 = sadd.s32 %s354, 1
    %s356 = scalar_select %p353, %s354, %s355
    %p359 = pneg %p353
    %p360 = scmp.eq.s32.totalorder %s20, 3
    %p361 = por %p359, %p360
    %p362 = scmp.ne.s32.totalorder %s354, %s357
    %p363 = scmp.eq.s32.totalorder %s20, 0
    %p364 = por %p362, %p363
    %p365 = scmp.ne.s32.totalorder %s354, %s357
    %p366 = scmp.eq.s32.totalorder %s25, 3
    %p367 = por %p365, %p366
    %p368 = scmp.ne.s32.totalorder %s357, %s358
    %p369 = scmp.eq.s32.totalorder %s25, 0
    %p370 = por %p368, %p369
    %p371 = scmp.ne.s32.totalorder %s357, %s358
    %p372 = scmp.eq.s32.totalorder %s26, 3
    %p373 = por %p371, %p372
    %p375 = scmp.ne.s32.totalorder %s358, %s374
    %p376 = scmp.eq.s32.totalorder %s26, 0
    %p377 = por %p375, %p376
    %s378 = ssub.s32 %s28, %s35
    %p379 = scmp.eq.s32.totalorder %s378, 0
    %s381 = sadd.s32 %s380, 1
    %s382 = scalar_select %p379, %s380, %s381
    %p385 = pneg %p379
    %p386 = scmp.eq.s32.totalorder %s20, 3
    %p387 = por %p385, %p386
    %p388 = scmp.ne.s32.totalorder %s380, %s383
    %p389 = scmp.eq.s32.totalorder %s20, 0
    %p390 = por %p388, %p389
    %p391 = scmp.ne.s32.totalorder %s380, %s383
    %p392 = scmp.eq.s32.totalorder %s25, 3
    %p393 = por %p391, %p392
    %p394 = scmp.ne.s32.totalorder %s383, %s384
    %p395 = scmp.eq.s32.totalorder %s25, 0
    %p396 = por %p394, %p395
    %p397 = scmp.ne.s32.totalorder %s383, %s384
    %p398 = scmp.eq.s32.totalorder %s26, 3
    %p399 = por %p397, %p398
    %p401 = scmp.ne.s32.totalorder %s384, %s400
    %p402 = scmp.eq.s32.totalorder %s26, 0
    %p403 = por %p401, %p402
    %s404 = ssub.s32 %s27, %s39
    %p405 = scmp.eq.s32.totalorder %s404, 0
    %s407 = sadd.s32 %s406, 1
    %s408 = scalar_select %p405, %s406, %s407
    %p411 = pneg %p405
    %p412 = scmp.eq.s32.totalorder %s20, 3
    %p413 = por %p411, %p412
    %p414 = scmp.ne.s32.totalorder %s406, %s409
    %p415 = scmp.eq.s32.totalorder %s20, 0
    %p416 = por %p414, %p415
    %p417 = scmp.ne.s32.totalorder %s406, %s409
    %p418 = scmp.eq.s32.totalorder %s25, 3
    %p419 = por %p417, %p418
    %p420 = scmp.ne.s32.totalorder %s409, %s410
    %p421 = scmp.eq.s32.totalorder %s25, 0
    %p422 = por %p420, %p421
    %p423 = scmp.ne.s32.totalorder %s409, %s410
    %p424 = scmp.eq.s32.totalorder %s26, 3
    %p425 = por %p423, %p424
    %p427 = scmp.ne.s32.totalorder %s410, %s426
    %p428 = scmp.eq.s32.totalorder %s26, 0
    %p429 = por %p427, %p428
    %p430 = scmp.le.s32.totalorder 1, %s20
    %p431 = scmp.lt.s32.totalorder %s20, 5
    %p432 = pnand %p430, %p431
    %p433 = pneg %p432
    // Predicated region
    $region9: #{smiles_transformer_forward.2} parent=5 // pred_check
      _
    $region10: #{smiles_transformer_forward.2} parent=5 // pred_check_branch
      %435 = sbr.rel (%p432) target = $region12
    $region11: #{smiles_transformer_forward.2} parent=5 // pred_region
      %s436 = ssub.s32 %s20, 1
    $region12: #{smiles_transformer_forward.2} parent=5 // pred_fallthru
      _
    %p437 = scmp.lt.s32.totalorder %s20, 4
    // Predicated region
    $region13: #{smiles_transformer_forward.2} parent=5 // pred_check
      %p438 = pneg %p437
    $region14: #{smiles_transformer_forward.2} parent=5 // pred_check_branch
      %440 = sbr.rel (%p438) target = $region16
    $region15: #{smiles_transformer_forward.2} parent=5 // pred_region
      // Predicated region
      $region17: #{smiles_transformer_forward.2} parent=15 // pred_check
        %p441 = pneg %p52
      $region18: #{smiles_transformer_forward.2} parent=15 // pred_check_branch
        %443 = sbr.rel (%p441) target = $region20
      $region19: #{smiles_transformer_forward.2} parent=15 // pred_region
        %p444 = scmp.lt.s32.totalorder %s27, 1
        %s445 = scalar_select %p444, %s27, 1
        %s446 = smul.addr %s445, 8
        %s447 = scalar_lea.vmem %s0, %s446
      $region20: #{smiles_transformer_forward.2} parent=15 // pred_fallthru
        _
      // Predicated region
      $region21: #{smiles_transformer_forward.2} parent=15 // pred_check
        %p448 = pneg %p78
      $region22: #{smiles_transformer_forward.2} parent=15 // pred_check_branch
        %450 = sbr.rel (%p448) target = $region24
      $region23: #{smiles_transformer_forward.2} parent=15 // pred_region
        %p451 = scmp.lt.s32.totalorder %s27, 1
        %s452 = scalar_select %p451, %s27, 1
        %s453 = smul.addr %s452, 2
        %s454 = smul.addr %s453, 8
        %s455 = scalar_lea.vmem %s1, %s454
      $region24: #{smiles_transformer_forward.2} parent=15 // pred_fallthru
        _
      // Predicated region
      $region25: #{smiles_transformer_forward.2} parent=15 // pred_check
        %p456 = pneg %p104
      $region26: #{smiles_transformer_forward.2} parent=15 // pred_check_branch
        %458 = sbr.rel (%p456) target = $region28
      $region27: #{smiles_transformer_forward.2} parent=15 // pred_region
        %p459 = scmp.lt.s32.totalorder %s28, 1
        %s460 = scalar_select %p459, %s28, 1
        %s461 = smul.addr %s460, 4
        %s462 = smul.addr %s461, 4
        %s463 = scalar_lea.vmem %s2, %s462
      $region28: #{smiles_transformer_forward.2} parent=15 // pred_fallthru
        _
      // Predicated region
      $region29: #{smiles_transformer_forward.2} parent=15 // pred_check
        %p464 = pneg %p130
      $region30: #{smiles_transformer_forward.2} parent=15 // pred_check_branch
        %466 = sbr.rel (%p464) target = $region32
      $region31: #{smiles_transformer_forward.2} parent=15 // pred_region
        %p467 = scmp.lt.s32.totalorder %s28, 1
        %s468 = scalar_select %p467, %s28, 1
        %s469 = scalar_lea.vmem %s3, %s468
      $region32: #{smiles_transformer_forward.2} parent=15 // pred_fallthru
        _
      // Predicated region
      $region33: #{smiles_transformer_forward.2} parent=15 // pred_check
        %p470 = pneg %p156
      $region34: #{smiles_transformer_forward.2} parent=15 // pred_check_branch
        %472 = sbr.rel (%p470) target = $region36
      $region35: #{smiles_transformer_forward.2} parent=15 // pred_region
        %p473 = scmp.lt.s32.totalorder %s28, 1
        %s474 = scalar_select %p473, %s28, 1
        %s475 = smul.addr %s474, 4
        %s476 = smul.addr %s475, 4
        %s477 = scalar_lea.vmem %s4, %s476
      $region36: #{smiles_transformer_forward.2} parent=15 // pred_fallthru
        _
      // Predicated region
      $region37: #{smiles_transformer_forward.2} parent=15 // pred_check
        %p478 = pneg %p182
      $region38: #{smiles_transformer_forward.2} parent=15 // pred_check_branch
        %480 = sbr.rel (%p478) target = $region40
      $region39: #{smiles_transformer_forward.2} parent=15 // pred_region
        %p481 = scmp.lt.s32.totalorder %s28, 1
        %s482 = scalar_select %p481, %s28, 1
        %s483 = scalar_lea.vmem %s5, %s482
      $region40: #{smiles_transformer_forward.2} parent=15 // pred_fallthru
        _
      // Predicated region
      $region41: #{smiles_transformer_forward.2} parent=15 // pred_check
        %p484 = pneg %p208
      $region42: #{smiles_transformer_forward.2} parent=15 // pred_check_branch
        %486 = sbr.rel (%p484) target = $region44
      $region43: #{smiles_transformer_forward.2} parent=15 // pred_region
        %p487 = scmp.lt.s32.totalorder %s28, 1
        %s488 = scalar_select %p487, %s28, 1
        %s489 = smul.addr %s488, 4
        %s490 = smul.addr %s489, 4
        %s491 = scalar_lea.vmem %s6, %s490
      $region44: #{smiles_transformer_forward.2} parent=15 // pred_fallthru
        _
      // Predicated region
      $region45: #{smiles_transformer_forward.2} parent=15 // pred_check
        %p492 = pneg %p234
      $region46: #{smiles_transformer_forward.2} parent=15 // pred_check_branch
        %494 = sbr.rel (%p492) target = $region48
      $region47: #{smiles_transformer_forward.2} parent=15 // pred_region
        %p495 = scmp.lt.s32.totalorder %s28, 1
        %s496 = scalar_select %p495, %s28, 1
        %s497 = scalar_lea.vmem %s7, %s496
      $region48: #{smiles_transformer_forward.2} parent=15 // pred_fallthru
        _
      // Predicated region
      $region49: #{smiles_transformer_forward.2} parent=15 // pred_check
        %p498 = pneg %p260
      $region50: #{smiles_transformer_forward.2} parent=15 // pred_check_branch
        %500 = sbr.rel (%p498) target = $region52
      $region51: #{smiles_transformer_forward.2} parent=15 // pred_region
        %p501 = scmp.lt.s32.totalorder %s28, 1
        %s502 = scalar_select %p501, %s28, 1
        %s503 = smul.addr %s502, 16
        %s504 = smul.addr %s503, 4
        %s505 = scalar_lea.vmem %s8, %s504
      $region52: #{smiles_transformer_forward.2} parent=15 // pred_fallthru
        _
      // Predicated region
      $region53: #{smiles_transformer_forward.2} parent=15 // pred_check
        %p506 = pneg %p286
      $region54: #{smiles_transformer_forward.2} parent=15 // pred_check_branch
        %508 = sbr.rel (%p506) target = $region56
      $region55: #{smiles_transformer_forward.2} parent=15 // pred_region
        %p509 = scmp.lt.s32.totalorder %s28, 1
        %s510 = scalar_select %p509, %s28, 1
        %s511 = scalar_lea.vmem %s9, %s510
      $region56: #{smiles_transformer_forward.2} parent=15 // pred_fallthru
        _
      // Predicated region
      $region57: #{smiles_transformer_forward.2} parent=15 // pred_check
        %p512 = pneg %p312
      $region58: #{smiles_transformer_forward.2} parent=15 // pred_check_branch
        %514 = sbr.rel (%p512) target = $region60
      $region59: #{smiles_transformer_forward.2} parent=15 // pred_region
        %p515 = scmp.lt.s32.totalorder %s28, 1
        %s516 = scalar_select %p515, %s28, 1
        %s517 = scalar_lea.vmem %s10, %s516
      $region60: #{smiles_transformer_forward.2} parent=15 // pred_fallthru
        _
      // Predicated region
      $region61: #{smiles_transformer_forward.2} parent=15 // pred_check
        %p518 = pneg %p338
      $region62: #{smiles_transformer_forward.2} parent=15 // pred_check_branch
        %520 = sbr.rel (%p518) target = $region64
      $region63: #{smiles_transformer_forward.2} parent=15 // pred_region
        %p521 = scmp.lt.s32.totalorder %s28, 1
        %s522 = scalar_select %p521, %s28, 1
        %s523 = scalar_lea.vmem %s11, %s522
      $region64: #{smiles_transformer_forward.2} parent=15 // pred_fallthru
        _
      // Predicated region
      $region65: #{smiles_transformer_forward.2} parent=15 // pred_check
        %p524 = pneg %p364
      $region66: #{smiles_transformer_forward.2} parent=15 // pred_check_branch
        %526 = sbr.rel (%p524) target = $region68
      $region67: #{smiles_transformer_forward.2} parent=15 // pred_region
        %p527 = scmp.lt.s32.totalorder %s28, 1
        %s528 = scalar_select %p527, %s28, 1
        %s529 = scalar_lea.vmem %s12, %s528
      $region68: #{smiles_transformer_forward.2} parent=15 // pred_fallthru
        _
      // Predicated region
      $region69: #{smiles_transformer_forward.2} parent=15 // pred_check
        %p530 = pneg %p390
      $region70: #{smiles_transformer_forward.2} parent=15 // pred_check_branch
        %532 = sbr.rel (%p530) target = $region72
      $region71: #{smiles_transformer_forward.2} parent=15 // pred_region
        %p533 = scmp.lt.s32.totalorder %s28, 1
        %s534 = scalar_select %p533, %s28, 1
        %s535 = scalar_lea.vmem %s13, %s534
      $region72: #{smiles_transformer_forward.2} parent=15 // pred_fallthru
        _
    $region16: #{smiles_transformer_forward.2} parent=5 // pred_fallthru
      _
    %p536 = scmp.le.s32.totalorder 1, %s20
    %p537 = scmp.lt.s32.totalorder %s20, 5
    %p538 = pnand %p536, %p537
    %p539 = pneg %p538
    // Predicated region
    $region73: #{smiles_transformer_forward.2} parent=5 // pred_check
      _
    $region74: #{smiles_transformer_forward.2} parent=5 // pred_check_branch
      %541 = sbr.rel (%p538) target = $region76
    $region75: #{smiles_transformer_forward.2} parent=5 // pred_region
      %s542 = ssub.s32 %s20, 1
      %p543 = scmp.lt.s32.totalorder %s29, 1
      %s544 = scalar_select %p543, %s29, 1
      %s545 = smul.addr %s544, 8
      %s546 = scalar_lea.vmem %s0, %s545
      %p547 = pneg %p58
      %p548 = pneg %p55
      %p549 = scmp.lt.s32.totalorder %s29, 1
      %s550 = scalar_select %p549, %s29, 1
      %s551 = smul.addr %s550, 2
      %s552 = smul.addr %s551, 8
      %s553 = scalar_lea.vmem %s1, %s552
      %p554 = pneg %p84
      %p555 = pneg %p81
      %p556 = scmp.lt.s32.totalorder %s30, 1
      %s557 = scalar_select %p556, %s30, 1
      %s558 = smul.addr %s557, 4
      %s559 = smul.addr %s558, 4
      %s560 = scalar_lea.vmem %s2, %s559
      %p561 = pneg %p110
      %p562 = pneg %p107
      %p563 = scmp.lt.s32.totalorder %s30, 1
      %s564 = scalar_select %p563, %s30, 1
      %s565 = scalar_lea.vmem %s3, %s564
      %p566 = pneg %p136
      %p567 = pneg %p133
      %p568 = scmp.lt.s32.totalorder %s30, 1
      %s569 = scalar_select %p568, %s30, 1
      %s570 = smul.addr %s569, 4
      %s571 = smul.addr %s570, 4
      %s572 = scalar_lea.vmem %s4, %s571
      %p573 = pneg %p162
      %p574 = pneg %p159
      %p575 = scmp.lt.s32.totalorder %s30, 1
      %s576 = scalar_select %p575, %s30, 1
      %s577 = scalar_lea.vmem %s5, %s576
      %p578 = pneg %p188
      %p579 = pneg %p185
      %p580 = scmp.lt.s32.totalorder %s30, 1
      %s581 = scalar_select %p580, %s30, 1
      %s582 = smul.addr %s581, 4
      %s583 = smul.addr %s582, 4
      %s584 = scalar_lea.vmem %s6, %s583
      %p585 = pneg %p214
      %p586 = pneg %p211
      %p587 = scmp.lt.s32.totalorder %s30, 1
      %s588 = scalar_select %p587, %s30, 1
      %s589 = scalar_lea.vmem %s7, %s588
      %p590 = pneg %p240
      %p591 = pneg %p237
      %p592 = scmp.lt.s32.totalorder %s30, 1
      %s593 = scalar_select %p592, %s30, 1
      %s594 = smul.addr %s593, 16
      %s595 = smul.addr %s594, 4
      %s596 = scalar_lea.vmem %s8, %s595
      %p597 = pneg %p266
      %p598 = pneg %p263
      %p599 = scmp.lt.s32.totalorder %s30, 1
      %s600 = scalar_select %p599, %s30, 1
      %s601 = scalar_lea.vmem %s9, %s600
      %p602 = pneg %p292
      %p603 = pneg %p289
      %p604 = scmp.lt.s32.totalorder %s30, 1
      %s605 = scalar_select %p604, %s30, 1
      %s606 = scalar_lea.vmem %s10, %s605
      %p607 = pneg %p318
      %p608 = pneg %p315
      %p609 = scmp.lt.s32.totalorder %s30, 1
      %s610 = scalar_select %p609, %s30, 1
      %s611 = scalar_lea.vmem %s11, %s610
      %p612 = pneg %p344
      %p613 = pneg %p341
      %p614 = scmp.lt.s32.totalorder %s30, 1
      %s615 = scalar_select %p614, %s30, 1
      %s616 = scalar_lea.vmem %s12, %s615
      %p617 = pneg %p370
      %p618 = pneg %p367
      %p619 = scmp.lt.s32.totalorder %s30, 1
      %s620 = scalar_select %p619, %s30, 1
      %s621 = scalar_lea.vmem %s13, %s620
      %p622 = pneg %p396
      %p623 = pneg %p393
      %p624 = pneg %p422
      %p625 = pneg %p419
      %p626 = scmp.lt.s32.totalorder %s29, 1
      %s627 = scalar_select %p626, %s29, 1
      %s628 = smul.addr %s627, 8
      %s629 = scalar_lea.vmem %s14, %s628
      %p630 = scmp.lt.s32.totalorder %s29, 1
      %s631 = scalar_select %p630, %s29, 1
      %s632 = smul.addr %s631, 8
      %s633 = scalar_lea.vmem %s0, %s632
      %p634 = scmp.lt.s32.totalorder %s29, 1
      %s635 = scalar_select %p634, %s29, 1
      %s636 = smul.addr %s635, 2
      %s637 = smul.addr %s636, 8
      %s638 = scalar_lea.vmem %s1, %s637
      %p639 = scmp.lt.s32.totalorder %s30, 1
      %s640 = scalar_select %p639, %s30, 1
      %s641 = smul.addr %s640, 4
      %s642 = smul.addr %s641, 4
      %s643 = scalar_lea.vmem %s2, %s642
      %p644 = scmp.lt.s32.totalorder %s30, 1
      %s645 = scalar_select %p644, %s30, 1
      %s646 = scalar_lea.vmem %s3, %s645
      %p647 = scmp.lt.s32.totalorder %s30, 1
      %s648 = scalar_select %p647, %s30, 1
      %s649 = smul.addr %s648, 4
      %s650 = smul.addr %s649, 4
      %s651 = scalar_lea.vmem %s4, %s650
      %p652 = scmp.lt.s32.totalorder %s30, 1
      %s653 = scalar_select %p652, %s30, 1
      %s654 = scalar_lea.vmem %s5, %s653
      %p655 = scmp.lt.s32.totalorder %s30, 1
      %s656 = scalar_select %p655, %s30, 1
      %s657 = smul.addr %s656, 4
      %s658 = smul.addr %s657, 4
      %s659 = scalar_lea.vmem %s6, %s658
      %p660 = scmp.lt.s32.totalorder %s30, 1
      %s661 = scalar_select %p660, %s30, 1
      %s662 = scalar_lea.vmem %s7, %s661
      %p663 = scmp.lt.s32.totalorder %s30, 1
      %s664 = scalar_select %p663, %s30, 1
      %s665 = smul.addr %s664, 16
      %s666 = smul.addr %s665, 4
      %s667 = scalar_lea.vmem %s8, %s666
      %p668 = scmp.lt.s32.totalorder %s30, 1
      %s669 = scalar_select %p668, %s30, 1
      %s670 = scalar_lea.vmem %s9, %s669
      %p671 = scmp.lt.s32.totalorder %s30, 1
      %s672 = scalar_select %p671, %s30, 1
      %s673 = scalar_lea.vmem %s10, %s672
      %p674 = scmp.lt.s32.totalorder %s30, 1
      %s675 = scalar_select %p674, %s30, 1
      %s676 = scalar_lea.vmem %s11, %s675
      %p677 = scmp.lt.s32.totalorder %s30, 1
      %s678 = scalar_select %p677, %s30, 1
      %s679 = scalar_lea.vmem %s12, %s678
      %p680 = scmp.lt.s32.totalorder %s30, 1
      %s681 = scalar_select %p680, %s30, 1
      %s682 = scalar_lea.vmem %s13, %s681
      %p683 = scmp.lt.s32.totalorder %s29, 1
      %s684 = scalar_select %p683, %s29, 1
      %s685 = smul.addr %s684, 8
      %s686 = scalar_lea.vmem %s14, %s685
      %p688 = scmp.eq.s32.totalorder %s30, 0
      // Predicated region
      $region77: #{smiles_transformer_forward.2} parent=75 // pred_check
        %p689 = pneg %p688
      $region78: #{smiles_transformer_forward.2} parent=75 // pred_check_branch
        %691 = sbr.rel (%p689) target = $region80
      $region79: #{smiles_transformer_forward.2} parent=75 // pred_region
        %v692 = vld [vmem:[%s633] sm:$0xff]
        %vm693 = vcmask 261120
        %694 = vst.msk [vmem:[%s686] sm:$0xff] %vm693, %v692
      $region80: #{smiles_transformer_forward.2} parent=75 // pred_fallthru
        _
      %v695 = vld [vmem:[%s686] sm:$0xff]
      %v696 = vld [vmem:[%s643] sm:$0xf]
      %v697 = vld [vmem:[%s643 + $0x4] sm:$0xf]
      %v698 = vld [vmem:[%s643 + $0x8] sm:$0xf]
      %v699 = vld [vmem:[%s643 + $0xc] sm:$0xf]
      %v700 = vld [vmem:[%s646] sm:$0x1]
      %v701 = vld [vmem:[%s651] sm:$0xf]
      %v702 = vld [vmem:[%s651 + $0x4] sm:$0xf]
      %v703 = vld [vmem:[%s651 + $0x8] sm:$0xf]
      %v704 = vld [vmem:[%s651 + $0xc] sm:$0xf]
      %v705 = vld [vmem:[%s654] sm:$0x1]
      %v706 = vld [vmem:[%s659] sm:$0xf]
      %v707 = vld [vmem:[%s659 + $0x4] sm:$0xf]
      %v708 = vld [vmem:[%s659 + $0x8] sm:$0xf]
      %v709 = vld [vmem:[%s659 + $0xc] sm:$0xf]
      %v710 = vld [vmem:[%s662] sm:$0x1]
      %v711 = vld [vmem:[%s667] sm:$0xf]
      %v712 = vld [vmem:[%s667 + $0x4] sm:$0xf]
      %v713 = vld [vmem:[%s667 + $0x8] sm:$0xf]
      %v714 = vld [vmem:[%s667 + $0xc] sm:$0xf]
      %v715 = vld [vmem:[%s667 + $0x10] sm:$0xf]
      %v716 = vld [vmem:[%s667 + $0x14] sm:$0xf]
      %v717 = vld [vmem:[%s667 + $0x18] sm:$0xf]
      %v718 = vld [vmem:[%s667 + $0x1c] sm:$0xf]
      %v719 = vld [vmem:[%s667 + $0x20] sm:$0xf]
      %v720 = vld [vmem:[%s667 + $0x24] sm:$0xf]
      %v721 = vld [vmem:[%s667 + $0x28] sm:$0xf]
      %v722 = vld [vmem:[%s667 + $0x2c] sm:$0xf]
      %v723 = vld [vmem:[%s667 + $0x30] sm:$0xf]
      %v724 = vld [vmem:[%s667 + $0x34] sm:$0xf]
      %v725 = vld [vmem:[%s667 + $0x38] sm:$0xf]
      %v726 = vld [vmem:[%s667 + $0x3c] sm:$0xf]
      %v727 = vld [vmem:[%s670] sm:$0x1]
      %v728 = vld [vmem:[%s673] sm:$0x1]
      %v729 = vld [vmem:[%s676] sm:$0x1]
      %v730 = vld [vmem:[%s679] sm:$0x1]
      %v731 = vld [vmem:[%s682] sm:$0x1]
      %v732 = vpack.c.bf16 %v695, %v695
      %v734 = vlaneseq
      %v735 = vshrl.u32 %v734, 7
      %v736 = vsub.s32 0, %v735
      %v737 = vrot.slane %v700, %v736
      %v743 = vunpack.c.l.b16 %v696
      %v744 = vunpack.c.l.b16 %v697
      %v745 = vunpack.c.l.b16 %v698
      %v746 = vunpack.c.l.b16 %v699
      %v747 = vpack.c.b16 %v744, %v743
      %v748 = vpack.c.b16 %v746, %v745
      %vm751 = vcmask 261120
      %v753 = vsel %vm751, %v732, 0
      %755 = vmatprep.subr.bf16.mxu0 0
      %756 = vmatpush1.bf16.msra.mxu0 %v747
      %757 = vmatprep.subr.bf16.mxu0 0
      %758 = vmatpush1.bf16.msra.mxu0 %v748
      %759 = vmatprep.subr.bf16.mxu0 0
      %760 = vmatpush1.bf16.msra.mxu0 0
      %761 = vmatprep.subr.bf16.mxu0 0
      %762 = vmatpush1.bf16.msra.mxu0 0
      %763 = vmatprep.subr.bf16.mxu0 0
      %764 = vmatpush1.bf16.msra.mxu0 0
      %765 = vmatprep.subr.bf16.mxu0 0
      %766 = vmatpush1.bf16.msra.mxu0 0
      %767 = vmatprep.subr.bf16.mxu0 0
      %768 = vmatpush1.bf16.msra.mxu0 0
      %769 = vmatprep.subr.bf16.mxu0 0
      %770 = vmatpush1.bf16.msra.mxu0 0
      %771 = vmatprep.subr.bf16.mxu0 0
      %772 = vmatpush1.bf16.msra.mxu0 0
      %773 = vmatprep.subr.bf16.mxu0 0
      %774 = vmatpush1.bf16.msra.mxu0 0
      %775 = vmatprep.subr.bf16.mxu0 0
      %776 = vmatpush1.bf16.msra.mxu0 0
      %777 = vmatprep.subr.bf16.mxu0 0
      %778 = vmatpush1.bf16.msra.mxu0 0
      %779 = vmatprep.subr.bf16.mxu0 0
      %780 = vmatpush1.bf16.msra.mxu0 0
      %781 = vmatprep.subr.bf16.mxu0 0
      %782 = vmatpush1.bf16.msra.mxu0 0
      %783 = vmatprep.subr.bf16.mxu0 0
      %784 = vmatpush1.bf16.msra.mxu0 0
      %785 = vmatprep.subr.bf16.mxu0 0
      %786 = vmatpush1.bf16.msra.mxu0 0
      %787 = vmatprep.mubr.bf16.mxu0 0
      %788 = vmatmul.mubr.bf16.gmra.mrb[0].mxu0 %v753
      %v789 = vpop.f32.mrb[0].mxu0
      %v790 = vadd.f32 %v737, %v789
      %v791 = vpop.f32.mrb[0].mxu0
      %v792 = vpop.f32.mrb[0].mxu0
      %v793 = vpop.f32.mrb[0].mxu0
      %794 = vdwg.mxu0
      %v795 = vpack.c.bf16 %v790, %v790
      %797 = vrot.lane.b32.xlu0 %v795, 96
      %v798 = vpop.permute.xlu0 %797
      %vm799 = vcmask 130048
      %v801 = vsel %vm799, %v795, 0
      %v804 = vsel %vm799, %v798, 0
      %806 = vmatprep.subr.bf16.mxu0 0
      %807 = vmatpush1.bf16.xpose.msra.mxu0 %v804
      %808 = vmatprep.subr.bf16.mxu0 0
      %809 = vmatpush1.bf16.xpose.msra.mxu0 0
      %810 = vmatprep.subr.bf16.mxu0 0
      %811 = vmatpush1.bf16.xpose.msra.mxu0 0
      %812 = vmatprep.subr.bf16.mxu0 0
      %813 = vmatpush1.bf16.xpose.msra.mxu0 0
      %814 = vmatprep.subr.bf16.mxu0 0
      %815 = vmatpush1.bf16.xpose.msra.mxu0 0
      %816 = vmatprep.subr.bf16.mxu0 0
      %817 = vmatpush1.bf16.xpose.msra.mxu0 0
      %818 = vmatprep.subr.bf16.mxu0 0
      %819 = vmatpush1.bf16.xpose.msra.mxu0 0
      %820 = vmatprep.subr.bf16.mxu0 0
      %821 = vmatpush1.bf16.xpose.msra.mxu0 0
      %822 = vmatprep.subr.bf16.mxu0 0
      %823 = vmatpush1.bf16.xpose.msra.mxu0 0
      %824 = vmatprep.subr.bf16.mxu0 0
      %825 = vmatpush1.bf16.xpose.msra.mxu0 0
      %826 = vmatprep.subr.bf16.mxu0 0
      %827 = vmatpush1.bf16.xpose.msra.mxu0 0
      %828 = vmatprep.subr.bf16.mxu0 0
      %829 = vmatpush1.bf16.xpose.msra.mxu0 0
      %830 = vmatprep.subr.bf16.mxu0 0
      %831 = vmatpush1.bf16.xpose.msra.mxu0 0
      %832 = vmatprep.subr.bf16.mxu0 0
      %833 = vmatpush1.bf16.xpose.msra.mxu0 0
      %834 = vmatprep.subr.bf16.mxu0 0
      %835 = vmatpush1.bf16.xpose.msra.mxu0 0
      %836 = vmatprep.subr.bf16.mxu0 0
      %837 = vmatpush1.bf16.xpose.msra.mxu0 0
      %838 = vmatprep.mubr.bf16.mxu0 0
      %839 = vmatmul.mubr.bf16.gmra.mrb[0].mxu0 %v801
      %v840 = vpop.f32.mrb[0].mxu0
      %v841 = vadd.f32 0.0, %v840
      %v842 = vpop.f32.mrb[0].mxu0
      %v843 = vpop.f32.mrb[0].mxu0
      %v844 = vpop.f32.mrb[0].mxu0
      %845 = vdwg.mxu0
      %v846 = vmul.f32 %v841, 0.25
      %v847 = vld [vmem:[%s638] sm:$0xff]
      %v848 = vadd.f32 %v846, %v847
      %vm849 = vcmask 64512
      %v850 = vsel %vm849, %v848, -inf
      %851 = vmax.xlane.f32.xlu0 %v850
      %v852 = vpop.xlane.xlu0 %851
      %v853 = vsub.f32 %v848, %v852
      %v854 = vmul.f32 %v853, 1.442695
      %v855 = vpow.pop %v854
      %v856 = vsel %vm849, %v855, 0.0
      %857 = vadd.xlane.f32.xlu0 %v856
      %v858 = vpop.xlane.xlu0 %857
      %v859 = vrcp.pop %v858
      %v860 = vmul.f32 %v855, %v859
      %v861 = vpack.c.bf16 %v860, %v860
      %862 = vrot.lane.b32.xlu0 %v795, 64
      %v863 = vpop.permute.xlu0 %862
      %v865 = vsel %vm849, %v861, 0
      %vm867 = vcmask 1043456
      %v869 = vsel %vm867, %v863, 0
      %871 = vmatprep.subr.bf16.mxu0 0
      %872 = vmatpush1.bf16.msra.mxu0 %v869
      %873 = vmatprep.subr.bf16.mxu0 0
      %874 = vmatpush1.bf16.msra.mxu0 0
      %875 = vmatprep.subr.bf16.mxu0 0
      %876 = vmatpush1.bf16.msra.mxu0 0
      %877 = vmatprep.subr.bf16.mxu0 0
      %878 = vmatpush1.bf16.msra.mxu0 0
      %879 = vmatprep.subr.bf16.mxu0 0
      %880 = vmatpush1.bf16.msra.mxu0 0
      %881 = vmatprep.subr.bf16.mxu0 0
      %882 = vmatpush1.bf16.msra.mxu0 0
      %883 = vmatprep.subr.bf16.mxu0 0
      %884 = vmatpush1.bf16.msra.mxu0 0
      %885 = vmatprep.subr.bf16.mxu0 0
      %886 = vmatpush1.bf16.msra.mxu0 0
      %887 = vmatprep.subr.bf16.mxu0 0
      %888 = vmatpush1.bf16.msra.mxu0 0
      %889 = vmatprep.subr.bf16.mxu0 0
      %890 = vmatpush1.bf16.msra.mxu0 0
      %891 = vmatprep.subr.bf16.mxu0 0
      %892 = vmatpush1.bf16.msra.mxu0 0
      %893 = vmatprep.subr.bf16.mxu0 0
      %894 = vmatpush1.bf16.msra.mxu0 0
      %895 = vmatprep.subr.bf16.mxu0 0
      %896 = vmatpush1.bf16.msra.mxu0 0
      %897 = vmatprep.subr.bf16.mxu0 0
      %898 = vmatpush1.bf16.msra.mxu0 0
      %899 = vmatprep.subr.bf16.mxu0 0
      %900 = vmatpush1.bf16.msra.mxu0 0
      %901 = vmatprep.subr.bf16.mxu0 0
      %902 = vmatpush1.bf16.msra.mxu0 0
      %903 = vmatprep.mubr.bf16.mxu0 0
      %904 = vmatmul.mubr.bf16.gmra.mrb[0].mxu0 %v865
      %v905 = vpop.f32.mrb[0].mxu0
      %v906 = vadd.f32 0.0, %v905
      %v907 = vpop.f32.mrb[0].mxu0
      %v908 = vpop.f32.mrb[0].mxu0
      %v909 = vpop.f32.mrb[0].mxu0
      %910 = vdwg.mxu0
      %v911 = vpack.c.bf16 %v906, %v906
      %912 = vrot.lane.b32.xlu0 %v795, 112
      %v913 = vpop.permute.xlu0 %912
      %914 = vrot.lane.b32.xlu0 %v795, 80
      %v915 = vpop.permute.xlu0 %914
      %v917 = vsel %vm799, %v913, 0
      %v920 = vsel %vm799, %v915, 0
      %922 = vmatprep.subr.bf16.mxu0 0
      %923 = vmatpush1.bf16.xpose.msra.mxu0 %v920
      %924 = vmatprep.subr.bf16.mxu0 0
      %925 = vmatpush1.bf16.xpose.msra.mxu0 0
      %926 = vmatprep.subr.bf16.mxu0 0
      %927 = vmatpush1.bf16.xpose.msra.mxu0 0
      %928 = vmatprep.subr.bf16.mxu0 0
      %929 = vmatpush1.bf16.xpose.msra.mxu0 0
      %930 = vmatprep.subr.bf16.mxu0 0
      %931 = vmatpush1.bf16.xpose.msra.mxu0 0
      %932 = vmatprep.subr.bf16.mxu0 0
      %933 = vmatpush1.bf16.xpose.msra.mxu0 0
      %934 = vmatprep.subr.bf16.mxu0 0
      %935 = vmatpush1.bf16.xpose.msra.mxu0 0
      %936 = vmatprep.subr.bf16.mxu0 0
      %937 = vmatpush1.bf16.xpose.msra.mxu0 0
      %938 = vmatprep.subr.bf16.mxu0 0
      %939 = vmatpush1.bf16.xpose.msra.mxu0 0
      %940 = vmatprep.subr.bf16.mxu0 0
      %941 = vmatpush1.bf16.xpose.msra.mxu0 0
      %942 = vmatprep.subr.bf16.mxu0 0
      %943 = vmatpush1.bf16.xpose.msra.mxu0 0
      %944 = vmatprep.subr.bf16.mxu0 0
      %945 = vmatpush1.bf16.xpose.msra.mxu0 0
      %946 = vmatprep.subr.bf16.mxu0 0
      %947 = vmatpush1.bf16.xpose.msra.mxu0 0
      %948 = vmatprep.subr.bf16.mxu0 0
      %949 = vmatpush1.bf16.xpose.msra.mxu0 0
      %950 = vmatprep.subr.bf16.mxu0 0
      %951 = vmatpush1.bf16.xpose.msra.mxu0 0
      %952 = vmatprep.subr.bf16.mxu0 0
      %953 = vmatpush1.bf16.xpose.msra.mxu0 0
      %954 = vmatprep.mubr.bf16.mxu0 0
      %955 = vmatmul.mubr.bf16.gmra.mrb[0].mxu0 %v917
      %v956 = vpop.f32.mrb[0].mxu0
      %v957 = vadd.f32 0.0, %v956
      %v958 = vpop.f32.mrb[0].mxu0
      %v959 = vpop.f32.mrb[0].mxu0
      %v960 = vpop.f32.mrb[0].mxu0
      %961 = vdwg.mxu0
      %v962 = vmul.f32 %v957, 0.25
      %s963 = scalar_lea.vmem %s638, 8
      %v964 = vld [vmem:[%s963] sm:$0xff]
      %v965 = vadd.f32 %v962, %v964
      %v966 = vsel %vm849, %v965, -inf
      %967 = vmax.xlane.f32.xlu0 %v966
      %v968 = vpop.xlane.xlu0 %967
      %v969 = vsub.f32 %v965, %v968
      %v970 = vmul.f32 %v969, 1.442695
      %v971 = vpow.pop %v970
      %v972 = vsel %vm849, %v971, 0.0
      %973 = vadd.xlane.f32.xlu0 %v972
      %v974 = vpop.xlane.xlu0 %973
      %v975 = vrcp.pop %v974
      %v976 = vmul.f32 %v971, %v975
      %v977 = vpack.c.bf16 %v976, %v976
      %978 = vrot.lane.b32.xlu0 %v795, 48
      %v979 = vpop.permute.xlu0 %978
      %v981 = vsel %vm849, %v977, 0
      %v984 = vsel %vm867, %v979, 0
      %986 = vmatprep.subr.bf16.mxu0 0
      %987 = vmatpush1.bf16.msra.mxu0 %v984
      %988 = vmatprep.subr.bf16.mxu0 0
      %989 = vmatpush1.bf16.msra.mxu0 0
      %990 = vmatprep.subr.bf16.mxu0 0
      %991 = vmatpush1.bf16.msra.mxu0 0
      %992 = vmatprep.subr.bf16.mxu0 0
      %993 = vmatpush1.bf16.msra.mxu0 0
      %994 = vmatprep.subr.bf16.mxu0 0
      %995 = vmatpush1.bf16.msra.mxu0 0
      %996 = vmatprep.subr.bf16.mxu0 0
      %997 = vmatpush1.bf16.msra.mxu0 0
      %998 = vmatprep.subr.bf16.mxu0 0
      %999 = vmatpush1.bf16.msra.mxu0 0
      %1000 = vmatprep.subr.bf16.mxu0 0
      %1001 = vmatpush1.bf16.msra.mxu0 0
      %1002 = vmatprep.subr.bf16.mxu0 0
      %1003 = vmatpush1.bf16.msra.mxu0 0
      %1004 = vmatprep.subr.bf16.mxu0 0
      %1005 = vmatpush1.bf16.msra.mxu0 0
      %1006 = vmatprep.subr.bf16.mxu0 0
      %1007 = vmatpush1.bf16.msra.mxu0 0
      %1008 = vmatprep.subr.bf16.mxu0 0
      %1009 = vmatpush1.bf16.msra.mxu0 0
      %1010 = vmatprep.subr.bf16.mxu0 0
      %1011 = vmatpush1.bf16.msra.mxu0 0
      %1012 = vmatprep.subr.bf16.mxu0 0
      %1013 = vmatpush1.bf16.msra.mxu0 0
      %1014 = vmatprep.subr.bf16.mxu0 0
      %1015 = vmatpush1.bf16.msra.mxu0 0
      %1016 = vmatprep.subr.bf16.mxu0 0
      %1017 = vmatpush1.bf16.msra.mxu0 0
      %1018 = vmatprep.mubr.bf16.mxu0 0
      %1019 = vmatmul.mubr.bf16.gmra.mrb[0].mxu0 %v981
      %v1020 = vpop.f32.mrb[0].mxu0
      %v1021 = vadd.f32 0.0, %v1020
      %v1022 = vpop.f32.mrb[0].mxu0
      %v1023 = vpop.f32.mrb[0].mxu0
      %v1024 = vpop.f32.mrb[0].mxu0
      %1025 = vdwg.mxu0
      %v1026 = vpack.c.bf16 %v1021, %v1021
      %v1029 = vunpack.c.l.b16 %v703
      %v1030 = vunpack.c.l.b16 %v704
      %v1031 = vpack.c.b16 %v1030, %v1029
      %v1034 = vsel %vm799, %v1026, 0
      %1036 = vmatprep.subr.bf16.mxu0 0
      %1037 = vmatpush1.bf16.msra.mxu0 %v1031
      %1038 = vmatprep.subr.bf16.mxu0 0
      %1039 = vmatpush1.bf16.msra.mxu0 0
      %1040 = vmatprep.subr.bf16.mxu0 0
      %1041 = vmatpush1.bf16.msra.mxu0 0
      %1042 = vmatprep.subr.bf16.mxu0 0
      %1043 = vmatpush1.bf16.msra.mxu0 0
      %1044 = vmatprep.subr.bf16.mxu0 0
      %1045 = vmatpush1.bf16.msra.mxu0 0
      %1046 = vmatprep.subr.bf16.mxu0 0
      %1047 = vmatpush1.bf16.msra.mxu0 0
      %1048 = vmatprep.subr.bf16.mxu0 0
      %1049 = vmatpush1.bf16.msra.mxu0 0
      %1050 = vmatprep.subr.bf16.mxu0 0
      %1051 = vmatpush1.bf16.msra.mxu0 0
      %1052 = vmatprep.subr.bf16.mxu0 0
      %1053 = vmatpush1.bf16.msra.mxu0 0
      %1054 = vmatprep.subr.bf16.mxu0 0
      %1055 = vmatpush1.bf16.msra.mxu0 0
      %1056 = vmatprep.subr.bf16.mxu0 0
      %1057 = vmatpush1.bf16.msra.mxu0 0
      %1058 = vmatprep.subr.bf16.mxu0 0
      %1059 = vmatpush1.bf16.msra.mxu0 0
      %1060 = vmatprep.subr.bf16.mxu0 0
      %1061 = vmatpush1.bf16.msra.mxu0 0
      %1062 = vmatprep.subr.bf16.mxu0 0
      %1063 = vmatpush1.bf16.msra.mxu0 0
      %1064 = vmatprep.subr.bf16.mxu0 0
      %1065 = vmatpush1.bf16.msra.mxu0 0
      %1066 = vmatprep.subr.bf16.mxu0 0
      %1067 = vmatpush1.bf16.msra.mxu0 0
      %1068 = vmatprep.mubr.bf16.mxu0 0
      %1069 = vmatmul.mubr.bf16.gmra.mrb[0].mxu0 %v1034
      %v1070 = vpop.f32.mrb[0].mxu0
      %v1071 = vadd.f32 0.0, %v1070
      %v1072 = vpop.f32.mrb[0].mxu0
      %v1073 = vpop.f32.mrb[0].mxu0
      %v1074 = vpop.f32.mrb[0].mxu0
      %1075 = vdwg.mxu0
      %v1078 = vunpack.c.l.b16 %v701
      %v1079 = vunpack.c.l.b16 %v702
      %v1080 = vpack.c.b16 %v1079, %v1078
      %v1083 = vsel %vm799, %v911, 0
      %1085 = vmatprep.subr.bf16.mxu0 0
      %1086 = vmatpush1.bf16.msra.mxu0 %v1080
      %1087 = vmatprep.subr.bf16.mxu0 0
      %1088 = vmatpush1.bf16.msra.mxu0 0
      %1089 = vmatprep.subr.bf16.mxu0 0
      %1090 = vmatpush1.bf16.msra.mxu0 0
      %1091 = vmatprep.subr.bf16.mxu0 0
      %1092 = vmatpush1.bf16.msra.mxu0 0
      %1093 = vmatprep.subr.bf16.mxu0 0
      %1094 = vmatpush1.bf16.msra.mxu0 0
      %1095 = vmatprep.subr.bf16.mxu0 0
      %1096 = vmatpush1.bf16.msra.mxu0 0
      %1097 = vmatprep.subr.bf16.mxu0 0
      %1098 = vmatpush1.bf16.msra.mxu0 0
      %1099 = vmatprep.subr.bf16.mxu0 0
      %1100 = vmatpush1.bf16.msra.mxu0 0
      %1101 = vmatprep.subr.bf16.mxu0 0
      %1102 = vmatpush1.bf16.msra.mxu0 0
      %1103 = vmatprep.subr.bf16.mxu0 0
      %1104 = vmatpush1.bf16.msra.mxu0 0
      %1105 = vmatprep.subr.bf16.mxu0 0
      %1106 = vmatpush1.bf16.msra.mxu0 0
      %1107 = vmatprep.subr.bf16.mxu0 0
      %1108 = vmatpush1.bf16.msra.mxu0 0
      %1109 = vmatprep.subr.bf16.mxu0 0
      %1110 = vmatpush1.bf16.msra.mxu0 0
      %1111 = vmatprep.subr.bf16.mxu0 0
      %1112 = vmatpush1.bf16.msra.mxu0 0
      %1113 = vmatprep.subr.bf16.mxu0 0
      %1114 = vmatpush1.bf16.msra.mxu0 0
      %1115 = vmatprep.subr.bf16.mxu0 0
      %1116 = vmatpush1.bf16.msra.mxu0 0
      %1117 = vmatprep.mubr.bf16.mxu0 0
      %1118 = vmatmul.mubr.bf16.gmra.mrb[0].mxu0 %v1083
      %v1119 = vpop.f32.mrb[0].mxu0
      %v1120 = vadd.f32 %v1071, %v1119
      %v1121 = vpop.f32.mrb[0].mxu0
      %v1122 = vpop.f32.mrb[0].mxu0
      %v1123 = vpop.f32.mrb[0].mxu0
      %1124 = vdwg.mxu0
      %v1125 = vadd.f32 %v695, %v1120
      %v1127 = vlaneseq
      %v1128 = vshrl.u32 %v1127, 7
      %v1129 = vsub.s32 0, %v1128
      %v1130 = vrot.slane %v705, %v1129
      %v1132 = vadd.f32 %v1125, %v1130
      %v1133 = vsel %vm751, %v1132, 0.0
      %1134 = vadd.xlane.f32.xlu0 %v1133
      %v1135 = vpop.xlane.xlu0 %1134
      %v1136 = vrcp.pop 32.0
      %v1137 = vmul.f32 %v1135, %v1136
      %v1138 = vsub.f32 %v1132, %v1137
      %v1139 = vmul.f32 %v1138, %v1138
      %v1140 = vsel %vm751, %v1139, 0.0
      %1141 = vadd.xlane.f32.xlu0 %v1140
      %v1142 = vpop.xlane.xlu0 %1141
      %v1143 = vmul.f32 %v1142, %v1136
      %v1144 = vadd.f32 %v1143, 1e-05
      %v1145 = vrsqrt.pop %v1144
      %v1146 = vmul.f32 %v1138, %v1145
      %v1148 = vlaneseq
      %v1149 = vshrl.u32 %v1148, 7
      %v1150 = vsub.s32 0, %v1149
      %v1151 = vrot.slane %v728, %v1150
      %v1153 = vmul.f32 %v1146, %v1151
      %v1155 = vlaneseq
      %v1156 = vshrl.u32 %v1155, 7
      %v1157 = vsub.s32 0, %v1156
      %v1158 = vrot.slane %v729, %v1157
      %v1160 = vadd.f32 %v1153, %v1158
      %v1161 = vpack.c.bf16 %v1160, %v1160
      %v1163 = vlaneseq
      %v1164 = vshrl.u32 %v1163, 7
      %v1165 = vsub.s32 0, %v1164
      %v1166 = vrot.slane %v710, %v1165
      %v1172 = vunpack.c.l.b16 %v706
      %v1173 = vunpack.c.l.b16 %v707
      %v1174 = vunpack.c.l.b16 %v708
      %v1175 = vunpack.c.l.b16 %v709
      %v1176 = vpack.c.b16 %v1173, %v1172
      %v1177 = vpack.c.b16 %v1175, %v1174
      %v1181 = vsel %vm751, %v1161, 0
      %1183 = vmatprep.subr.bf16.mxu0 0
      %1184 = vmatpush1.bf16.msra.mxu0 %v1176
      %1185 = vmatprep.subr.bf16.mxu0 0
      %1186 = vmatpush1.bf16.msra.mxu0 %v1177
      %1187 = vmatprep.subr.bf16.mxu0 0
      %1188 = vmatpush1.bf16.msra.mxu0 0
      %1189 = vmatprep.subr.bf16.mxu0 0
      %1190 = vmatpush1.bf16.msra.mxu0 0
      %1191 = vmatprep.subr.bf16.mxu0 0
      %1192 = vmatpush1.bf16.msra.mxu0 0
      %1193 = vmatprep.subr.bf16.mxu0 0
      %1194 = vmatpush1.bf16.msra.mxu0 0
      %1195 = vmatprep.subr.bf16.mxu0 0
      %1196 = vmatpush1.bf16.msra.mxu0 0
      %1197 = vmatprep.subr.bf16.mxu0 0
      %1198 = vmatpush1.bf16.msra.mxu0 0
      %1199 = vmatprep.subr.bf16.mxu0 0
      %1200 = vmatpush1.bf16.msra.mxu0 0
      %1201 = vmatprep.subr.bf16.mxu0 0
      %1202 = vmatpush1.bf16.msra.mxu0 0
      %1203 = vmatprep.subr.bf16.mxu0 0
      %1204 = vmatpush1.bf16.msra.mxu0 0
      %1205 = vmatprep.subr.bf16.mxu0 0
      %1206 = vmatpush1.bf16.msra.mxu0 0
      %1207 = vmatprep.subr.bf16.mxu0 0
      %1208 = vmatpush1.bf16.msra.mxu0 0
      %1209 = vmatprep.subr.bf16.mxu0 0
      %1210 = vmatpush1.bf16.msra.mxu0 0
      %1211 = vmatprep.subr.bf16.mxu0 0
      %1212 = vmatpush1.bf16.msra.mxu0 0
      %1213 = vmatprep.subr.bf16.mxu0 0
      %1214 = vmatpush1.bf16.msra.mxu0 0
      %1215 = vmatprep.mubr.bf16.mxu0 0
      %1216 = vmatmul.mubr.bf16.gmra.mrb[0].mxu0 %v1181
      %v1217 = vpop.f32.mrb[0].mxu0
      %v1218 = vadd.f32 %v1166, %v1217
      %v1219 = vpop.f32.mrb[0].mxu0
      %v1220 = vpop.f32.mrb[0].mxu0
      %v1221 = vpop.f32.mrb[0].mxu0
      %1222 = vdwg.mxu0
      %v1223 = vmax.f32 %v1218, 0.0
      %v1224 = vpack.c.bf16 %v1223, %v1223
      %v1226 = vlaneseq
      %v1227 = vshrl.u32 %v1226, 7
      %v1228 = vsub.s32 0, %v1227
      %v1229 = vrot.slane %v727, %v1228
      %v1247 = vunpack.c.l.b16 %v711
      %v1248 = vunpack.c.l.b16 %v712
      %v1249 = vunpack.c.l.b16 %v713
      %v1250 = vunpack.c.l.b16 %v714
      %v1251 = vunpack.c.l.b16 %v715
      %v1252 = vunpack.c.l.b16 %v716
      %v1253 = vunpack.c.l.b16 %v717
      %v1254 = vunpack.c.l.b16 %v718
      %v1255 = vunpack.c.l.b16 %v719
      %v1256 = vunpack.c.l.b16 %v720
      %v1257 = vunpack.c.l.b16 %v721
      %v1258 = vunpack.c.l.b16 %v722
      %v1259 = vunpack.c.l.b16 %v723
      %v1260 = vunpack.c.l.b16 %v724
      %v1261 = vunpack.c.l.b16 %v725
      %v1262 = vunpack.c.l.b16 %v726
      %v1263 = vpack.c.b16 %v1248, %v1247
      %v1264 = vpack.c.b16 %v1250, %v1249
      %v1265 = vpack.c.b16 %v1252, %v1251
      %v1266 = vpack.c.b16 %v1254, %v1253
      %v1267 = vpack.c.b16 %v1256, %v1255
      %v1268 = vpack.c.b16 %v1258, %v1257
      %v1269 = vpack.c.b16 %v1260, %v1259
      %v1270 = vpack.c.b16 %v1262, %v1261
      %1279 = vmatprep.subr.bf16.mxu0 0
      %1280 = vmatpush1.bf16.msra.mxu0 %v1263
      %1281 = vmatprep.subr.bf16.mxu0 0
      %1282 = vmatpush1.bf16.msra.mxu0 %v1264
      %1283 = vmatprep.subr.bf16.mxu0 0
      %1284 = vmatpush1.bf16.msra.mxu0 %v1265
      %1285 = vmatprep.subr.bf16.mxu0 0
      %1286 = vmatpush1.bf16.msra.mxu0 %v1266
      %1287 = vmatprep.subr.bf16.mxu0 0
      %1288 = vmatpush1.bf16.msra.mxu0 %v1267
      %1289 = vmatprep.subr.bf16.mxu0 0
      %1290 = vmatpush1.bf16.msra.mxu0 %v1268
      %1291 = vmatprep.subr.bf16.mxu0 0
      %1292 = vmatpush1.bf16.msra.mxu0 %v1269
      %1293 = vmatprep.subr.bf16.mxu0 0
      %1294 = vmatpush1.bf16.msra.mxu0 %v1270
      %1295 = vmatprep.subr.bf16.mxu0 0
      %1296 = vmatpush1.bf16.msra.mxu0 0
      %1297 = vmatprep.subr.bf16.mxu0 0
      %1298 = vmatpush1.bf16.msra.mxu0 0
      %1299 = vmatprep.subr.bf16.mxu0 0
      %1300 = vmatpush1.bf16.msra.mxu0 0
      %1301 = vmatprep.subr.bf16.mxu0 0
      %1302 = vmatpush1.bf16.msra.mxu0 0
      %1303 = vmatprep.subr.bf16.mxu0 0
      %1304 = vmatpush1.bf16.msra.mxu0 0
      %1305 = vmatprep.subr.bf16.mxu0 0
      %1306 = vmatpush1.bf16.msra.mxu0 0
      %1307 = vmatprep.subr.bf16.mxu0 0
      %1308 = vmatpush1.bf16.msra.mxu0 0
      %1309 = vmatprep.subr.bf16.mxu0 0
      %1310 = vmatpush1.bf16.msra.mxu0 0
      %1311 = vmatprep.mubr.bf16.mxu0 0
      %1312 = vmatmul.mubr.bf16.gmra.mrb[0].mxu0 %v1224
      %v1313 = vpop.f32.mrb[0].mxu0
      %v1314 = vadd.f32 %v1229, %v1313
      %v1315 = vpop.f32.mrb[0].mxu0
      %v1316 = vpop.f32.mrb[0].mxu0
      %v1317 = vpop.f32.mrb[0].mxu0
      %1318 = vdwg.mxu0
      %v1319 = vadd.f32 %v1160, %v1314
      %v1320 = vsel %vm751, %v1319, 0.0
      %1321 = vadd.xlane.f32.xlu0 %v1320
      %v1322 = vpop.xlane.xlu0 %1321
      %v1323 = vmul.f32 %v1322, %v1136
      %v1324 = vsub.f32 %v1319, %v1323
      %v1325 = vmul.f32 %v1324, %v1324
      %v1326 = vsel %vm751, %v1325, 0.0
      %1327 = vadd.xlane.f32.xlu0 %v1326
      %v1328 = vpop.xlane.xlu0 %1327
      %v1329 = vmul.f32 %v1328, %v1136
      %v1330 = vadd.f32 %v1329, 1e-05
      %v1331 = vrsqrt.pop %v1330
      %v1332 = vmul.f32 %v1324, %v1331
      %v1334 = vlaneseq
      %v1335 = vshrl.u32 %v1334, 7
      %v1336 = vsub.s32 0, %v1335
      %v1337 = vrot.slane %v730, %v1336
      %v1339 = vmul.f32 %v1332, %v1337
      %v1341 = vlaneseq
      %v1342 = vshrl.u32 %v1341, 7
      %v1343 = vsub.s32 0, %v1342
      %v1344 = vrot.slane %v731, %v1343
      %v1346 = vadd.f32 %v1339, %v1344
      %1347 = vst.msk [vmem:[%s686] sm:$0xff] %vm751, %v1346
      %p1348 = scmp.lt.s32.totalorder %s29, 1
      %s1349 = scalar_select %p1348, %s29, 1
      %s1350 = smul.addr %s1349, 8
      %s1351 = scalar_lea.vmem %s14, %s1350
      // Predicated region
      $region81: #{smiles_transformer_forward.2} parent=75 // pred_check
        %p1352 = pneg %p419
      $region82: #{smiles_transformer_forward.2} parent=75 // pred_check_branch
        %1354 = sbr.rel (%p1352) target = $region84
      $region83: #{smiles_transformer_forward.2} parent=75 // pred_region
        _
      $region84: #{smiles_transformer_forward.2} parent=75 // pred_fallthru
        _
    $region76: #{smiles_transformer_forward.2} parent=5 // pred_fallthru
      _
    %p1355 = scmp.le.s32.totalorder 2, %s20
    // Predicated region
    $region85: #{smiles_transformer_forward.2} parent=5 // pred_check
      %p1356 = pneg %p1355
    $region86: #{smiles_transformer_forward.2} parent=5 // pred_check_branch
      %1358 = sbr.rel (%p1356) target = $region88
    $region87: #{smiles_transformer_forward.2} parent=5 // pred_region
      %s1359 = ssub.s32 %s20, 2
      // Predicated region
      $region89: #{smiles_transformer_forward.2} parent=87 // pred_check
        %p1360 = pneg %p425
      $region90: #{smiles_transformer_forward.2} parent=87 // pred_check_branch
        %1362 = sbr.rel (%p1360) target = $region92
      $region91: #{smiles_transformer_forward.2} parent=87 // pred_region
        %p1363 = scmp.lt.s32.totalorder %s31, 1
        %s1364 = scalar_select %p1363, %s31, 1
        %s1365 = smul.addr %s1364, 8
        %s1366 = scalar_lea.vmem %s14, %s1365
      $region92: #{smiles_transformer_forward.2} parent=87 // pred_fallthru
        _
    $region88: #{smiles_transformer_forward.2} parent=5 // pred_fallthru
      _
  $region6: #{smiles_transformer_forward.2} parent=0 // loop_footer
    %s24 = sadd.s32 1, %s20
  $region7: #{smiles_transformer_forward.2} parent=0 // loop_footer_branch
    %19 = sbr.rel target = $region3
  $region8: #{smiles_transformer_forward.2} parent=0 // loop_exit
    _

// kernel: smiles_transformer_forward.3
$region0: #{smiles_transformer_forward.3}
  #allocation0 [shape = 'u32[]', space=smem, size = 0x4, offset = 0x4, fixed_abs, tag = 'smem constant byte address 0x4 - core index']
  #allocation1 [shape = 'u32[144,128]{1,0:T(1,128)}', space=vmem, size = 0x12000, scoped, tag = 'internal scratch']
  %s0 = inlined_call_operand.vmem [shape: f32[2,9,32], index: 0, kind: input, shape index: {}]
  %s1 = inlined_call_operand.vmem [shape: bf16[2,32,96], index: 1, kind: input, shape index: {}]
  %s2 = inlined_call_operand.vmem [shape: f32[2,1,96], index: 2, kind: input, shape index: {}]
  %s3 = inlined_call_operand.vmem [shape: bf16[2,32,32], index: 3, kind: input, shape index: {}]
  %s4 = inlined_call_operand.vmem [shape: f32[2,1,32], index: 4, kind: input, shape index: {}, may-alias: {4,8,10,12}]
  %s5 = inlined_call_operand.vmem [shape: bf16[2,32,128], index: 5, kind: input, shape index: {}]
  %s6 = inlined_call_operand.vmem [shape: f32[2,1,128], index: 6, kind: input, shape index: {}]
  %s7 = inlined_call_operand.vmem [shape: bf16[2,128,32], index: 7, kind: input, shape index: {}]
  %s8 = inlined_call_operand.vmem [shape: f32[2,1,32], index: 8, kind: input, shape index: {}, may-alias: {4,8,10,12}]
  %s9 = inlined_call_operand.vmem [shape: f32[2,1,32], index: 9, kind: input, shape index: {}, may-alias: {9,11}]
  %s10 = inlined_call_operand.vmem [shape: f32[2,1,32], index: 10, kind: input, shape index: {}, may-alias: {4,8,10,12}]
  %s11 = inlined_call_operand.vmem [shape: f32[2,1,32], index: 11, kind: input, shape index: {}, may-alias: {9,11}]
  %s12 = inlined_call_operand.vmem [shape: f32[2,1,32], index: 12, kind: input, shape index: {}, may-alias: {4,8,10,12}]
  %s13 = inlined_call_operand.vmem [shape: f32[2,9,32], index: 13, kind: output, shape index: {}]
  %s14 = sld [smem:[#allocation0]]
  $region89: #{smiles_transformer_forward.3} parent=0
    _
  %s16 = ssub.s32 1, %s14
  %s17 = scalar_select 0, %s16, %s14
  loop: start=0, step=1, limit=6
  $region2: #{smiles_transformer_forward.3} parent=0 // loop_pre_header
    _
  $region3: #{smiles_transformer_forward.3} parent=0 // loop_header
    %s19 = sphi 0, %s23
    %p20 = scmp.ge.s32.totalorder %s19, 6
    %s26 = sphi 0, %s38
    %s27 = sphi 0, %s34
    %s28 = sphi 0, %s26
    %s29 = sphi 0, %s27
    %s30 = sphi 0, %s28
    %s31 = sphi 0, %s29
    %s41 = sphi 0, %s43
    %s44 = sphi 0, %s41
    %s45 = sphi 0, %s44
    %s61 = sphi 0, %s45
    %s67 = sphi 0, %s69
    %s70 = sphi 0, %s67
    %s71 = sphi 0, %s70
    %s87 = sphi 0, %s71
    %s93 = sphi 0, %s95
    %s96 = sphi 0, %s93
    %s97 = sphi 0, %s96
    %s113 = sphi 0, %s97
    %s119 = sphi 0, %s121
    %s122 = sphi 0, %s119
    %s123 = sphi 0, %s122
    %s139 = sphi 0, %s123
    %s145 = sphi 0, %s147
    %s148 = sphi 0, %s145
    %s149 = sphi 0, %s148
    %s165 = sphi 0, %s149
    %s171 = sphi 0, %s173
    %s174 = sphi 0, %s171
    %s175 = sphi 0, %s174
    %s191 = sphi 0, %s175
    %s197 = sphi 0, %s199
    %s200 = sphi 0, %s197
    %s201 = sphi 0, %s200
    %s217 = sphi 0, %s201
    %s223 = sphi 0, %s225
    %s226 = sphi 0, %s223
    %s227 = sphi 0, %s226
    %s243 = sphi 0, %s227
    %s249 = sphi 0, %s251
    %s252 = sphi 0, %s249
    %s253 = sphi 0, %s252
    %s269 = sphi 0, %s253
    %s275 = sphi 0, %s277
    %s278 = sphi 0, %s275
    %s279 = sphi 0, %s278
    %s295 = sphi 0, %s279
    %s301 = sphi 0, %s303
    %s304 = sphi 0, %s301
    %s305 = sphi 0, %s304
    %s321 = sphi 0, %s305
    %s327 = sphi 0, %s329
    %s330 = sphi 0, %s327
    %s331 = sphi 0, %s330
    %s347 = sphi 0, %s331
    %s353 = sphi 0, %s355
    %s356 = sphi 0, %s353
    %s357 = sphi 0, %s356
    %s373 = sphi 0, %s357
    %s379 = sphi 0, %s381
    %s382 = sphi 0, %s379
    %s383 = sphi 0, %s382
    %s399 = sphi 0, %s383
  $region4: #{smiles_transformer_forward.3} parent=0 // loop_header_branch
    %22 = sbr.rel (%p20) target = $region8
  $region5: #{smiles_transformer_forward.3} parent=0 // loop_body
    %s24 = ssub.s32 %s19, 1
    %s25 = ssub.s32 %s19, 2
    %s32 = sadd.s32 1, %s27
    %p33 = scmp.ge.s32.totalorder %s32, 2
    %s34 = scalar_select %p33, 0, %s32
    %s35 = sadd.s32 1, %s26
    %s36 = scalar_select %p33, %s35, %s26
    %p37 = scmp.ge.s32.totalorder %s36, 2
    %s38 = scalar_select %p37, 0, %s36
    %s39 = ssub.s32 %s26, %s38
    %p40 = scmp.eq.s32.totalorder %s39, 0
    %s42 = sadd.s32 %s41, 1
    %s43 = scalar_select %p40, %s41, %s42
    %p46 = pneg %p40
    %p47 = scmp.eq.s32.totalorder %s19, 3
    %p48 = por %p46, %p47
    %p49 = scmp.ne.s32.totalorder %s41, %s44
    %p50 = scmp.eq.s32.totalorder %s19, 0
    %p51 = por %p49, %p50
    %p52 = scmp.ne.s32.totalorder %s41, %s44
    %p53 = scmp.eq.s32.totalorder %s24, 3
    %p54 = por %p52, %p53
    %p55 = scmp.ne.s32.totalorder %s44, %s45
    %p56 = scmp.eq.s32.totalorder %s24, 0
    %p57 = por %p55, %p56
    %p58 = scmp.ne.s32.totalorder %s44, %s45
    %p59 = scmp.eq.s32.totalorder %s25, 3
    %p60 = por %p58, %p59
    %p62 = scmp.ne.s32.totalorder %s45, %s61
    %p63 = scmp.eq.s32.totalorder %s25, 0
    %p64 = por %p62, %p63
    %s65 = ssub.s32 %s27, %s34
    %p66 = scmp.eq.s32.totalorder %s65, 0
    %s68 = sadd.s32 %s67, 1
    %s69 = scalar_select %p66, %s67, %s68
    %p72 = pneg %p66
    %p73 = scmp.eq.s32.totalorder %s19, 3
    %p74 = por %p72, %p73
    %p75 = scmp.ne.s32.totalorder %s67, %s70
    %p76 = scmp.eq.s32.totalorder %s19, 0
    %p77 = por %p75, %p76
    %p78 = scmp.ne.s32.totalorder %s67, %s70
    %p79 = scmp.eq.s32.totalorder %s24, 3
    %p80 = por %p78, %p79
    %p81 = scmp.ne.s32.totalorder %s70, %s71
    %p82 = scmp.eq.s32.totalorder %s24, 0
    %p83 = por %p81, %p82
    %p84 = scmp.ne.s32.totalorder %s70, %s71
    %p85 = scmp.eq.s32.totalorder %s25, 3
    %p86 = por %p84, %p85
    %p88 = scmp.ne.s32.totalorder %s71, %s87
    %p89 = scmp.eq.s32.totalorder %s25, 0
    %p90 = por %p88, %p89
    %s91 = ssub.s32 %s27, %s34
    %p92 = scmp.eq.s32.totalorder %s91, 0
    %s94 = sadd.s32 %s93, 1
    %s95 = scalar_select %p92, %s93, %s94
    %p98 = pneg %p92
    %p99 = scmp.eq.s32.totalorder %s19, 3
    %p100 = por %p98, %p99
    %p101 = scmp.ne.s32.totalorder %s93, %s96
    %p102 = scmp.eq.s32.totalorder %s19, 0
    %p103 = por %p101, %p102
    %p104 = scmp.ne.s32.totalorder %s93, %s96
    %p105 = scmp.eq.s32.totalorder %s24, 3
    %p106 = por %p104, %p105
    %p107 = scmp.ne.s32.totalorder %s96, %s97
    %p108 = scmp.eq.s32.totalorder %s24, 0
    %p109 = por %p107, %p108
    %p110 = scmp.ne.s32.totalorder %s96, %s97
    %p111 = scmp.eq.s32.totalorder %s25, 3
    %p112 = por %p110, %p111
    %p114 = scmp.ne.s32.totalorder %s97, %s113
    %p115 = scmp.eq.s32.totalorder %s25, 0
    %p116 = por %p114, %p115
    %s117 = ssub.s32 %s27, %s34
    %p118 = scmp.eq.s32.totalorder %s117, 0
    %s120 = sadd.s32 %s119, 1
    %s121 = scalar_select %p118, %s119, %s120
    %p124 = pneg %p118
    %p125 = scmp.eq.s32.totalorder %s19, 3
    %p126 = por %p124, %p125
    %p127 = scmp.ne.s32.totalorder %s119, %s122
    %p128 = scmp.eq.s32.totalorder %s19, 0
    %p129 = por %p127, %p128
    %p130 = scmp.ne.s32.totalorder %s119, %s122
    %p131 = scmp.eq.s32.totalorder %s24, 3
    %p132 = por %p130, %p131
    %p133 = scmp.ne.s32.totalorder %s122, %s123
    %p134 = scmp.eq.s32.totalorder %s24, 0
    %p135 = por %p133, %p134
    %p136 = scmp.ne.s32.totalorder %s122, %s123
    %p137 = scmp.eq.s32.totalorder %s25, 3
    %p138 = por %p136, %p137
    %p140 = scmp.ne.s32.totalorder %s123, %s139
    %p141 = scmp.eq.s32.totalorder %s25, 0
    %p142 = por %p140, %p141
    %s143 = ssub.s32 %s27, %s34
    %p144 = scmp.eq.s32.totalorder %s143, 0
    %s146 = sadd.s32 %s145, 1
    %s147 = scalar_select %p144, %s145, %s146
    %p150 = pneg %p144
    %p151 = scmp.eq.s32.totalorder %s19, 3
    %p152 = por %p150, %p151
    %p153 = scmp.ne.s32.totalorder %s145, %s148
    %p154 = scmp.eq.s32.totalorder %s19, 0
    %p155 = por %p153, %p154
    %p156 = scmp.ne.s32.totalorder %s145, %s148
    %p157 = scmp.eq.s32.totalorder %s24, 3
    %p158 = por %p156, %p157
    %p159 = scmp.ne.s32.totalorder %s148, %s149
    %p160 = scmp.eq.s32.totalorder %s24, 0
    %p161 = por %p159, %p160
    %p162 = scmp.ne.s32.totalorder %s148, %s149
    %p163 = scmp.eq.s32.totalorder %s25, 3
    %p164 = por %p162, %p163
    %p166 = scmp.ne.s32.totalorder %s149, %s165
    %p167 = scmp.eq.s32.totalorder %s25, 0
    %p168 = por %p166, %p167
    %s169 = ssub.s32 %s27, %s34
    %p170 = scmp.eq.s32.totalorder %s169, 0
    %s172 = sadd.s32 %s171, 1
    %s173 = scalar_select %p170, %s171, %s172
    %p176 = pneg %p170
    %p177 = scmp.eq.s32.totalorder %s19, 3
    %p178 = por %p176, %p177
    %p179 = scmp.ne.s32.totalorder %s171, %s174
    %p180 = scmp.eq.s32.totalorder %s19, 0
    %p181 = por %p179, %p180
    %p182 = scmp.ne.s32.totalorder %s171, %s174
    %p183 = scmp.eq.s32.totalorder %s24, 3
    %p184 = por %p182, %p183
    %p185 = scmp.ne.s32.totalorder %s174, %s175
    %p186 = scmp.eq.s32.totalorder %s24, 0
    %p187 = por %p185, %p186
    %p188 = scmp.ne.s32.totalorder %s174, %s175
    %p189 = scmp.eq.s32.totalorder %s25, 3
    %p190 = por %p188, %p189
    %p192 = scmp.ne.s32.totalorder %s175, %s191
    %p193 = scmp.eq.s32.totalorder %s25, 0
    %p194 = por %p192, %p193
    %s195 = ssub.s32 %s27, %s34
    %p196 = scmp.eq.s32.totalorder %s195, 0
    %s198 = sadd.s32 %s197, 1
    %s199 = scalar_select %p196, %s197, %s198
    %p202 = pneg %p196
    %p203 = scmp.eq.s32.totalorder %s19, 3
    %p204 = por %p202, %p203
    %p205 = scmp.ne.s32.totalorder %s197, %s200
    %p206 = scmp.eq.s32.totalorder %s19, 0
    %p207 = por %p205, %p206
    %p208 = scmp.ne.s32.totalorder %s197, %s200
    %p209 = scmp.eq.s32.totalorder %s24, 3
    %p210 = por %p208, %p209
    %p211 = scmp.ne.s32.totalorder %s200, %s201
    %p212 = scmp.eq.s32.totalorder %s24, 0
    %p213 = por %p211, %p212
    %p214 = scmp.ne.s32.totalorder %s200, %s201
    %p215 = scmp.eq.s32.totalorder %s25, 3
    %p216 = por %p214, %p215
    %p218 = scmp.ne.s32.totalorder %s201, %s217
    %p219 = scmp.eq.s32.totalorder %s25, 0
    %p220 = por %p218, %p219
    %s221 = ssub.s32 %s27, %s34
    %p222 = scmp.eq.s32.totalorder %s221, 0
    %s224 = sadd.s32 %s223, 1
    %s225 = scalar_select %p222, %s223, %s224
    %p228 = pneg %p222
    %p229 = scmp.eq.s32.totalorder %s19, 3
    %p230 = por %p228, %p229
    %p231 = scmp.ne.s32.totalorder %s223, %s226
    %p232 = scmp.eq.s32.totalorder %s19, 0
    %p233 = por %p231, %p232
    %p234 = scmp.ne.s32.totalorder %s223, %s226
    %p235 = scmp.eq.s32.totalorder %s24, 3
    %p236 = por %p234, %p235
    %p237 = scmp.ne.s32.totalorder %s226, %s227
    %p238 = scmp.eq.s32.totalorder %s24, 0
    %p239 = por %p237, %p238
    %p240 = scmp.ne.s32.totalorder %s226, %s227
    %p241 = scmp.eq.s32.totalorder %s25, 3
    %p242 = por %p240, %p241
    %p244 = scmp.ne.s32.totalorder %s227, %s243
    %p245 = scmp.eq.s32.totalorder %s25, 0
    %p246 = por %p244, %p245
    %s247 = ssub.s32 %s27, %s34
    %p248 = scmp.eq.s32.totalorder %s247, 0
    %s250 = sadd.s32 %s249, 1
    %s251 = scalar_select %p248, %s249, %s250
    %p254 = pneg %p248
    %p255 = scmp.eq.s32.totalorder %s19, 3
    %p256 = por %p254, %p255
    %p257 = scmp.ne.s32.totalorder %s249, %s252
    %p258 = scmp.eq.s32.totalorder %s19, 0
    %p259 = por %p257, %p258
    %p260 = scmp.ne.s32.totalorder %s249, %s252
    %p261 = scmp.eq.s32.totalorder %s24, 3
    %p262 = por %p260, %p261
    %p263 = scmp.ne.s32.totalorder %s252, %s253
    %p264 = scmp.eq.s32.totalorder %s24, 0
    %p265 = por %p263, %p264
    %p266 = scmp.ne.s32.totalorder %s252, %s253
    %p267 = scmp.eq.s32.totalorder %s25, 3
    %p268 = por %p266, %p267
    %p270 = scmp.ne.s32.totalorder %s253, %s269
    %p271 = scmp.eq.s32.totalorder %s25, 0
    %p272 = por %p270, %p271
    %s273 = ssub.s32 %s27, %s34
    %p274 = scmp.eq.s32.totalorder %s273, 0
    %s276 = sadd.s32 %s275, 1
    %s277 = scalar_select %p274, %s275, %s276
    %p280 = pneg %p274
    %p281 = scmp.eq.s32.totalorder %s19, 3
    %p282 = por %p280, %p281
    %p283 = scmp.ne.s32.totalorder %s275, %s278
    %p284 = scmp.eq.s32.totalorder %s19, 0
    %p285 = por %p283, %p284
    %p286 = scmp.ne.s32.totalorder %s275, %s278
    %p287 = scmp.eq.s32.totalorder %s24, 3
    %p288 = por %p286, %p287
    %p289 = scmp.ne.s32.totalorder %s278, %s279
    %p290 = scmp.eq.s32.totalorder %s24, 0
    %p291 = por %p289, %p290
    %p292 = scmp.ne.s32.totalorder %s278, %s279
    %p293 = scmp.eq.s32.totalorder %s25, 3
    %p294 = por %p292, %p293
    %p296 = scmp.ne.s32.totalorder %s279, %s295
    %p297 = scmp.eq.s32.totalorder %s25, 0
    %p298 = por %p296, %p297
    %s299 = ssub.s32 %s27, %s34
    %p300 = scmp.eq.s32.totalorder %s299, 0
    %s302 = sadd.s32 %s301, 1
    %s303 = scalar_select %p300, %s301, %s302
    %p306 = pneg %p300
    %p307 = scmp.eq.s32.totalorder %s19, 3
    %p308 = por %p306, %p307
    %p309 = scmp.ne.s32.totalorder %s301, %s304
    %p310 = scmp.eq.s32.totalorder %s19, 0
    %p311 = por %p309, %p310
    %p312 = scmp.ne.s32.totalorder %s301, %s304
    %p313 = scmp.eq.s32.totalorder %s24, 3
    %p314 = por %p312, %p313
    %p315 = scmp.ne.s32.totalorder %s304, %s305
    %p316 = scmp.eq.s32.totalorder %s24, 0
    %p317 = por %p315, %p316
    %p318 = scmp.ne.s32.totalorder %s304, %s305
    %p319 = scmp.eq.s32.totalorder %s25, 3
    %p320 = por %p318, %p319
    %p322 = scmp.ne.s32.totalorder %s305, %s321
    %p323 = scmp.eq.s32.totalorder %s25, 0
    %p324 = por %p322, %p323
    %s325 = ssub.s32 %s27, %s34
    %p326 = scmp.eq.s32.totalorder %s325, 0
    %s328 = sadd.s32 %s327, 1
    %s329 = scalar_select %p326, %s327, %s328
    %p332 = pneg %p326
    %p333 = scmp.eq.s32.totalorder %s19, 3
    %p334 = por %p332, %p333
    %p335 = scmp.ne.s32.totalorder %s327, %s330
    %p336 = scmp.eq.s32.totalorder %s19, 0
    %p337 = por %p335, %p336
    %p338 = scmp.ne.s32.totalorder %s327, %s330
    %p339 = scmp.eq.s32.totalorder %s24, 3
    %p340 = por %p338, %p339
    %p341 = scmp.ne.s32.totalorder %s330, %s331
    %p342 = scmp.eq.s32.totalorder %s24, 0
    %p343 = por %p341, %p342
    %p344 = scmp.ne.s32.totalorder %s330, %s331
    %p345 = scmp.eq.s32.totalorder %s25, 3
    %p346 = por %p344, %p345
    %p348 = scmp.ne.s32.totalorder %s331, %s347
    %p349 = scmp.eq.s32.totalorder %s25, 0
    %p350 = por %p348, %p349
    %s351 = ssub.s32 %s27, %s34
    %p352 = scmp.eq.s32.totalorder %s351, 0
    %s354 = sadd.s32 %s353, 1
    %s355 = scalar_select %p352, %s353, %s354
    %p358 = pneg %p352
    %p359 = scmp.eq.s32.totalorder %s19, 3
    %p360 = por %p358, %p359
    %p361 = scmp.ne.s32.totalorder %s353, %s356
    %p362 = scmp.eq.s32.totalorder %s19, 0
    %p363 = por %p361, %p362
    %p364 = scmp.ne.s32.totalorder %s353, %s356
    %p365 = scmp.eq.s32.totalorder %s24, 3
    %p366 = por %p364, %p365
    %p367 = scmp.ne.s32.totalorder %s356, %s357
    %p368 = scmp.eq.s32.totalorder %s24, 0
    %p369 = por %p367, %p368
    %p370 = scmp.ne.s32.totalorder %s356, %s357
    %p371 = scmp.eq.s32.totalorder %s25, 3
    %p372 = por %p370, %p371
    %p374 = scmp.ne.s32.totalorder %s357, %s373
    %p375 = scmp.eq.s32.totalorder %s25, 0
    %p376 = por %p374, %p375
    %s377 = ssub.s32 %s26, %s38
    %p378 = scmp.eq.s32.totalorder %s377, 0
    %s380 = sadd.s32 %s379, 1
    %s381 = scalar_select %p378, %s379, %s380
    %p384 = pneg %p378
    %p385 = scmp.eq.s32.totalorder %s19, 3
    %p386 = por %p384, %p385
    %p387 = scmp.ne.s32.totalorder %s379, %s382
    %p388 = scmp.eq.s32.totalorder %s19, 0
    %p389 = por %p387, %p388
    %p390 = scmp.ne.s32.totalorder %s379, %s382
    %p391 = scmp.eq.s32.totalorder %s24, 3
    %p392 = por %p390, %p391
    %p393 = scmp.ne.s32.totalorder %s382, %s383
    %p394 = scmp.eq.s32.totalorder %s24, 0
    %p395 = por %p393, %p394
    %p396 = scmp.ne.s32.totalorder %s382, %s383
    %p397 = scmp.eq.s32.totalorder %s25, 3
    %p398 = por %p396, %p397
    %p400 = scmp.ne.s32.totalorder %s383, %s399
    %p401 = scmp.eq.s32.totalorder %s25, 0
    %p402 = por %p400, %p401
    %p403 = scmp.le.s32.totalorder 1, %s19
    %p404 = scmp.lt.s32.totalorder %s19, 5
    %p405 = pnand %p403, %p404
    %p406 = pneg %p405
    // Predicated region
    $region9: #{smiles_transformer_forward.3} parent=5 // pred_check
      _
    $region10: #{smiles_transformer_forward.3} parent=5 // pred_check_branch
      %408 = sbr.rel (%p405) target = $region12
    $region11: #{smiles_transformer_forward.3} parent=5 // pred_region
      %s409 = ssub.s32 %s19, 1
    $region12: #{smiles_transformer_forward.3} parent=5 // pred_fallthru
      _
    %p410 = scmp.lt.s32.totalorder %s19, 4
    // Predicated region
    $region13: #{smiles_transformer_forward.3} parent=5 // pred_check
      %p411 = pneg %p410
    $region14: #{smiles_transformer_forward.3} parent=5 // pred_check_branch
      %413 = sbr.rel (%p411) target = $region16
    $region15: #{smiles_transformer_forward.3} parent=5 // pred_region
      // Predicated region
      $region17: #{smiles_transformer_forward.3} parent=15 // pred_check
        %p414 = pneg %p51
      $region18: #{smiles_transformer_forward.3} parent=15 // pred_check_branch
        %416 = sbr.rel (%p414) target = $region20
      $region19: #{smiles_transformer_forward.3} parent=15 // pred_region
        %p417 = scmp.lt.s32.totalorder %s26, 1
        %s418 = scalar_select %p417, %s26, 1
        %s419 = smul.addr %s418, 2
        %s420 = smul.addr %s419, 8
        %s421 = scalar_lea.vmem %s0, %s420
      $region20: #{smiles_transformer_forward.3} parent=15 // pred_fallthru
        _
      // Predicated region
      $region21: #{smiles_transformer_forward.3} parent=15 // pred_check
        %p422 = pneg %p77
      $region22: #{smiles_transformer_forward.3} parent=15 // pred_check_branch
        %424 = sbr.rel (%p422) target = $region24
      $region23: #{smiles_transformer_forward.3} parent=15 // pred_region
        %p425 = scmp.lt.s32.totalorder %s27, 1
        %s426 = scalar_select %p425, %s27, 1
        %s427 = smul.addr %s426, 4
        %s428 = smul.addr %s427, 4
        %s429 = scalar_lea.vmem %s1, %s428
      $region24: #{smiles_transformer_forward.3} parent=15 // pred_fallthru
        _
      // Predicated region
      $region25: #{smiles_transformer_forward.3} parent=15 // pred_check
        %p430 = pneg %p103
      $region26: #{smiles_transformer_forward.3} parent=15 // pred_check_branch
        %432 = sbr.rel (%p430) target = $region28
      $region27: #{smiles_transformer_forward.3} parent=15 // pred_region
        %p433 = scmp.lt.s32.totalorder %s27, 1
        %s434 = scalar_select %p433, %s27, 1
        %s435 = scalar_lea.vmem %s2, %s434
      $region28: #{smiles_transformer_forward.3} parent=15 // pred_fallthru
        _
      // Predicated region
      $region29: #{smiles_transformer_forward.3} parent=15 // pred_check
        %p436 = pneg %p129
      $region30: #{smiles_transformer_forward.3} parent=15 // pred_check_branch
        %438 = sbr.rel (%p436) target = $region32
      $region31: #{smiles_transformer_forward.3} parent=15 // pred_region
        %p439 = scmp.lt.s32.totalorder %s27, 1
        %s440 = scalar_select %p439, %s27, 1
        %s441 = smul.addr %s440, 4
        %s442 = smul.addr %s441, 4
        %s443 = scalar_lea.vmem %s3, %s442
      $region32: #{smiles_transformer_forward.3} parent=15 // pred_fallthru
        _
      // Predicated region
      $region33: #{smiles_transformer_forward.3} parent=15 // pred_check
        %p444 = pneg %p155
      $region34: #{smiles_transformer_forward.3} parent=15 // pred_check_branch
        %446 = sbr.rel (%p444) target = $region36
      $region35: #{smiles_transformer_forward.3} parent=15 // pred_region
        %p447 = scmp.lt.s32.totalorder %s27, 1
        %s448 = scalar_select %p447, %s27, 1
        %s449 = scalar_lea.vmem %s4, %s448
      $region36: #{smiles_transformer_forward.3} parent=15 // pred_fallthru
        _
      // Predicated region
      $region37: #{smiles_transformer_forward.3} parent=15 // pred_check
        %p450 = pneg %p181
      $region38: #{smiles_transformer_forward.3} parent=15 // pred_check_branch
        %452 = sbr.rel (%p450) target = $region40
      $region39: #{smiles_transformer_forward.3} parent=15 // pred_region
        %p453 = scmp.lt.s32.totalorder %s27, 1
        %s454 = scalar_select %p453, %s27, 1
        %s455 = smul.addr %s454, 4
        %s456 = smul.addr %s455, 4
        %s457 = scalar_lea.vmem %s5, %s456
      $region40: #{smiles_transformer_forward.3} parent=15 // pred_fallthru
        _
      // Predicated region
      $region41: #{smiles_transformer_forward.3} parent=15 // pred_check
        %p458 = pneg %p207
      $region42: #{smiles_transformer_forward.3} parent=15 // pred_check_branch
        %460 = sbr.rel (%p458) target = $region44
      $region43: #{smiles_transformer_forward.3} parent=15 // pred_region
        %p461 = scmp.lt.s32.totalorder %s27, 1
        %s462 = scalar_select %p461, %s27, 1
        %s463 = scalar_lea.vmem %s6, %s462
      $region44: #{smiles_transformer_forward.3} parent=15 // pred_fallthru
        _
      // Predicated region
      $region45: #{smiles_transformer_forward.3} parent=15 // pred_check
        %p464 = pneg %p233
      $region46: #{smiles_transformer_forward.3} parent=15 // pred_check_branch
        %466 = sbr.rel (%p464) target = $region48
      $region47: #{smiles_transformer_forward.3} parent=15 // pred_region
        %p467 = scmp.lt.s32.totalorder %s27, 1
        %s468 = scalar_select %p467, %s27, 1
        %s469 = smul.addr %s468, 16
        %s470 = smul.addr %s469, 4
        %s471 = scalar_lea.vmem %s7, %s470
      $region48: #{smiles_transformer_forward.3} parent=15 // pred_fallthru
        _
      // Predicated region
      $region49: #{smiles_transformer_forward.3} parent=15 // pred_check
        %p472 = pneg %p259
      $region50: #{smiles_transformer_forward.3} parent=15 // pred_check_branch
        %474 = sbr.rel (%p472) target = $region52
      $region51: #{smiles_transformer_forward.3} parent=15 // pred_region
        %p475 = scmp.lt.s32.totalorder %s27, 1
        %s476 = scalar_select %p475, %s27, 1
        %s477 = scalar_lea.vmem %s8, %s476
      $region52: #{smiles_transformer_forward.3} parent=15 // pred_fallthru
        _
      // Predicated region
      $region53: #{smiles_transformer_forward.3} parent=15 // pred_check
        %p478 = pneg %p285
      $region54: #{smiles_transformer_forward.3} parent=15 // pred_check_branch
        %480 = sbr.rel (%p478) target = $region56
      $region55: #{smiles_transformer_forward.3} parent=15 // pred_region
        %p481 = scmp.lt.s32.totalorder %s27, 1
        %s482 = scalar_select %p481, %s27, 1
        %s483 = scalar_lea.vmem %s9, %s482
      $region56: #{smiles_transformer_forward.3} parent=15 // pred_fallthru
        _
      // Predicated region
      $region57: #{smiles_transformer_forward.3} parent=15 // pred_check
        %p484 = pneg %p311
      $region58: #{smiles_transformer_forward.3} parent=15 // pred_check_branch
        %486 = sbr.rel (%p484) target = $region60
      $region59: #{smiles_transformer_forward.3} parent=15 // pred_region
        %p487 = scmp.lt.s32.totalorder %s27, 1
        %s488 = scalar_select %p487, %s27, 1
        %s489 = scalar_lea.vmem %s10, %s488
      $region60: #{smiles_transformer_forward.3} parent=15 // pred_fallthru
        _
      // Predicated region
      $region61: #{smiles_transformer_forward.3} parent=15 // pred_check
        %p490 = pneg %p337
      $region62: #{smiles_transformer_forward.3} parent=15 // pred_check_branch
        %492 = sbr.rel (%p490) target = $region64
      $region63: #{smiles_transformer_forward.3} parent=15 // pred_region
        %p493 = scmp.lt.s32.totalorder %s27, 1
        %s494 = scalar_select %p493, %s27, 1
        %s495 = scalar_lea.vmem %s11, %s494
      $region64: #{smiles_transformer_forward.3} parent=15 // pred_fallthru
        _
      // Predicated region
      $region65: #{smiles_transformer_forward.3} parent=15 // pred_check
        %p496 = pneg %p363
      $region66: #{smiles_transformer_forward.3} parent=15 // pred_check_branch
        %498 = sbr.rel (%p496) target = $region68
      $region67: #{smiles_transformer_forward.3} parent=15 // pred_region
        %p499 = scmp.lt.s32.totalorder %s27, 1
        %s500 = scalar_select %p499, %s27, 1
        %s501 = scalar_lea.vmem %s12, %s500
      $region68: #{smiles_transformer_forward.3} parent=15 // pred_fallthru
        _
    $region16: #{smiles_transformer_forward.3} parent=5 // pred_fallthru
      _
    %p502 = scmp.le.s32.totalorder 1, %s19
    %p503 = scmp.lt.s32.totalorder %s19, 5
    %p504 = pnand %p502, %p503
    %p505 = pneg %p504
    // Predicated region
    $region69: #{smiles_transformer_forward.3} parent=5 // pred_check
      _
    $region70: #{smiles_transformer_forward.3} parent=5 // pred_check_branch
      %507 = sbr.rel (%p504) target = $region72
    $region71: #{smiles_transformer_forward.3} parent=5 // pred_region
      %s508 = ssub.s32 %s19, 1
      %p509 = scmp.lt.s32.totalorder %s28, 1
      %s510 = scalar_select %p509, %s28, 1
      %s511 = smul.addr %s510, 2
      %s512 = smul.addr %s511, 8
      %s513 = scalar_lea.vmem %s0, %s512
      %p514 = pneg %p57
      %p515 = pneg %p54
      %p516 = scmp.lt.s32.totalorder %s29, 1
      %s517 = scalar_select %p516, %s29, 1
      %s518 = smul.addr %s517, 4
      %s519 = smul.addr %s518, 4
      %s520 = scalar_lea.vmem %s1, %s519
      %p521 = pneg %p83
      %p522 = pneg %p80
      %p523 = scmp.lt.s32.totalorder %s29, 1
      %s524 = scalar_select %p523, %s29, 1
      %s525 = scalar_lea.vmem %s2, %s524
      %p526 = pneg %p109
      %p527 = pneg %p106
      %p528 = scmp.lt.s32.totalorder %s29, 1
      %s529 = scalar_select %p528, %s29, 1
      %s530 = smul.addr %s529, 4
      %s531 = smul.addr %s530, 4
      %s532 = scalar_lea.vmem %s3, %s531
      %p533 = pneg %p135
      %p534 = pneg %p132
      %p535 = scmp.lt.s32.totalorder %s29, 1
      %s536 = scalar_select %p535, %s29, 1
      %s537 = scalar_lea.vmem %s4, %s536
      %p538 = pneg %p161
      %p539 = pneg %p158
      %p540 = scmp.lt.s32.totalorder %s29, 1
      %s541 = scalar_select %p540, %s29, 1
      %s542 = smul.addr %s541, 4
      %s543 = smul.addr %s542, 4
      %s544 = scalar_lea.vmem %s5, %s543
      %p545 = pneg %p187
      %p546 = pneg %p184
      %p547 = scmp.lt.s32.totalorder %s29, 1
      %s548 = scalar_select %p547, %s29, 1
      %s549 = scalar_lea.vmem %s6, %s548
      %p550 = pneg %p213
      %p551 = pneg %p210
      %p552 = scmp.lt.s32.totalorder %s29, 1
      %s553 = scalar_select %p552, %s29, 1
      %s554 = smul.addr %s553, 16
      %s555 = smul.addr %s554, 4
      %s556 = scalar_lea.vmem %s7, %s555
      %p557 = pneg %p239
      %p558 = pneg %p236
      %p559 = scmp.lt.s32.totalorder %s29, 1
      %s560 = scalar_select %p559, %s29, 1
      %s561 = scalar_lea.vmem %s8, %s560
      %p562 = pneg %p265
      %p563 = pneg %p262
      %p564 = scmp.lt.s32.totalorder %s29, 1
      %s565 = scalar_select %p564, %s29, 1
      %s566 = scalar_lea.vmem %s9, %s565
      %p567 = pneg %p291
      %p568 = pneg %p288
      %p569 = scmp.lt.s32.totalorder %s29, 1
      %s570 = scalar_select %p569, %s29, 1
      %s571 = scalar_lea.vmem %s10, %s570
      %p572 = pneg %p317
      %p573 = pneg %p314
      %p574 = scmp.lt.s32.totalorder %s29, 1
      %s575 = scalar_select %p574, %s29, 1
      %s576 = scalar_lea.vmem %s11, %s575
      %p577 = pneg %p343
      %p578 = pneg %p340
      %p579 = scmp.lt.s32.totalorder %s29, 1
      %s580 = scalar_select %p579, %s29, 1
      %s581 = scalar_lea.vmem %s12, %s580
      %p582 = pneg %p369
      %p583 = pneg %p366
      %p584 = pneg %p395
      %p585 = pneg %p392
      %p586 = scmp.lt.s32.totalorder %s28, 1
      %s587 = scalar_select %p586, %s28, 1
      %s588 = smul.addr %s587, 2
      %s589 = smul.addr %s588, 8
      %s590 = scalar_lea.vmem %s13, %s589
      %p591 = scmp.lt.s32.totalorder %s28, 1
      %s592 = scalar_select %p591, %s28, 1
      %s593 = smul.addr %s592, 2
      %s594 = smul.addr %s593, 8
      %s595 = scalar_lea.vmem %s0, %s594
      %p596 = scmp.lt.s32.totalorder %s29, 1
      %s597 = scalar_select %p596, %s29, 1
      %s598 = smul.addr %s597, 4
      %s599 = smul.addr %s598, 4
      %s600 = scalar_lea.vmem %s1, %s599
      %p601 = scmp.lt.s32.totalorder %s29, 1
      %s602 = scalar_select %p601, %s29, 1
      %s603 = scalar_lea.vmem %s2, %s602
      %p604 = scmp.lt.s32.totalorder %s29, 1
      %s605 = scalar_select %p604, %s29, 1
      %s606 = smul.addr %s605, 4
      %s607 = smul.addr %s606, 4
      %s608 = scalar_lea.vmem %s3, %s607
      %p609 = scmp.lt.s32.totalorder %s29, 1
      %s610 = scalar_select %p609, %s29, 1
      %s611 = scalar_lea.vmem %s4, %s610
      %p612 = scmp.lt.s32.totalorder %s29, 1
      %s613 = scalar_select %p612, %s29, 1
      %s614 = smul.addr %s613, 4
      %s615 = smul.addr %s614, 4
      %s616 = scalar_lea.vmem %s5, %s615
      %p617 = scmp.lt.s32.totalorder %s29, 1
      %s618 = scalar_select %p617, %s29, 1
      %s619 = scalar_lea.vmem %s6, %s618
      %p620 = scmp.lt.s32.totalorder %s29, 1
      %s621 = scalar_select %p620, %s29, 1
      %s622 = smul.addr %s621, 16
      %s623 = smul.addr %s622, 4
      %s624 = scalar_lea.vmem %s7, %s623
      %p625 = scmp.lt.s32.totalorder %s29, 1
      %s626 = scalar_select %p625, %s29, 1
      %s627 = scalar_lea.vmem %s8, %s626
      %p628 = scmp.lt.s32.totalorder %s29, 1
      %s629 = scalar_select %p628, %s29, 1
      %s630 = scalar_lea.vmem %s9, %s629
      %p631 = scmp.lt.s32.totalorder %s29, 1
      %s632 = scalar_select %p631, %s29, 1
      %s633 = scalar_lea.vmem %s10, %s632
      %p634 = scmp.lt.s32.totalorder %s29, 1
      %s635 = scalar_select %p634, %s29, 1
      %s636 = scalar_lea.vmem %s11, %s635
      %p637 = scmp.lt.s32.totalorder %s29, 1
      %s638 = scalar_select %p637, %s29, 1
      %s639 = scalar_lea.vmem %s12, %s638
      %p640 = scmp.lt.s32.totalorder %s28, 1
      %s641 = scalar_select %p640, %s28, 1
      %s642 = smul.addr %s641, 2
      %s643 = smul.addr %s642, 8
      %s644 = scalar_lea.vmem %s13, %s643
      %p646 = scmp.eq.s32.totalorder %s29, 0
      // Predicated region
      $region73: #{smiles_transformer_forward.3} parent=71 // pred_check
        %p647 = pneg %p646
      $region74: #{smiles_transformer_forward.3} parent=71 // pred_check_branch
        %649 = sbr.rel (%p647) target = $region76
      $region75: #{smiles_transformer_forward.3} parent=71 // pred_region
        %v650 = vld [vmem:[%s595] sm:$0xff]
        %v651 = vld [vmem:[%s595 + $0x8] sm:$0x1]
        %vm652 = vcmask 261120
        %653 = vst.msk [vmem:[%s644] sm:$0xff] %vm652, %v650
        %vm654 = vcmask 253952
        %655 = vst.msk [vmem:[%s644 + $0x8] sm:$0x1] %vm654, %v651
      $region76: #{smiles_transformer_forward.3} parent=71 // pred_fallthru
        _
      %v656 = vld [vmem:[%s644] sm:$0xff]
      %v657 = vld [vmem:[%s644 + $0x8] sm:$0x1]
      %v658 = vlaneseq
      %v659 = vshrl.u32 %v658, 7
      %v660 = vadd.s32 %v659, 8
      %v661 = vlaneseq
      %v662 = vand.u32 %v661, 127
      %vm663 = vcmp.ge.s32.totalorder %v659, %v662
      %vm664 = vcmp.ge.s32.totalorder %v660, %v662
      %v665 = vsel %vm663, 0.0, -1e+09
      %v666 = vsel %vm664, 0.0, -1e+09
      %v667 = vld [vmem:[%s600] sm:$0xf]
      %v668 = vld [vmem:[%s600 + $0x4] sm:$0xf]
      %v669 = vld [vmem:[%s600 + $0x8] sm:$0xf]
      %v670 = vld [vmem:[%s600 + $0xc] sm:$0xf]
      %v671 = vld [vmem:[%s603] sm:$0x1]
      %v672 = vld [vmem:[%s608] sm:$0xf]
      %v673 = vld [vmem:[%s608 + $0x4] sm:$0xf]
      %v674 = vld [vmem:[%s608 + $0x8] sm:$0xf]
      %v675 = vld [vmem:[%s608 + $0xc] sm:$0xf]
      %v676 = vld [vmem:[%s611] sm:$0x1]
      %v677 = vld [vmem:[%s616] sm:$0xf]
      %v678 = vld [vmem:[%s616 + $0x4] sm:$0xf]
      %v679 = vld [vmem:[%s616 + $0x8] sm:$0xf]
      %v680 = vld [vmem:[%s616 + $0xc] sm:$0xf]
      %v681 = vld [vmem:[%s619] sm:$0x1]
      %v682 = vld [vmem:[%s624] sm:$0xf]
      %v683 = vld [vmem:[%s624 + $0x4] sm:$0xf]
      %v684 = vld [vmem:[%s624 + $0x8] sm:$0xf]
      %v685 = vld [vmem:[%s624 + $0xc] sm:$0xf]
      %v686 = vld [vmem:[%s624 + $0x10] sm:$0xf]
      %v687 = vld [vmem:[%s624 + $0x14] sm:$0xf]
      %v688 = vld [vmem:[%s624 + $0x18] sm:$0xf]
      %v689 = vld [vmem:[%s624 + $0x1c] sm:$0xf]
      %v690 = vld [vmem:[%s624 + $0x20] sm:$0xf]
      %v691 = vld [vmem:[%s624 + $0x24] sm:$0xf]
      %v692 = vld [vmem:[%s624 + $0x28] sm:$0xf]
      %v693 = vld [vmem:[%s624 + $0x2c] sm:$0xf]
      %v694 = vld [vmem:[%s624 + $0x30] sm:$0xf]
      %v695 = vld [vmem:[%s624 + $0x34] sm:$0xf]
      %v696 = vld [vmem:[%s624 + $0x38] sm:$0xf]
      %v697 = vld [vmem:[%s624 + $0x3c] sm:$0xf]
      %v698 = vld [vmem:[%s627] sm:$0x1]
      %v699 = vld [vmem:[%s630] sm:$0x1]
      %v700 = vld [vmem:[%s633] sm:$0x1]
      %v701 = vld [vmem:[%s636] sm:$0x1]
      %v702 = vld [vmem:[%s639] sm:$0x1]
      %v703 = vpack.c.bf16 %v657, %v656
      %v705 = vlaneseq
      %v706 = vshrl.u32 %v705, 7
      %v707 = vsub.s32 0, %v706
      %v708 = vrot.slane %v671, %v707
      %v714 = vunpack.c.l.b16 %v667
      %v715 = vunpack.c.l.b16 %v668
      %v716 = vunpack.c.l.b16 %v669
      %v717 = vunpack.c.l.b16 %v670
      %v718 = vpack.c.b16 %v715, %v714
      %v719 = vpack.c.b16 %v717, %v716
      %vm722 = vcmask 261120
      %v724 = vsel %vm722, %v703, 0
      %726 = vmatprep.subr.bf16.mxu0 0
      %727 = vmatpush1.bf16.msra.mxu0 %v718
      %728 = vmatprep.subr.bf16.mxu0 0
      %729 = vmatpush1.bf16.msra.mxu0 %v719
      %730 = vmatprep.subr.bf16.mxu0 0
      %731 = vmatpush1.bf16.msra.mxu0 0
      %732 = vmatprep.subr.bf16.mxu0 0
      %733 = vmatpush1.bf16.msra.mxu0 0
      %734 = vmatprep.subr.bf16.mxu0 0
      %735 = vmatpush1.bf16.msra.mxu0 0
      %736 = vmatprep.subr.bf16.mxu0 0
      %737 = vmatpush1.bf16.msra.mxu0 0
      %738 = vmatprep.subr.bf16.mxu0 0
      %739 = vmatpush1.bf16.msra.mxu0 0
      %740 = vmatprep.subr.bf16.mxu0 0
      %741 = vmatpush1.bf16.msra.mxu0 0
      %742 = vmatprep.subr.bf16.mxu0 0
      %743 = vmatpush1.bf16.msra.mxu0 0
      %744 = vmatprep.subr.bf16.mxu0 0
      %745 = vmatpush1.bf16.msra.mxu0 0
      %746 = vmatprep.subr.bf16.mxu0 0
      %747 = vmatpush1.bf16.msra.mxu0 0
      %748 = vmatprep.subr.bf16.mxu0 0
      %749 = vmatpush1.bf16.msra.mxu0 0
      %750 = vmatprep.subr.bf16.mxu0 0
      %751 = vmatpush1.bf16.msra.mxu0 0
      %752 = vmatprep.subr.bf16.mxu0 0
      %753 = vmatpush1.bf16.msra.mxu0 0
      %754 = vmatprep.subr.bf16.mxu0 0
      %755 = vmatpush1.bf16.msra.mxu0 0
      %756 = vmatprep.subr.bf16.mxu0 0
      %757 = vmatpush1.bf16.msra.mxu0 0
      %758 = vmatprep.mubr.bf16.mxu0 0
      %759 = vmatmul.mubr.bf16.gmra.mrb[0].mxu0 %v724
      %v760 = vpop.f32.mrb[0].mxu0
      %v761 = vadd.f32 %v708, %v760
      %v762 = vpop.f32.mrb[0].mxu0
      %v763 = vpop.f32.mrb[0].mxu0
      %v764 = vadd.f32 %v708, %v763
      %v765 = vpop.f32.mrb[0].mxu0
      %766 = vdwg.mxu0
      %v767 = vpack.c.bf16 %v764, %v761
      %769 = vrot.lane.b32.xlu0 %v767, 96
      %v770 = vpop.permute.xlu0 %769
      %vm771 = vcmask 130048
      %v773 = vsel %vm771, %v767, 0
      %v776 = vsel %vm771, %v770, 0
      %778 = vmatprep.subr.bf16.mxu0 0
      %779 = vmatpush1.bf16.xpose.msra.mxu0 %v776
      %780 = vmatprep.subr.bf16.mxu0 0
      %781 = vmatpush1.bf16.xpose.msra.mxu0 0
      %782 = vmatprep.subr.bf16.mxu0 0
      %783 = vmatpush1.bf16.xpose.msra.mxu0 0
      %784 = vmatprep.subr.bf16.mxu0 0
      %785 = vmatpush1.bf16.xpose.msra.mxu0 0
      %786 = vmatprep.subr.bf16.mxu0 0
      %787 = vmatpush1.bf16.xpose.msra.mxu0 0
      %788 = vmatprep.subr.bf16.mxu0 0
      %789 = vmatpush1.bf16.xpose.msra.mxu0 0
      %790 = vmatprep.subr.bf16.mxu0 0
      %791 = vmatpush1.bf16.xpose.msra.mxu0 0
      %792 = vmatprep.subr.bf16.mxu0 0
      %793 = vmatpush1.bf16.xpose.msra.mxu0 0
      %794 = vmatprep.subr.bf16.mxu0 0
      %795 = vmatpush1.bf16.xpose.msra.mxu0 0
      %796 = vmatprep.subr.bf16.mxu0 0
      %797 = vmatpush1.bf16.xpose.msra.mxu0 0
      %798 = vmatprep.subr.bf16.mxu0 0
      %799 = vmatpush1.bf16.xpose.msra.mxu0 0
      %800 = vmatprep.subr.bf16.mxu0 0
      %801 = vmatpush1.bf16.xpose.msra.mxu0 0
      %802 = vmatprep.subr.bf16.mxu0 0
      %803 = vmatpush1.bf16.xpose.msra.mxu0 0
      %804 = vmatprep.subr.bf16.mxu0 0
      %805 = vmatpush1.bf16.xpose.msra.mxu0 0
      %806 = vmatprep.subr.bf16.mxu0 0
      %807 = vmatpush1.bf16.xpose.msra.mxu0 0
      %808 = vmatprep.subr.bf16.mxu0 0
      %809 = vmatpush1.bf16.xpose.msra.mxu0 0
      %810 = vmatprep.mubr.bf16.mxu0 0
      %811 = vmatmul.mubr.bf16.gmra.mrb[0].mxu0 %v773
      %v812 = vpop.f32.mrb[0].mxu0
      %v813 = vadd.f32 0.0, %v812
      %v814 = vpop.f32.mrb[0].mxu0
      %v815 = vpop.f32.mrb[0].mxu0
      %v816 = vadd.f32 0.0, %v815
      %v817 = vpop.f32.mrb[0].mxu0
      %818 = vdwg.mxu0
      %v819 = vmul.f32 %v813, 0.25
      %v820 = vmul.f32 %v816, 0.25
      %v821 = vadd.f32 %v819, %v665
      %v822 = vadd.f32 %v820, %v666
      %vm823 = vcmask 72704
      %v824 = vsel %vm823, %v821, -inf
      %825 = vmax.xlane.f32.xlu0 %v824
      %v826 = vpop.xlane.xlu0 %825
      %vm827 = vcmask 65536
      %v828 = vsel %vm827, %v822, -inf
      %829 = vmax.xlane.f32.xlu0 %v828
      %v830 = vpop.xlane.xlu0 %829
      %v831 = vsub.f32 %v821, %v826
      %v832 = vsub.f32 %v822, %v830
      %v833 = vmul.f32 %v831, 1.442695
      %v834 = vpow.pop %v833
      %v835 = vmul.f32 %v832, 1.442695
      %v836 = vpow.pop %v835
      %v837 = vsel %vm823, %v834, 0.0
      %838 = vadd.xlane.f32.xlu0 %v837
      %v839 = vpop.xlane.xlu0 %838
      %v840 = vsel %vm827, %v836, 0.0
      %841 = vadd.xlane.f32.xlu0 %v840
      %v842 = vpop.xlane.xlu0 %841
      %v843 = vrcp.pop %v839
      %v844 = vrcp.pop %v842
      %v845 = vmul.f32 %v834, %v843
      %v846 = vmul.f32 %v836, %v844
      %v847 = vpack.c.bf16 %v846, %v845
      %848 = vrot.lane.b32.xlu0 %v767, 64
      %v849 = vpop.permute.xlu0 %848
      %v851 = vsel %vm823, %v847, 0
      %vm853 = vcmask 1043456
      %vm854 = vcmask 1044480
      %v855 = vsel %vm853, 4294967295, 65535
      %v856 = vsel %vm854, %v855, 0
      %v858 = vand.u32 %v849, %v856
      %860 = vmatprep.subr.bf16.mxu0 0
      %861 = vmatpush1.bf16.msra.mxu0 %v858
      %862 = vmatprep.subr.bf16.mxu0 0
      %863 = vmatpush1.bf16.msra.mxu0 0
      %864 = vmatprep.subr.bf16.mxu0 0
      %865 = vmatpush1.bf16.msra.mxu0 0
      %866 = vmatprep.subr.bf16.mxu0 0
      %867 = vmatpush1.bf16.msra.mxu0 0
      %868 = vmatprep.subr.bf16.mxu0 0
      %869 = vmatpush1.bf16.msra.mxu0 0
      %870 = vmatprep.subr.bf16.mxu0 0
      %871 = vmatpush1.bf16.msra.mxu0 0
      %872 = vmatprep.subr.bf16.mxu0 0
      %873 = vmatpush1.bf16.msra.mxu0 0
      %874 = vmatprep.subr.bf16.mxu0 0
      %875 = vmatpush1.bf16.msra.mxu0 0
      %876 = vmatprep.subr.bf16.mxu0 0
      %877 = vmatpush1.bf16.msra.mxu0 0
      %878 = vmatprep.subr.bf16.mxu0 0
      %879 = vmatpush1.bf16.msra.mxu0 0
      %880 = vmatprep.subr.bf16.mxu0 0
      %881 = vmatpush1.bf16.msra.mxu0 0
      %882 = vmatprep.subr.bf16.mxu0 0
      %883 = vmatpush1.bf16.msra.mxu0 0
      %884 = vmatprep.subr.bf16.mxu0 0
      %885 = vmatpush1.bf16.msra.mxu0 0
      %886 = vmatprep.subr.bf16.mxu0 0
      %887 = vmatpush1.bf16.msra.mxu0 0
      %888 = vmatprep.subr.bf16.mxu0 0
      %889 = vmatpush1.bf16.msra.mxu0 0
      %890 = vmatprep.subr.bf16.mxu0 0
      %891 = vmatpush1.bf16.msra.mxu0 0
      %892 = vmatprep.mubr.bf16.mxu0 0
      %893 = vmatmul.mubr.bf16.gmra.mrb[0].mxu0 %v851
      %v894 = vpop.f32.mrb[0].mxu0
      %v895 = vadd.f32 0.0, %v894
      %v896 = vpop.f32.mrb[0].mxu0
      %v897 = vpop.f32.mrb[0].mxu0
      %v898 = vadd.f32 0.0, %v897
      %v899 = vpop.f32.mrb[0].mxu0
      %900 = vdwg.mxu0
      %v901 = vpack.c.bf16 %v898, %v895
      %902 = vrot.lane.b32.xlu0 %v767, 112
      %v903 = vpop.permute.xlu0 %902
      %904 = vrot.lane.b32.xlu0 %v767, 80
      %v905 = vpop.permute.xlu0 %904
      %v907 = vsel %vm771, %v903, 0
      %v910 = vsel %vm771, %v905, 0
      %912 = vmatprep.subr.bf16.mxu0 0
      %913 = vmatpush1.bf16.xpose.msra.mxu0 %v910
      %914 = vmatprep.subr.bf16.mxu0 0
      %915 = vmatpush1.bf16.xpose.msra.mxu0 0
      %916 = vmatprep.subr.bf16.mxu0 0
      %917 = vmatpush1.bf16.xpose.msra.mxu0 0
      %918 = vmatprep.subr.bf16.mxu0 0
      %919 = vmatpush1.bf16.xpose.msra.mxu0 0
      %920 = vmatprep.subr.bf16.mxu0 0
      %921 = vmatpush1.bf16.xpose.msra.mxu0 0
      %922 = vmatprep.subr.bf16.mxu0 0
      %923 = vmatpush1.bf16.xpose.msra.mxu0 0
      %924 = vmatprep.subr.bf16.mxu0 0
      %925 = vmatpush1.bf16.xpose.msra.mxu0 0
      %926 = vmatprep.subr.bf16.mxu0 0
      %927 = vmatpush1.bf16.xpose.msra.mxu0 0
      %928 = vmatprep.subr.bf16.mxu0 0
      %929 = vmatpush1.bf16.xpose.msra.mxu0 0
      %930 = vmatprep.subr.bf16.mxu0 0
      %931 = vmatpush1.bf16.xpose.msra.mxu0 0
      %932 = vmatprep.subr.bf16.mxu0 0
      %933 = vmatpush1.bf16.xpose.msra.mxu0 0
      %934 = vmatprep.subr.bf16.mxu0 0
      %935 = vmatpush1.bf16.xpose.msra.mxu0 0
      %936 = vmatprep.subr.bf16.mxu0 0
      %937 = vmatpush1.bf16.xpose.msra.mxu0 0
      %938 = vmatprep.subr.bf16.mxu0 0
      %939 = vmatpush1.bf16.xpose.msra.mxu0 0
      %940 = vmatprep.subr.bf16.mxu0 0
      %941 = vmatpush1.bf16.xpose.msra.mxu0 0
      %942 = vmatprep.subr.bf16.mxu0 0
      %943 = vmatpush1.bf16.xpose.msra.mxu0 0
      %944 = vmatprep.mubr.bf16.mxu0 0
      %945 = vmatmul.mubr.bf16.gmra.mrb[0].mxu0 %v907
      %v946 = vpop.f32.mrb[0].mxu0
      %v947 = vadd.f32 0.0, %v946
      %v948 = vpop.f32.mrb[0].mxu0
      %v949 = vpop.f32.mrb[0].mxu0
      %v950 = vadd.f32 0.0, %v949
      %v951 = vpop.f32.mrb[0].mxu0
      %952 = vdwg.mxu0
      %v953 = vmul.f32 %v947, 0.25
      %v954 = vmul.f32 %v950, 0.25
      %v955 = vadd.f32 %v953, %v665
      %v956 = vadd.f32 %v954, %v666
      %v957 = vsel %vm823, %v955, -inf
      %958 = vmax.xlane.f32.xlu0 %v957
      %v959 = vpop.xlane.xlu0 %958
      %v960 = vsel %vm827, %v956, -inf
      %961 = vmax.xlane.f32.xlu0 %v960
      %v962 = vpop.xlane.xlu0 %961
      %v963 = vsub.f32 %v955, %v959
      %v964 = vsub.f32 %v956, %v962
      %v965 = vmul.f32 %v963, 1.442695
      %v966 = vpow.pop %v965
      %v967 = vmul.f32 %v964, 1.442695
      %v968 = vpow.pop %v967
      %v969 = vsel %vm823, %v966, 0.0
      %970 = vadd.xlane.f32.xlu0 %v969
      %v971 = vpop.xlane.xlu0 %970
      %v972 = vsel %vm827, %v968, 0.0
      %973 = vadd.xlane.f32.xlu0 %v972
      %v974 = vpop.xlane.xlu0 %973
      %v975 = vrcp.pop %v971
      %v976 = vrcp.pop %v974
      %v977 = vmul.f32 %v966, %v975
      %v978 = vmul.f32 %v968, %v976
      %v979 = vpack.c.bf16 %v978, %v977
      %980 = vrot.lane.b32.xlu0 %v767, 48
      %v981 = vpop.permute.xlu0 %980
      %v983 = vsel %vm823, %v979, 0
      %v986 = vand.u32 %v981, %v856
      %988 = vmatprep.subr.bf16.mxu0 0
      %989 = vmatpush1.bf16.msra.mxu0 %v986
      %990 = vmatprep.subr.bf16.mxu0 0
      %991 = vmatpush1.bf16.msra.mxu0 0
      %992 = vmatprep.subr.bf16.mxu0 0
      %993 = vmatpush1.bf16.msra.mxu0 0
      %994 = vmatprep.subr.bf16.mxu0 0
      %995 = vmatpush1.bf16.msra.mxu0 0
      %996 = vmatprep.subr.bf16.mxu0 0
      %997 = vmatpush1.bf16.msra.mxu0 0
      %998 = vmatprep.subr.bf16.mxu0 0
      %999 = vmatpush1.bf16.msra.mxu0 0
      %1000 = vmatprep.subr.bf16.mxu0 0
      %1001 = vmatpush1.bf16.msra.mxu0 0
      %1002 = vmatprep.subr.bf16.mxu0 0
      %1003 = vmatpush1.bf16.msra.mxu0 0
      %1004 = vmatprep.subr.bf16.mxu0 0
      %1005 = vmatpush1.bf16.msra.mxu0 0
      %1006 = vmatprep.subr.bf16.mxu0 0
      %1007 = vmatpush1.bf16.msra.mxu0 0
      %1008 = vmatprep.subr.bf16.mxu0 0
      %1009 = vmatpush1.bf16.msra.mxu0 0
      %1010 = vmatprep.subr.bf16.mxu0 0
      %1011 = vmatpush1.bf16.msra.mxu0 0
      %1012 = vmatprep.subr.bf16.mxu0 0
      %1013 = vmatpush1.bf16.msra.mxu0 0
      %1014 = vmatprep.subr.bf16.mxu0 0
      %1015 = vmatpush1.bf16.msra.mxu0 0
      %1016 = vmatprep.subr.bf16.mxu0 0
      %1017 = vmatpush1.bf16.msra.mxu0 0
      %1018 = vmatprep.subr.bf16.mxu0 0
      %1019 = vmatpush1.bf16.msra.mxu0 0
      %1020 = vmatprep.mubr.bf16.mxu0 0
      %1021 = vmatmul.mubr.bf16.gmra.mrb[0].mxu0 %v983
      %v1022 = vpop.f32.mrb[0].mxu0
      %v1023 = vadd.f32 0.0, %v1022
      %v1024 = vpop.f32.mrb[0].mxu0
      %v1025 = vpop.f32.mrb[0].mxu0
      %v1026 = vadd.f32 0.0, %v1025
      %v1027 = vpop.f32.mrb[0].mxu0
      %1028 = vdwg.mxu0
      %v1029 = vpack.c.bf16 %v1026, %v1023
      %v1032 = vunpack.c.l.b16 %v674
      %v1033 = vunpack.c.l.b16 %v675
      %v1034 = vpack.c.b16 %v1033, %v1032
      %v1037 = vsel %vm771, %v1029, 0
      %1039 = vmatprep.subr.bf16.mxu0 0
      %1040 = vmatpush1.bf16.msra.mxu0 %v1034
      %1041 = vmatprep.subr.bf16.mxu0 0
      %1042 = vmatpush1.bf16.msra.mxu0 0
      %1043 = vmatprep.subr.bf16.mxu0 0
      %1044 = vmatpush1.bf16.msra.mxu0 0
      %1045 = vmatprep.subr.bf16.mxu0 0
      %1046 = vmatpush1.bf16.msra.mxu0 0
      %1047 = vmatprep.subr.bf16.mxu0 0
      %1048 = vmatpush1.bf16.msra.mxu0 0
      %1049 = vmatprep.subr.bf16.mxu0 0
      %1050 = vmatpush1.bf16.msra.mxu0 0
      %1051 = vmatprep.subr.bf16.mxu0 0
      %1052 = vmatpush1.bf16.msra.mxu0 0
      %1053 = vmatprep.subr.bf16.mxu0 0
      %1054 = vmatpush1.bf16.msra.mxu0 0
      %1055 = vmatprep.subr.bf16.mxu0 0
      %1056 = vmatpush1.bf16.msra.mxu0 0
      %1057 = vmatprep.subr.bf16.mxu0 0
      %1058 = vmatpush1.bf16.msra.mxu0 0
      %1059 = vmatprep.subr.bf16.mxu0 0
      %1060 = vmatpush1.bf16.msra.mxu0 0
      %1061 = vmatprep.subr.bf16.mxu0 0
      %1062 = vmatpush1.bf16.msra.mxu0 0
      %1063 = vmatprep.subr.bf16.mxu0 0
      %1064 = vmatpush1.bf16.msra.mxu0 0
      %1065 = vmatprep.subr.bf16.mxu0 0
      %1066 = vmatpush1.bf16.msra.mxu0 0
      %1067 = vmatprep.subr.bf16.mxu0 0
      %1068 = vmatpush1.bf16.msra.mxu0 0
      %1069 = vmatprep.subr.bf16.mxu0 0
      %1070 = vmatpush1.bf16.msra.mxu0 0
      %1071 = vmatprep.mubr.bf16.mxu0 0
      %1072 = vmatmul.mubr.bf16.gmra.mrb[0].mxu0 %v1037
      %v1073 = vpop.f32.mrb[0].mxu0
      %v1074 = vadd.f32 0.0, %v1073
      %v1075 = vpop.f32.mrb[0].mxu0
      %v1076 = vpop.f32.mrb[0].mxu0
      %v1077 = vadd.f32 0.0, %v1076
      %v1078 = vpop.f32.mrb[0].mxu0
      %1079 = vdwg.mxu0
      %v1082 = vunpack.c.l.b16 %v672
      %v1083 = vunpack.c.l.b16 %v673
      %v1084 = vpack.c.b16 %v1083, %v1082
      %v1087 = vsel %vm771, %v901, 0
      %1089 = vmatprep.subr.bf16.mxu0 0
      %1090 = vmatpush1.bf16.msra.mxu0 %v1084
      %1091 = vmatprep.subr.bf16.mxu0 0
      %1092 = vmatpush1.bf16.msra.mxu0 0
      %1093 = vmatprep.subr.bf16.mxu0 0
      %1094 = vmatpush1.bf16.msra.mxu0 0
      %1095 = vmatprep.subr.bf16.mxu0 0
      %1096 = vmatpush1.bf16.msra.mxu0 0
      %1097 = vmatprep.subr.bf16.mxu0 0
      %1098 = vmatpush1.bf16.msra.mxu0 0
      %1099 = vmatprep.subr.bf16.mxu0 0
      %1100 = vmatpush1.bf16.msra.mxu0 0
      %1101 = vmatprep.subr.bf16.mxu0 0
      %1102 = vmatpush1.bf16.msra.mxu0 0
      %1103 = vmatprep.subr.bf16.mxu0 0
      %1104 = vmatpush1.bf16.msra.mxu0 0
      %1105 = vmatprep.subr.bf16.mxu0 0
      %1106 = vmatpush1.bf16.msra.mxu0 0
      %1107 = vmatprep.subr.bf16.mxu0 0
      %1108 = vmatpush1.bf16.msra.mxu0 0
      %1109 = vmatprep.subr.bf16.mxu0 0
      %1110 = vmatpush1.bf16.msra.mxu0 0
      %1111 = vmatprep.subr.bf16.mxu0 0
      %1112 = vmatpush1.bf16.msra.mxu0 0
      %1113 = vmatprep.subr.bf16.mxu0 0
      %1114 = vmatpush1.bf16.msra.mxu0 0
      %1115 = vmatprep.subr.bf16.mxu0 0
      %1116 = vmatpush1.bf16.msra.mxu0 0
      %1117 = vmatprep.subr.bf16.mxu0 0
      %1118 = vmatpush1.bf16.msra.mxu0 0
      %1119 = vmatprep.subr.bf16.mxu0 0
      %1120 = vmatpush1.bf16.msra.mxu0 0
      %1121 = vmatprep.mubr.bf16.mxu0 0
      %1122 = vmatmul.mubr.bf16.gmra.mrb[0].mxu0 %v1087
      %v1123 = vpop.f32.mrb[0].mxu0
      %v1124 = vadd.f32 %v1074, %v1123
      %v1125 = vpop.f32.mrb[0].mxu0
      %v1126 = vpop.f32.mrb[0].mxu0
      %v1127 = vadd.f32 %v1077, %v1126
      %v1128 = vpop.f32.mrb[0].mxu0
      %1129 = vdwg.mxu0
      %v1130 = vadd.f32 %v656, %v1124
      %v1131 = vadd.f32 %v657, %v1127
      %v1133 = vlaneseq
      %v1134 = vshrl.u32 %v1133, 7
      %v1135 = vsub.s32 0, %v1134
      %v1136 = vrot.slane %v676, %v1135
      %v1138 = vadd.f32 %v1130, %v1136
      %v1139 = vadd.f32 %v1131, %v1136
      %v1140 = vsel %vm722, %v1138, 0.0
      %1141 = vadd.xlane.f32.xlu0 %v1140
      %v1142 = vpop.xlane.xlu0 %1141
      %vm1143 = vcmask 253952
      %v1144 = vsel %vm1143, %v1139, 0.0
      %1145 = vadd.xlane.f32.xlu0 %v1144
      %v1146 = vpop.xlane.xlu0 %1145
      %v1147 = vrcp.pop 32.0
      %v1148 = vmul.f32 %v1142, %v1147
      %v1149 = vmul.f32 %v1146, %v1147
      %v1150 = vsub.f32 %v1138, %v1148
      %v1151 = vsub.f32 %v1139, %v1149
      %v1152 = vmul.f32 %v1150, %v1150
      %v1153 = vmul.f32 %v1151, %v1151
      %v1154 = vsel %vm722, %v1152, 0.0
      %1155 = vadd.xlane.f32.xlu0 %v1154
      %v1156 = vpop.xlane.xlu0 %1155
      %v1157 = vsel %vm1143, %v1153, 0.0
      %1158 = vadd.xlane.f32.xlu0 %v1157
      %v1159 = vpop.xlane.xlu0 %1158
      %v1160 = vmul.f32 %v1156, %v1147
      %v1161 = vmul.f32 %v1159, %v1147
      %v1162 = vadd.f32 %v1160, 1e-05
      %v1163 = vadd.f32 %v1161, 1e-05
      %v1164 = vrsqrt.pop %v1162
      %v1165 = vrsqrt.pop %v1163
      %v1166 = vmul.f32 %v1150, %v1164
      %v1167 = vmul.f32 %v1151, %v1165
      %v1169 = vlaneseq
      %v1170 = vshrl.u32 %v1169, 7
      %v1171 = vsub.s32 0, %v1170
      %v1172 = vrot.slane %v699, %v1171
      %v1174 = vmul.f32 %v1166, %v1172
      %v1175 = vmul.f32 %v1167, %v1172
      %v1177 = vlaneseq
      %v1178 = vshrl.u32 %v1177, 7
      %v1179 = vsub.s32 0, %v1178
      %v1180 = vrot.slane %v700, %v1179
      %v1182 = vadd.f32 %v1174, %v1180
      %v1183 = vadd.f32 %v1175, %v1180
      %v1184 = vpack.c.bf16 %v1183, %v1182
      %v1186 = vlaneseq
      %v1187 = vshrl.u32 %v1186, 7
      %v1188 = vsub.s32 0, %v1187
      %v1189 = vrot.slane %v681, %v1188
      %v1195 = vunpack.c.l.b16 %v677
      %v1196 = vunpack.c.l.b16 %v678
      %v1197 = vunpack.c.l.b16 %v679
      %v1198 = vunpack.c.l.b16 %v680
      %v1199 = vpack.c.b16 %v1196, %v1195
      %v1200 = vpack.c.b16 %v1198, %v1197
      %v1204 = vsel %vm722, %v1184, 0
      %1206 = vmatprep.subr.bf16.mxu0 0
      %1207 = vmatpush1.bf16.msra.mxu0 %v1199
      %1208 = vmatprep.subr.bf16.mxu0 0
      %1209 = vmatpush1.bf16.msra.mxu0 %v1200
      %1210 = vmatprep.subr.bf16.mxu0 0
      %1211 = vmatpush1.bf16.msra.mxu0 0
      %1212 = vmatprep.subr.bf16.mxu0 0
      %1213 = vmatpush1.bf16.msra.mxu0 0
      %1214 = vmatprep.subr.bf16.mxu0 0
      %1215 = vmatpush1.bf16.msra.mxu0 0
      %1216 = vmatprep.subr.bf16.mxu0 0
      %1217 = vmatpush1.bf16.msra.mxu0 0
      %1218 = vmatprep.subr.bf16.mxu0 0
      %1219 = vmatpush1.bf16.msra.mxu0 0
      %1220 = vmatprep.subr.bf16.mxu0 0
      %1221 = vmatpush1.bf16.msra.mxu0 0
      %1222 = vmatprep.subr.bf16.mxu0 0
      %1223 = vmatpush1.bf16.msra.mxu0 0
      %1224 = vmatprep.subr.bf16.mxu0 0
      %1225 = vmatpush1.bf16.msra.mxu0 0
      %1226 = vmatprep.subr.bf16.mxu0 0
      %1227 = vmatpush1.bf16.msra.mxu0 0
      %1228 = vmatprep.subr.bf16.mxu0 0
      %1229 = vmatpush1.bf16.msra.mxu0 0
      %1230 = vmatprep.subr.bf16.mxu0 0
      %1231 = vmatpush1.bf16.msra.mxu0 0
      %1232 = vmatprep.subr.bf16.mxu0 0
      %1233 = vmatpush1.bf16.msra.mxu0 0
      %1234 = vmatprep.subr.bf16.mxu0 0
      %1235 = vmatpush1.bf16.msra.mxu0 0
      %1236 = vmatprep.subr.bf16.mxu0 0
      %1237 = vmatpush1.bf16.msra.mxu0 0
      %1238 = vmatprep.mubr.bf16.mxu0 0
      %1239 = vmatmul.mubr.bf16.gmra.mrb[0].mxu0 %v1204
      %v1240 = vpop.f32.mrb[0].mxu0
      %v1241 = vadd.f32 %v1189, %v1240
      %v1242 = vpop.f32.mrb[0].mxu0
      %v1243 = vpop.f32.mrb[0].mxu0
      %v1244 = vadd.f32 %v1189, %v1243
      %v1245 = vpop.f32.mrb[0].mxu0
      %1246 = vdwg.mxu0
      %v1247 = vmax.f32 %v1241, 0.0
      %v1248 = vmax.f32 %v1244, 0.0
      %v1249 = vpack.c.bf16 %v1248, %v1247
      %v1251 = vlaneseq
      %v1252 = vshrl.u32 %v1251, 7
      %v1253 = vsub.s32 0, %v1252
      %v1254 = vrot.slane %v698, %v1253
      %v1272 = vunpack.c.l.b16 %v682
      %v1273 = vunpack.c.l.b16 %v683
      %v1274 = vunpack.c.l.b16 %v684
      %v1275 = vunpack.c.l.b16 %v685
      %v1276 = vunpack.c.l.b16 %v686
      %v1277 = vunpack.c.l.b16 %v687
      %v1278 = vunpack.c.l.b16 %v688
      %v1279 = vunpack.c.l.b16 %v689
      %v1280 = vunpack.c.l.b16 %v690
      %v1281 = vunpack.c.l.b16 %v691
      %v1282 = vunpack.c.l.b16 %v692
      %v1283 = vunpack.c.l.b16 %v693
      %v1284 = vunpack.c.l.b16 %v694
      %v1285 = vunpack.c.l.b16 %v695
      %v1286 = vunpack.c.l.b16 %v696
      %v1287 = vunpack.c.l.b16 %v697
      %v1288 = vpack.c.b16 %v1273, %v1272
      %v1289 = vpack.c.b16 %v1275, %v1274
      %v1290 = vpack.c.b16 %v1277, %v1276
      %v1291 = vpack.c.b16 %v1279, %v1278
      %v1292 = vpack.c.b16 %v1281, %v1280
      %v1293 = vpack.c.b16 %v1283, %v1282
      %v1294 = vpack.c.b16 %v1285, %v1284
      %v1295 = vpack.c.b16 %v1287, %v1286
      %1304 = vmatprep.subr.bf16.mxu0 0
      %1305 = vmatpush1.bf16.msra.mxu0 %v1288
      %1306 = vmatprep.subr.bf16.mxu0 0
      %1307 = vmatpush1.bf16.msra.mxu0 %v1289
      %1308 = vmatprep.subr.bf16.mxu0 0
      %1309 = vmatpush1.bf16.msra.mxu0 %v1290
      %1310 = vmatprep.subr.bf16.mxu0 0
      %1311 = vmatpush1.bf16.msra.mxu0 %v1291
      %1312 = vmatprep.subr.bf16.mxu0 0
      %1313 = vmatpush1.bf16.msra.mxu0 %v1292
      %1314 = vmatprep.subr.bf16.mxu0 0
      %1315 = vmatpush1.bf16.msra.mxu0 %v1293
      %1316 = vmatprep.subr.bf16.mxu0 0
      %1317 = vmatpush1.bf16.msra.mxu0 %v1294
      %1318 = vmatprep.subr.bf16.mxu0 0
      %1319 = vmatpush1.bf16.msra.mxu0 %v1295
      %1320 = vmatprep.subr.bf16.mxu0 0
      %1321 = vmatpush1.bf16.msra.mxu0 0
      %1322 = vmatprep.subr.bf16.mxu0 0
      %1323 = vmatpush1.bf16.msra.mxu0 0
      %1324 = vmatprep.subr.bf16.mxu0 0
      %1325 = vmatpush1.bf16.msra.mxu0 0
      %1326 = vmatprep.subr.bf16.mxu0 0
      %1327 = vmatpush1.bf16.msra.mxu0 0
      %1328 = vmatprep.subr.bf16.mxu0 0
      %1329 = vmatpush1.bf16.msra.mxu0 0
      %1330 = vmatprep.subr.bf16.mxu0 0
      %1331 = vmatpush1.bf16.msra.mxu0 0
      %1332 = vmatprep.subr.bf16.mxu0 0
      %1333 = vmatpush1.bf16.msra.mxu0 0
      %1334 = vmatprep.subr.bf16.mxu0 0
      %1335 = vmatpush1.bf16.msra.mxu0 0
      %1336 = vmatprep.mubr.bf16.mxu0 0
      %1337 = vmatmul.mubr.bf16.gmra.mrb[0].mxu0 %v1249
      %v1338 = vpop.f32.mrb[0].mxu0
      %v1339 = vadd.f32 %v1254, %v1338
      %v1340 = vpop.f32.mrb[0].mxu0
      %v1341 = vpop.f32.mrb[0].mxu0
      %v1342 = vadd.f32 %v1254, %v1341
      %v1343 = vpop.f32.mrb[0].mxu0
      %1344 = vdwg.mxu0
      %v1345 = vadd.f32 %v1182, %v1339
      %v1346 = vadd.f32 %v1183, %v1342
      %v1347 = vsel %vm722, %v1345, 0.0
      %1348 = vadd.xlane.f32.xlu0 %v1347
      %v1349 = vpop.xlane.xlu0 %1348
      %v1350 = vsel %vm1143, %v1346, 0.0
      %1351 = vadd.xlane.f32.xlu0 %v1350
      %v1352 = vpop.xlane.xlu0 %1351
      %v1353 = vmul.f32 %v1349, %v1147
      %v1354 = vmul.f32 %v1352, %v1147
      %v1355 = vsub.f32 %v1345, %v1353
      %v1356 = vsub.f32 %v1346, %v1354
      %v1357 = vmul.f32 %v1355, %v1355
      %v1358 = vmul.f32 %v1356, %v1356
      %v1359 = vsel %vm722, %v1357, 0.0
      %1360 = vadd.xlane.f32.xlu0 %v1359
      %v1361 = vpop.xlane.xlu0 %1360
      %v1362 = vsel %vm1143, %v1358, 0.0
      %1363 = vadd.xlane.f32.xlu0 %v1362
      %v1364 = vpop.xlane.xlu0 %1363
      %v1365 = vmul.f32 %v1361, %v1147
      %v1366 = vmul.f32 %v1364, %v1147
      %v1367 = vadd.f32 %v1365, 1e-05
      %v1368 = vadd.f32 %v1366, 1e-05
      %v1369 = vrsqrt.pop %v1367
      %v1370 = vrsqrt.pop %v1368
      %v1371 = vmul.f32 %v1355, %v1369
      %v1372 = vmul.f32 %v1356, %v1370
      %v1374 = vlaneseq
      %v1375 = vshrl.u32 %v1374, 7
      %v1376 = vsub.s32 0, %v1375
      %v1377 = vrot.slane %v701, %v1376
      %v1379 = vmul.f32 %v1371, %v1377
      %v1380 = vmul.f32 %v1372, %v1377
      %v1382 = vlaneseq
      %v1383 = vshrl.u32 %v1382, 7
      %v1384 = vsub.s32 0, %v1383
      %v1385 = vrot.slane %v702, %v1384
      %v1387 = vadd.f32 %v1379, %v1385
      %v1388 = vadd.f32 %v1380, %v1385
      %1389 = vst.msk [vmem:[%s644] sm:$0xff] %vm722, %v1387
      %1390 = vst.msk [vmem:[%s644 + $0x8] sm:$0x1] %vm1143, %v1388
      %p1391 = scmp.lt.s32.totalorder %s28, 1
      %s1392 = scalar_select %p1391, %s28, 1
      %s1393 = smul.addr %s1392, 2
      %s1394 = smul.addr %s1393, 8
      %s1395 = scalar_lea.vmem %s13, %s1394
      // Predicated region
      $region77: #{smiles_transformer_forward.3} parent=71 // pred_check
        %p1396 = pneg %p392
      $region78: #{smiles_transformer_forward.3} parent=71 // pred_check_branch
        %1398 = sbr.rel (%p1396) target = $region80
      $region79: #{smiles_transformer_forward.3} parent=71 // pred_region
        _
      $region80: #{smiles_transformer_forward.3} parent=71 // pred_fallthru
        _
    $region72: #{smiles_transformer_forward.3} parent=5 // pred_fallthru
      _
    %p1399 = scmp.le.s32.totalorder 2, %s19
    // Predicated region
    $region81: #{smiles_transformer_forward.3} parent=5 // pred_check
      %p1400 = pneg %p1399
    $region82: #{smiles_transformer_forward.3} parent=5 // pred_check_branch
      %1402 = sbr.rel (%p1400) target = $region84
    $region83: #{smiles_transformer_forward.3} parent=5 // pred_region
      %s1403 = ssub.s32 %s19, 2
      // Predicated region
      $region85: #{smiles_transformer_forward.3} parent=83 // pred_check
        %p1404 = pneg %p398
      $region86: #{smiles_transformer_forward.3} parent=83 // pred_check_branch
        %1406 = sbr.rel (%p1404) target = $region88
      $region87: #{smiles_transformer_forward.3} parent=83 // pred_region
        %p1407 = scmp.lt.s32.totalorder %s30, 1
        %s1408 = scalar_select %p1407, %s30, 1
        %s1409 = smul.addr %s1408, 2
        %s1410 = smul.addr %s1409, 8
        %s1411 = scalar_lea.vmem %s13, %s1410
      $region88: #{smiles_transformer_forward.3} parent=83 // pred_fallthru
        _
    $region84: #{smiles_transformer_forward.3} parent=5 // pred_fallthru
      _
  $region6: #{smiles_transformer_forward.3} parent=0 // loop_footer
    %s23 = sadd.s32 1, %s19
  $region7: #{smiles_transformer_forward.3} parent=0 // loop_footer_branch
    %18 = sbr.rel target = $region3
  $region8: #{smiles_transformer_forward.3} parent=0 // loop_exit
    _

</llo_original>
